<compile_context>
chip_gen: v6e
topology: v6e:2x2x1
jax: 0.10.0
libtpu: 0.0.40
codegen_flags: <defaults>
</compile_context>

<pallas_src>
import functools

import jax
import jax.numpy as jnp
from jax import lax
from jax.experimental import pallas as pl
from jax.experimental.pallas import tpu as pltpu

D = 300            # embedding dim (Conv2d kernel width = 300 in the module)
F = 100            # n_filters
FP = 128           # padded filter dim (lane-aligned)
KS = (3, 4, 5)     # kernel_sizes
NTAPS = sum(KS)    # 12 conv taps total
SUB = 16           # bf16 sublane packing -> pad S to a multiple of 16
MAX_B_TILE = 64    # batch rows per grid step (M = B_TILE*S per MXU matmul)


def _round_up(x, m):
    return ((x + m - 1) // m) * m


def _cnn_kernel(emb_ref, w_ref, b_ref, fw_ref, fb_ref, out_ref, *, s_orig):
    """Fused conv (bf16 shifted matmuls) + bias + ReLU + max-over-time + fc + 0.5."""
    bt, s_pad, d = emb_ref.shape
    M = bt * s_pad
    # bf16 activations; reshape is a layout no-op because s_pad % 16 == 0.
    emb2d = emb_ref[...].reshape(M, d)

    # Valid time-row index (hoisted: broadcast_in_dim is not CSE'd by JAX).
    t_idx = lax.broadcasted_iota(jnp.int32, (1, s_pad, 1), 1)

    pooled = []
    tap = 0
    for ci, ks in enumerate(KS):
        T = s_orig - ks + 1  # number of valid conv windows for this branch
        # Branch-wise bf16 MXU matmul, f32 accumulation: (M, D) @ (D, ks*FP).
        wb = w_ref[:, tap * FP:(tap + ks) * FP]          # lane-aligned static slice
        y = jnp.dot(emb2d, wb, preferred_element_type=jnp.float32)  # (M, ks*FP) f32

        # conv[b,t,f] = sum_k y[b*s_pad + t + k, k*FP + f].
        # Shift via XLU sublane roll (rides the XLU slot; no misaligned copies).
        # Rows with t >= T (roll wrap / padded S) are masked out below.
        acc = y[:, 0:FP]
        for k in range(1, ks):
            acc = acc + pltpu.roll(y[:, k * FP:(k + 1) * FP], shift=M - k, axis=0)
        acc = acc.reshape(bt, s_pad, FP)                 # split leading dim: no-op

        bias = b_ref[ci, :].reshape(1, 1, FP)            # zero in padded filter lanes
        val = jnp.maximum(acc + bias, 0.0)               # conv bias + ReLU (f32)
        # ReLU output >= 0, so masking invalid rows to 0 is neutral for the max.
        val = jnp.where(t_idx < T, val, 0.0)
        pooled.append(jnp.max(val, axis=1))              # max-over-time -> (bt, FP)
        tap += ks

    h = jnp.concatenate(pooled, axis=-1)                 # (bt, 3*FP) f32

    # Module forward: x = dropout(h) * 0.5 ; output = fc(x)
    # Eval-mode dropout is identity; only h is scaled, the fc bias is NOT.
    # fc head on VPU + lane reduce (N=1 MXU matmuls would waste full passes).
    # TODO(synk): training-mode stochastic dropout not implemented (eval semantics).
    logits = 0.5 * jnp.sum(h * fw_ref[...], axis=-1, keepdims=True) + fb_ref[0]

    # Lane-dense store; wrapper reads column 0.
    out_ref[...] = jnp.broadcast_to(logits, (bt, 128)).astype(out_ref.dtype)


def init_params(key, vocab_size):
    """Deterministic synthetic parameters with the PyTorch module's shapes."""
    k_emb, k_w, k_b, k_fw, k_fb = jax.random.split(key, 5)
    emb_table = jax.random.normal(k_emb, (vocab_size, D), jnp.float32) * 0.1
    wkeys = jax.random.split(k_w, len(KS))
    bkeys = jax.random.split(k_b, len(KS))
    # Conv2d weight (F, 1, ks, D) -> stored here as (F, ks, D); bias (F,)
    conv_w = [jax.random.normal(wkeys[i], (F, ks, D), jnp.float32) * 0.05
              for i, ks in enumerate(KS)]
    conv_b = [jax.random.normal(bkeys[i], (F,), jnp.float32) * 0.05
              for i in range(len(KS))]
    # nn.Linear(3F, 1): weight (1, 3F), bias (1,)
    fc_w = jax.random.normal(k_fw, (1, len(KS) * F), jnp.float32) * 0.05
    fc_b = jax.random.normal(k_fb, (1,), jnp.float32) * 0.05
    return emb_table, conv_w, conv_b, fc_w, fc_b


def _pack_params(params):
    """Cast to bf16, zero-pad F->FP and stack per-tap conv weights for the kernel."""
    emb_table, conv_w, conv_b, fc_w, fc_b = params
    emb_bf16 = emb_table.astype(jnp.bfloat16)                         # (V, D)
    taps = []
    for i, ks in enumerate(KS):
        for k in range(ks):
            wk = conv_w[i][:, k, :].T                                 # (D, F)
            taps.append(jnp.pad(wk, ((0, 0), (0, FP - F))))           # (D, FP)
    w_all = jnp.concatenate(taps, axis=1).astype(jnp.bfloat16)        # (D, NTAPS*FP)
    b_all = jnp.stack([jnp.pad(b, (0, FP - F)) for b in conv_b])      # (3, FP) f32
    fw_parts = [jnp.pad(fc_w[:, i * F:(i + 1) * F], ((0, 0), (0, FP - F)))
                for i in range(len(KS))]
    fw_all = jnp.concatenate(fw_parts, axis=1)                        # (1, 3*FP) f32
    return emb_bf16, w_all, b_all, fw_all, fc_b


def cnn_forward(tokens, params):
    emb_bf16, w_all, b_all, fw_all, fc_b = _pack_params(params)
    B, S = tokens.shape
    assert S >= max(KS), "sequence must be at least as long as the largest kernel"

    # bf16 gather at D=300: no padded fp32 activation materialized in HBM (glue).
    emb = emb_bf16[tokens]                                            # (B, S, D) bf16

    s_pad = _round_up(S, SUB)
    b8 = _round_up(B, 8)
    b_tile = min(MAX_B_TILE, b8)
    n_btiles = pl.cdiv(b8, b_tile)
    b_pad = n_btiles * b_tile
    if (b_pad, s_pad) != (B, S):
        emb = jnp.pad(emb, ((0, b_pad - B), (0, s_pad - S), (0, 0)))

    cost = pl.CostEstimate(
        flops=2 * b_pad * s_pad * D * NTAPS * FP,
        transcendentals=0,
        bytes_accessed=(b_pad * s_pad * D * 2          # bf16 activations
                        + D * NTAPS * FP * 2           # bf16 conv weights
                        + len(KS) * FP * 4             # conv biases
                        + len(KS) * FP * 4 + 4         # fc weight + bias
                        + b_pad * 128 * 4),            # output
    )

    out = pl.pallas_call(
        functools.partial(_cnn_kernel, s_orig=S),
        out_shape=jax.ShapeDtypeStruct((b_pad, 128), jnp.float32),
        grid_spec=pltpu.PrefetchScalarGridSpec(
            num_scalar_prefetch=0,
            grid=(n_btiles,),
            in_specs=[
                # activations: tiled over batch; last dim == full array dim (300)
                pl.BlockSpec((b_tile, s_pad, D), lambda b: (b, 0, 0)),
                # weights / biases: constant index_map -> VMEM-resident
                pl.BlockSpec((D, NTAPS * FP), lambda b: (0, 0)),
                pl.BlockSpec((len(KS), FP), lambda b: (0, 0)),
                pl.BlockSpec((1, len(KS) * FP), lambda b: (0, 0)),
                # fc bias scalar in SMEM
                pl.BlockSpec(memory_space=pltpu.MemorySpace.SMEM),
            ],
            out_specs=pl.BlockSpec((b_tile, 128), lambda b: (b, 0)),
        ),
        compiler_params=pltpu.CompilerParams(
            dimension_semantics=("parallel",),
            vmem_limit_bytes=32 * 1024 * 1024,
        ),
        cost_estimate=cost,
    )(emb, w_all, b_all, fw_all, fc_b)
    return out[:B, 0]                                  # .squeeze() -> (B,)


def _reference_forward(tokens, params):
    """Pure-JAX f32 reference (unpadded math) for a sanity check."""
    emb_table, conv_w, conv_b, fc_w, fc_b = params
    emb = emb_table[tokens]                           # (B, S, D)
    B, S, _ = emb.shape
    pooled = []
    for i, ks in enumerate(KS):
        T = S - ks + 1
        patches = jnp.stack([emb[:, k:k + T, :] for k in range(ks)], axis=2)
        s = jnp.einsum('btkd,fkd->btf', patches, conv_w[i]) + conv_b[i]
        pooled.append(jnp.max(jax.nn.relu(s), axis=1))
    h = jnp.concatenate(pooled, axis=-1)              # (B, 3F)
    # forward: fc(dropout(h) * 0.5); eval dropout == identity (bias NOT scaled)
    return ((h * 0.5) @ fc_w.T + fc_b)[:, 0]


if __name__ == "__main__":
    key = jax.random.PRNGKey(0)
    k_tok, k_par = jax.random.split(key)

    VOCAB, B, S = 50, 2, 16
    tokens = jax.random.randint(k_tok, (B, S), 0, VOCAB, dtype=jnp.int32)
    params = init_params(k_par, VOCAB)

    out = jax.block_until_ready(jax.jit(cnn_forward)(tokens, params))
    ref = jax.block_until_ready(_reference_forward(tokens, params))

    assert out.shape == (B,)
    # bf16 matmul inputs (f32 accumulation) -> widened tolerance vs f32 reference.
    assert jnp.allclose(out, ref, atol=2e-2, rtol=2e-2), (out, ref)
    print("KERNEL_OK")
</pallas_src>

<mosaic_0001>
module attributes {stable_mosaic.version = 11 : i64} {
  func.func @_cnn_kernel(%arg0: i32, %arg1: memref<8x16x300xbf16, #tpu.memory_space<vmem>>, %arg2: memref<300x1536xbf16, #tpu.memory_space<vmem>>, %arg3: memref<3x128xf32, #tpu.memory_space<vmem>>, %arg4: memref<1x384xf32, #tpu.memory_space<vmem>>, %arg5: memref<1xf32, #tpu.memory_space<smem>>, %arg6: memref<8x128xf32, #tpu.memory_space<vmem>>) attributes {dimension_semantics = [#tpu.dimension_semantics<parallel>], iteration_bounds = array<i64: 1>, scalar_prefetch = 0 : i64, scratch_operands = 0 : i64, tpu.core_type = #tpu.core_type<tc>, window_params = [{transform_indices = @transform_0, window_bounds = array<i64: 8, 16, 300>}, {pipeline_mode = #tpu.pipeline_mode<synchronous>, transform_indices = @transform_1, window_bounds = array<i64: 300, 1536>}, {pipeline_mode = #tpu.pipeline_mode<synchronous>, transform_indices = @transform_2, window_bounds = array<i64: 3, 128>}, {pipeline_mode = #tpu.pipeline_mode<synchronous>, transform_indices = @transform_3, window_bounds = array<i64: 1, 384>}, {transform_indices = @transform_4, window_bounds = array<i64: 1>}, {transform_indices = @transform_5, window_bounds = array<i64: 8, 128>}]} {
    %c0 = arith.constant 0 : index
    %c0_0 = arith.constant 0 : index
    %c0_1 = arith.constant 0 : index
    %0 = vector.load %arg1[%c0, %c0_0, %c0_1] : memref<8x16x300xbf16, #tpu.memory_space<vmem>>, vector<8x16x300xbf16>
    %1 = vector.shape_cast %0 : vector<8x16x300xbf16> to vector<128x300xbf16>
    %2 = tpu.iota {dimensions = array<i32: 1>} : vector<1x16x1xi32>
    %c0_2 = arith.constant 0 : index
    %c0_3 = arith.constant 0 : index
    %3 = vector.load %arg2[%c0_2, %c0_3] : memref<300x1536xbf16, #tpu.memory_space<vmem>>, vector<300x384xbf16>
    %cst = arith.constant dense<0.000000e+00> : vector<128x384xf32>
    %4 = tpu.matmul %1, %3, %cst {dimension_numbers = #tpu.dot_dimension_numbers<[1], [0], [0], [1], [0, 0, 1, 1], [], []>} : vector<128x300xbf16>, vector<300x384xbf16>, vector<128x384xf32> -> vector<128x384xf32>
    %5 = vector.extract_strided_slice %4 {offsets = [0, 0], sizes = [128, 128], strides = [1, 1]} : vector<128x384xf32> to vector<128x128xf32>
    %6 = vector.extract_strided_slice %4 {offsets = [0, 128], sizes = [128, 128], strides = [1, 1]} : vector<128x384xf32> to vector<128x128xf32>
    %c127_i32 = arith.constant 127 : i32
    %7 = tpu.dynamic_rotate %6 by %c127_i32 dim 0 : vector<128x128xf32>, i32 -> vector<128x128xf32>
    %8 = arith.addf %5, %7 : vector<128x128xf32>
    %9 = vector.extract_strided_slice %4 {offsets = [0, 256], sizes = [128, 128], strides = [1, 1]} : vector<128x384xf32> to vector<128x128xf32>
    %c126_i32 = arith.constant 126 : i32
    %10 = tpu.dynamic_rotate %9 by %c126_i32 dim 0 : vector<128x128xf32>, i32 -> vector<128x128xf32>
    %11 = arith.addf %8, %10 : vector<128x128xf32>
    %12 = vector.shape_cast %11 : vector<128x128xf32> to vector<8x16x128xf32>
    %c0_4 = arith.constant 0 : index
    %c0_5 = arith.constant 0 : index
    %13 = vector.load %arg3[%c0_4, %c0_5] : memref<3x128xf32, #tpu.memory_space<vmem>>, vector<1x128xf32>
    %14 = vector.shape_cast %13 : vector<1x128xf32> to vector<128xf32>
    %15 = vector.shape_cast %14 : vector<128xf32> to vector<1x1x128xf32>
    %16 = vector.broadcast %15 : vector<1x1x128xf32> to vector<8x16x128xf32>
    %17 = arith.addf %12, %16 : vector<8x16x128xf32>
    %cst_6 = arith.constant 0.000000e+00 : f32
    %18 = vector.broadcast %cst_6 : f32 to vector<8x16x128xf32>
    %19 = arith.maximumf %17, %18 : vector<8x16x128xf32>
    %c14_i32 = arith.constant 14 : i32
    %20 = vector.broadcast %c14_i32 : i32 to vector<1x16x1xi32>
    %21 = arith.cmpi slt, %2, %20 : vector<1x16x1xi32>
    %cst_7 = arith.constant 0.000000e+00 : f32
    %22 = vector.shape_cast %21 : vector<1x16x1xi1> to vector<1x16x1xi1>
    %23 = vector.broadcast %22 : vector<1x16x1xi1> to vector<8x16x128xi1>
    %24 = vector.broadcast %cst_7 : f32 to vector<8x16x128xf32>
    %25 = arith.select %23, %19, %24 : vector<8x16x128xi1>, vector<8x16x128xf32>
    %cst_8 = arith.constant dense<0xFF800000> : vector<8x128xf32>
    %26 = vector.multi_reduction <maximumf>, %25, %cst_8 [1] : vector<8x16x128xf32> to vector<8x128xf32>
    %c0_9 = arith.constant 0 : index
    %c384 = arith.constant 384 : index
    %27 = vector.load %arg2[%c0_9, %c384] : memref<300x1536xbf16, #tpu.memory_space<vmem>>, vector<300x512xbf16>
    %cst_10 = arith.constant dense<0.000000e+00> : vector<128x512xf32>
    %28 = tpu.matmul %1, %27, %cst_10 {dimension_numbers = #tpu.dot_dimension_numbers<[1], [0], [0], [1], [0, 0, 1, 1], [], []>} : vector<128x300xbf16>, vector<300x512xbf16>, vector<128x512xf32> -> vector<128x512xf32>
    %29 = vector.extract_strided_slice %28 {offsets = [0, 0], sizes = [128, 128], strides = [1, 1]} : vector<128x512xf32> to vector<128x128xf32>
    %30 = vector.extract_strided_slice %28 {offsets = [0, 128], sizes = [128, 128], strides = [1, 1]} : vector<128x512xf32> to vector<128x128xf32>
    %c127_i32_11 = arith.constant 127 : i32
    %31 = tpu.dynamic_rotate %30 by %c127_i32_11 dim 0 : vector<128x128xf32>, i32 -> vector<128x128xf32>
    %32 = arith.addf %29, %31 : vector<128x128xf32>
    %33 = vector.extract_strided_slice %28 {offsets = [0, 256], sizes = [128, 128], strides = [1, 1]} : vector<128x512xf32> to vector<128x128xf32>
    %c126_i32_12 = arith.constant 126 : i32
    %34 = tpu.dynamic_rotate %33 by %c126_i32_12 dim 0 : vector<128x128xf32>, i32 -> vector<128x128xf32>
    %35 = arith.addf %32, %34 : vector<128x128xf32>
    %36 = vector.extract_strided_slice %28 {offsets = [0, 384], sizes = [128, 128], strides = [1, 1]} : vector<128x512xf32> to vector<128x128xf32>
    %c125_i32 = arith.constant 125 : i32
    %37 = tpu.dynamic_rotate %36 by %c125_i32 dim 0 : vector<128x128xf32>, i32 -> vector<128x128xf32>
    %38 = arith.addf %35, %37 : vector<128x128xf32>
    %39 = vector.shape_cast %38 : vector<128x128xf32> to vector<8x16x128xf32>
    %c1 = arith.constant 1 : index
    %c0_13 = arith.constant 0 : index
    %40 = vector.load %arg3[%c1, %c0_13] : memref<3x128xf32, #tpu.memory_space<vmem>>, vector<1x128xf32>
    %41 = vector.shape_cast %40 : vector<1x128xf32> to vector<128xf32>
    %42 = vector.shape_cast %41 : vector<128xf32> to vector<1x1x128xf32>
    %43 = vector.broadcast %42 : vector<1x1x128xf32> to vector<8x16x128xf32>
    %44 = arith.addf %39, %43 : vector<8x16x128xf32>
    %cst_14 = arith.constant 0.000000e+00 : f32
    %45 = vector.broadcast %cst_14 : f32 to vector<8x16x128xf32>
    %46 = arith.maximumf %44, %45 : vector<8x16x128xf32>
    %c13_i32 = arith.constant 13 : i32
    %47 = vector.broadcast %c13_i32 : i32 to vector<1x16x1xi32>
    %48 = arith.cmpi slt, %2, %47 : vector<1x16x1xi32>
    %cst_15 = arith.constant 0.000000e+00 : f32
    %49 = vector.shape_cast %48 : vector<1x16x1xi1> to vector<1x16x1xi1>
    %50 = vector.broadcast %49 : vector<1x16x1xi1> to vector<8x16x128xi1>
    %51 = vector.broadcast %cst_15 : f32 to vector<8x16x128xf32>
    %52 = arith.select %50, %46, %51 : vector<8x16x128xi1>, vector<8x16x128xf32>
    %cst_16 = arith.constant dense<0xFF800000> : vector<8x128xf32>
    %53 = vector.multi_reduction <maximumf>, %52, %cst_16 [1] : vector<8x16x128xf32> to vector<8x128xf32>
    %c0_17 = arith.constant 0 : index
    %c896 = arith.constant 896 : index
    %54 = vector.load %arg2[%c0_17, %c896] : memref<300x1536xbf16, #tpu.memory_space<vmem>>, vector<300x640xbf16>
    %cst_18 = arith.constant dense<0.000000e+00> : vector<128x640xf32>
    %55 = tpu.matmul %1, %54, %cst_18 {dimension_numbers = #tpu.dot_dimension_numbers<[1], [0], [0], [1], [0, 0, 1, 1], [], []>} : vector<128x300xbf16>, vector<300x640xbf16>, vector<128x640xf32> -> vector<128x640xf32>
    %56 = vector.extract_strided_slice %55 {offsets = [0, 0], sizes = [128, 128], strides = [1, 1]} : vector<128x640xf32> to vector<128x128xf32>
    %57 = vector.extract_strided_slice %55 {offsets = [0, 128], sizes = [128, 128], strides = [1, 1]} : vector<128x640xf32> to vector<128x128xf32>
    %c127_i32_19 = arith.constant 127 : i32
    %58 = tpu.dynamic_rotate %57 by %c127_i32_19 dim 0 : vector<128x128xf32>, i32 -> vector<128x128xf32>
    %59 = arith.addf %56, %58 : vector<128x128xf32>
    %60 = vector.extract_strided_slice %55 {offsets = [0, 256], sizes = [128, 128], strides = [1, 1]} : vector<128x640xf32> to vector<128x128xf32>
    %c126_i32_20 = arith.constant 126 : i32
    %61 = tpu.dynamic_rotate %60 by %c126_i32_20 dim 0 : vector<128x128xf32>, i32 -> vector<128x128xf32>
    %62 = arith.addf %59, %61 : vector<128x128xf32>
    %63 = vector.extract_strided_slice %55 {offsets = [0, 384], sizes = [128, 128], strides = [1, 1]} : vector<128x640xf32> to vector<128x128xf32>
    %c125_i32_21 = arith.constant 125 : i32
    %64 = tpu.dynamic_rotate %63 by %c125_i32_21 dim 0 : vector<128x128xf32>, i32 -> vector<128x128xf32>
    %65 = arith.addf %62, %64 : vector<128x128xf32>
    %66 = vector.extract_strided_slice %55 {offsets = [0, 512], sizes = [128, 128], strides = [1, 1]} : vector<128x640xf32> to vector<128x128xf32>
    %c124_i32 = arith.constant 124 : i32
    %67 = tpu.dynamic_rotate %66 by %c124_i32 dim 0 : vector<128x128xf32>, i32 -> vector<128x128xf32>
    %68 = arith.addf %65, %67 : vector<128x128xf32>
    %69 = vector.shape_cast %68 : vector<128x128xf32> to vector<8x16x128xf32>
    %c2 = arith.constant 2 : index
    %c0_22 = arith.constant 0 : index
    %70 = vector.load %arg3[%c2, %c0_22] : memref<3x128xf32, #tpu.memory_space<vmem>>, vector<1x128xf32>
    %71 = vector.shape_cast %70 : vector<1x128xf32> to vector<128xf32>
    %72 = vector.shape_cast %71 : vector<128xf32> to vector<1x1x128xf32>
    %73 = vector.broadcast %72 : vector<1x1x128xf32> to vector<8x16x128xf32>
    %74 = arith.addf %69, %73 : vector<8x16x128xf32>
    %cst_23 = arith.constant 0.000000e+00 : f32
    %75 = vector.broadcast %cst_23 : f32 to vector<8x16x128xf32>
    %76 = arith.maximumf %74, %75 : vector<8x16x128xf32>
    %c12_i32 = arith.constant 12 : i32
    %77 = vector.broadcast %c12_i32 : i32 to vector<1x16x1xi32>
    %78 = arith.cmpi slt, %2, %77 : vector<1x16x1xi32>
    %cst_24 = arith.constant 0.000000e+00 : f32
    %79 = vector.shape_cast %78 : vector<1x16x1xi1> to vector<1x16x1xi1>
    %80 = vector.broadcast %79 : vector<1x16x1xi1> to vector<8x16x128xi1>
    %81 = vector.broadcast %cst_24 : f32 to vector<8x16x128xf32>
    %82 = arith.select %80, %76, %81 : vector<8x16x128xi1>, vector<8x16x128xf32>
    %cst_25 = arith.constant dense<0xFF800000> : vector<8x128xf32>
    %83 = vector.multi_reduction <maximumf>, %82, %cst_25 [1] : vector<8x16x128xf32> to vector<8x128xf32>
    %84 = tpu.concatenate %26, %53, %83 in 1 : vector<8x128xf32>, vector<8x128xf32>, vector<8x128xf32> -> vector<8x384xf32>
    %c0_26 = arith.constant 0 : index
    %c0_27 = arith.constant 0 : index
    %85 = vector.load %arg4[%c0_26, %c0_27] : memref<1x384xf32, #tpu.memory_space<vmem>>, vector<1x384xf32>
    %86 = vector.broadcast %85 : vector<1x384xf32> to vector<8x384xf32>
    %87 = arith.mulf %84, %86 : vector<8x384xf32>
    %cst_28 = arith.constant dense<0.000000e+00> : vector<8xf32>
    %88 = vector.multi_reduction <add>, %87, %cst_28 [1] : vector<8x384xf32> to vector<8xf32>
    %89 = vector.shape_cast %88 : vector<8xf32> to vector<8x1xf32>
    %cst_29 = arith.constant 5.000000e-01 : f32
    %90 = vector.broadcast %cst_29 : f32 to vector<8x1xf32>
    %91 = arith.mulf %90, %89 : vector<8x1xf32>
    %c0_30 = arith.constant 0 : index
    %92 = memref.load %arg5[%c0_30] : memref<1xf32, #tpu.memory_space<smem>>
    %93 = vector.broadcast %92 : f32 to vector<8x1xf32>
    %94 = arith.addf %91, %93 : vector<8x1xf32>
    %95 = vector.shape_cast %94 : vector<8x1xf32> to vector<8x1xf32>
    %96 = vector.broadcast %95 : vector<8x1xf32> to vector<8x128xf32>
    %c0_31 = arith.constant 0 : index
    %c0_32 = arith.constant 0 : index
    %97 = vector.load %arg6[%c0_31, %c0_32] : memref<8x128xf32, #tpu.memory_space<vmem>>, vector<8x128xf32>
    tpu.vector_store %arg6[%c0_31, %c0_32], %96 {strides = array<i32>} : memref<8x128xf32, #tpu.memory_space<vmem>>, vector<8x128xf32>,
    return
  }
  func.func @transform_0(%arg0: i32) -> (i32, i32, i32) {
    %c0_i32 = arith.constant 0 : i32
    %c0_i32_0 = arith.constant 0 : i32
    %c0_i32_1 = arith.constant 0 : i32
    return %arg0, %c0_i32, %c0_i32_0 : i32, i32, i32
  }
  func.func @transform_1(%arg0: i32) -> (i32, i32) {
    %c0_i32 = arith.constant 0 : i32
    %c0_i32_0 = arith.constant 0 : i32
    %c0_i32_1 = arith.constant 0 : i32
    return %c0_i32, %c0_i32_0 : i32, i32
  }
  func.func @transform_2(%arg0: i32) -> (i32, i32) {
    %c0_i32 = arith.constant 0 : i32
    %c0_i32_0 = arith.constant 0 : i32
    %c0_i32_1 = arith.constant 0 : i32
    return %c0_i32, %c0_i32_0 : i32, i32
  }
  func.func @transform_3(%arg0: i32) -> (i32, i32) {
    %c0_i32 = arith.constant 0 : i32
    %c0_i32_0 = arith.constant 0 : i32
    %c0_i32_1 = arith.constant 0 : i32
    return %c0_i32, %c0_i32_0 : i32, i32
  }
  func.func @transform_4(%arg0: i32) -> i32 {
    %c0_i32 = arith.constant 0 : i32
    %c0_i32_0 = arith.constant 0 : i32
    return %c0_i32 : i32
  }
  func.func @transform_5(%arg0: i32) -> (i32, i32) {
    %c0_i32 = arith.constant 0 : i32
    %c0_i32_0 = arith.constant 0 : i32
    return %arg0, %c0_i32 : i32, i32
  }
}

</mosaic_0001>

<llo_original>
// kernel: cnn_forward.1
$region0: #{cnn_forward.1}
  #allocation0 [shape = 'u32[]', space=smem, size = 0x4, offset = 0x4, fixed_abs, tag = 'smem constant byte address 0x4 - core index']
  #allocation1 [shape = 'u32[144,128]{1,0:T(1,128)}', space=vmem, size = 0x12000, scoped, tag = 'internal scratch']
  #allocation2 [shape = 'f32[1]{0:T(128)S(6)}', space=smem, size = 0x200, scoped, tag = 'scoped memory for cnn_forward.1']
  %s0 = inlined_call_operand.vmem [shape: bf16[8,16,300], index: 0, kind: input, shape index: {}]
  %s1 = inlined_call_operand.vmem [shape: bf16[300,1536], index: 1, kind: input, shape index: {}]
  %s2 = inlined_call_operand.vmem [shape: f32[3,128], index: 2, kind: input, shape index: {}]
  %s3 = inlined_call_operand.vmem [shape: f32[1,384], index: 3, kind: input, shape index: {}]
  %s4 = inlined_call_operand.<no memory space> [shape: f32[1], index: 4, kind: input, shape index: {}]
  %s5 = inlined_call_operand.vmem [shape: f32[8,128], index: 5, kind: output, shape index: {}]
  %s6 = sld [smem:[#allocation0]]
  $region30: #{cnn_forward.1} parent=0
    _
  %s8 = ssub.s32 1, %s6
  %s9 = scalar_select 0, %s8, %s6
  %10 = sst [smem:[#allocation2]] %s4
  // Predicated region
  $region2: #{cnn_forward.1} parent=0 // pred_check
    _
  $region3: #{cnn_forward.1} parent=0 // pred_check_branch
    %12 = sbr.rel (0) target = $region5
  $region4: #{cnn_forward.1} parent=0 // pred_region
    _
  $region5: #{cnn_forward.1} parent=0 // pred_fallthru
    _
  // Predicated region
  $region6: #{cnn_forward.1} parent=0 // pred_check
    _
  $region7: #{cnn_forward.1} parent=0 // pred_check_branch
    %14 = sbr.rel (0) target = $region9
  $region8: #{cnn_forward.1} parent=0 // pred_region
    _
  $region9: #{cnn_forward.1} parent=0 // pred_fallthru
    _
  // Predicated region
  $region10: #{cnn_forward.1} parent=0 // pred_check
    _
  $region11: #{cnn_forward.1} parent=0 // pred_check_branch
    %16 = sbr.rel (0) target = $region13
  $region12: #{cnn_forward.1} parent=0 // pred_region
    _
  $region13: #{cnn_forward.1} parent=0 // pred_fallthru
    _
  // Predicated region
  $region14: #{cnn_forward.1} parent=0 // pred_check
    _
  $region15: #{cnn_forward.1} parent=0 // pred_check_branch
    %18 = sbr.rel (0) target = $region17
  $region16: #{cnn_forward.1} parent=0 // pred_region
    _
  $region17: #{cnn_forward.1} parent=0 // pred_fallthru
    _
  // Predicated region
  $region18: #{cnn_forward.1} parent=0 // pred_check
    _
  $region19: #{cnn_forward.1} parent=0 // pred_check_branch
    %20 = sbr.rel (0) target = $region21
  $region20: #{cnn_forward.1} parent=0 // pred_region
    _
  $region21: #{cnn_forward.1} parent=0 // pred_fallthru
    _
  %v22 = vld [vmem:[%s0] sm:$0xff]
  %v23 = vld [vmem:[%s0 + $0x8] sm:$0xf]
  %v24 = vld [vmem:[%s0 + $0xc] sm:$0xff]
  %v25 = vld [vmem:[%s0 + $0x14] sm:$0xf]
  %v26 = vld [vmem:[%s0 + $0x18] sm:$0xff]
  %v27 = vld [vmem:[%s0 + $0x20] sm:$0xf]
  %v28 = vld [vmem:[%s0 + $0x24] sm:$0xff]
  %v29 = vld [vmem:[%s0 + $0x2c] sm:$0xf]
  %v30 = vld [vmem:[%s0 + $0x30] sm:$0xff]
  %v31 = vld [vmem:[%s0 + $0x38] sm:$0xf]
  %v32 = vld [vmem:[%s0 + $0x3c] sm:$0xff]
  %v33 = vld [vmem:[%s0 + $0x44] sm:$0xf]
  %v34 = vld [vmem:[%s0 + $0x48] sm:$0xff]
  %v35 = vld [vmem:[%s0 + $0x50] sm:$0xf]
  %v36 = vld [vmem:[%s0 + $0x54] sm:$0xff]
  %v37 = vld [vmem:[%s0 + $0x5c] sm:$0xf]
  %v38 = vld [vmem:[%s0 + $0x60] sm:$0xff]
  %v39 = vld [vmem:[%s0 + $0x68] sm:$0xf]
  %v40 = vld [vmem:[%s0 + $0x6c] sm:$0xff]
  %v41 = vld [vmem:[%s0 + $0x74] sm:$0xf]
  %v42 = vld [vmem:[%s0 + $0x78] sm:$0xff]
  %v43 = vld [vmem:[%s0 + $0x80] sm:$0xf]
  %v44 = vld [vmem:[%s0 + $0x84] sm:$0xff]
  %v45 = vld [vmem:[%s0 + $0x8c] sm:$0xf]
  %v46 = vld [vmem:[%s0 + $0x90] sm:$0xff]
  %v47 = vld [vmem:[%s0 + $0x98] sm:$0xf]
  %v48 = vld [vmem:[%s0 + $0x9c] sm:$0xff]
  %v49 = vld [vmem:[%s0 + $0xa4] sm:$0xf]
  %v50 = vld [vmem:[%s0 + $0xa8] sm:$0xff]
  %v51 = vld [vmem:[%s0 + $0xb0] sm:$0xf]
  %v52 = vld [vmem:[%s0 + $0xb4] sm:$0xff]
  %v53 = vld [vmem:[%s0 + $0xbc] sm:$0xf]
  %v54 = vlaneseq
  %v55 = vshrl.u32 %v54, 7
  %v56 = vadd.s32 %v55, 8
  %v57 = vld [vmem:[%s1] sm:$0xff]
  %v58 = vld [vmem:[%s1 + $0x8] sm:$0xf]
  %v59 = vld [vmem:[%s1 + $0x30] sm:$0xff]
  %v60 = vld [vmem:[%s1 + $0x38] sm:$0xf]
  %v61 = vld [vmem:[%s1 + $0x60] sm:$0xff]
  %v62 = vld [vmem:[%s1 + $0x68] sm:$0xf]
  %v63 = vld [vmem:[%s1 + $0x90] sm:$0xff]
  %v64 = vld [vmem:[%s1 + $0x98] sm:$0xf]
  %v65 = vld [vmem:[%s1 + $0xc0] sm:$0xff]
  %v66 = vld [vmem:[%s1 + $0xc8] sm:$0xf]
  %v67 = vld [vmem:[%s1 + $0xf0] sm:$0xff]
  %v68 = vld [vmem:[%s1 + $0xf8] sm:$0xf]
  %v69 = vld [vmem:[%s1 + $0x120] sm:$0xff]
  %v70 = vld [vmem:[%s1 + $0x128] sm:$0xf]
  %v71 = vld [vmem:[%s1 + $0x150] sm:$0xff]
  %v72 = vld [vmem:[%s1 + $0x158] sm:$0xf]
  %v73 = vld [vmem:[%s1 + $0x180] sm:$0xff]
  %v74 = vld [vmem:[%s1 + $0x188] sm:$0xf]
  %v75 = vld [vmem:[%s1 + $0x1b0] sm:$0xff]
  %v76 = vld [vmem:[%s1 + $0x1b8] sm:$0xf]
  %v77 = vld [vmem:[%s1 + $0x1e0] sm:$0xff]
  %v78 = vld [vmem:[%s1 + $0x1e8] sm:$0xf]
  %v79 = vld [vmem:[%s1 + $0x210] sm:$0xff]
  %v80 = vld [vmem:[%s1 + $0x218] sm:$0xf]
  %v81 = vld [vmem:[%s1 + $0x240] sm:$0xff]
  %v82 = vld [vmem:[%s1 + $0x248] sm:$0xf]
  %v83 = vld [vmem:[%s1 + $0x270] sm:$0xff]
  %v84 = vld [vmem:[%s1 + $0x278] sm:$0xf]
  %v85 = vld [vmem:[%s1 + $0x2a0] sm:$0xff]
  %v86 = vld [vmem:[%s1 + $0x2a8] sm:$0xf]
  %v87 = vld [vmem:[%s1 + $0x2d0] sm:$0xff]
  %v88 = vld [vmem:[%s1 + $0x2d8] sm:$0xf]
  %v89 = vld [vmem:[%s1 + $0x300] sm:$0xff]
  %v90 = vld [vmem:[%s1 + $0x308] sm:$0xf]
  %v91 = vld [vmem:[%s1 + $0x330] sm:$0xff]
  %v92 = vld [vmem:[%s1 + $0x338] sm:$0xf]
  %v93 = vld [vmem:[%s1 + $0x360] sm:$0xff]
  %v94 = vld [vmem:[%s1 + $0x368] sm:$0xf]
  %v95 = vld [vmem:[%s1 + $0x390] sm:$0xff]
  %v96 = vld [vmem:[%s1 + $0x398] sm:$0xf]
  %v97 = vld [vmem:[%s1 + $0x3c0] sm:$0xff]
  %v98 = vld [vmem:[%s1 + $0x3c8] sm:$0xf]
  %v99 = vld [vmem:[%s1 + $0x3f0] sm:$0xff]
  %v100 = vld [vmem:[%s1 + $0x3f8] sm:$0xf]
  %v101 = vld [vmem:[%s1 + $0x420] sm:$0xff]
  %v102 = vld [vmem:[%s1 + $0x428] sm:$0xf]
  %v103 = vld [vmem:[%s1 + $0x450] sm:$0xff]
  %v104 = vld [vmem:[%s1 + $0x458] sm:$0xf]
  %v105 = vld [vmem:[%s1 + $0x480] sm:$0xff]
  %v106 = vld [vmem:[%s1 + $0x488] sm:$0xf]
  %v107 = vld [vmem:[%s1 + $0x4b0] sm:$0xff]
  %v108 = vld [vmem:[%s1 + $0x4b8] sm:$0xf]
  %v109 = vld [vmem:[%s1 + $0x4e0] sm:$0xff]
  %v110 = vld [vmem:[%s1 + $0x4e8] sm:$0xf]
  %v111 = vld [vmem:[%s1 + $0x510] sm:$0xff]
  %v112 = vld [vmem:[%s1 + $0x518] sm:$0xf]
  %v113 = vld [vmem:[%s1 + $0x540] sm:$0xff]
  %v114 = vld [vmem:[%s1 + $0x548] sm:$0xf]
  %v115 = vld [vmem:[%s1 + $0x570] sm:$0xff]
  %v116 = vld [vmem:[%s1 + $0x578] sm:$0xf]
  %v117 = vld [vmem:[%s1 + $0x5a0] sm:$0xff]
  %v118 = vld [vmem:[%s1 + $0x5a8] sm:$0xf]
  %v119 = vld [vmem:[%s1 + $0x5d0] sm:$0xff]
  %v120 = vld [vmem:[%s1 + $0x5d8] sm:$0xf]
  %v121 = vld [vmem:[%s1 + $0x600] sm:$0xff]
  %v122 = vld [vmem:[%s1 + $0x608] sm:$0xf]
  %v123 = vld [vmem:[%s1 + $0x630] sm:$0xff]
  %v124 = vld [vmem:[%s1 + $0x638] sm:$0xf]
  %v125 = vld [vmem:[%s1 + $0x660] sm:$0xff]
  %v126 = vld [vmem:[%s1 + $0x668] sm:$0xf]
  %v127 = vld [vmem:[%s1 + $0x690] sm:$0xff]
  %v128 = vld [vmem:[%s1 + $0x698] sm:$0xf]
  %v129 = vld [vmem:[%s1 + $0x6c0] sm:$0xff]
  %v130 = vld [vmem:[%s1 + $0x6c8] sm:$0xf]
  %v131 = vld [vmem:[%s1 + $0x6f0] sm:$0x33]
  %v132 = vld [vmem:[%s1 + $0x6f8] sm:$0x3]
  %v165 = vunpack.c.l.b16 %v22
  %v166 = vunpack.c.h.b16 %v22
  %v167 = vunpack.c.l.b16 %v23
  %v168 = vunpack.c.l.b16 %v24
  %v169 = vunpack.c.h.b16 %v24
  %v170 = vunpack.c.l.b16 %v25
  %v171 = vunpack.c.l.b16 %v26
  %v172 = vunpack.c.h.b16 %v26
  %v173 = vunpack.c.l.b16 %v27
  %v174 = vunpack.c.l.b16 %v28
  %v175 = vunpack.c.h.b16 %v28
  %v176 = vunpack.c.l.b16 %v29
  %v177 = vunpack.c.l.b16 %v30
  %v178 = vunpack.c.h.b16 %v30
  %v179 = vunpack.c.l.b16 %v31
  %v180 = vunpack.c.l.b16 %v32
  %v181 = vunpack.c.h.b16 %v32
  %v182 = vunpack.c.l.b16 %v33
  %v183 = vunpack.c.l.b16 %v34
  %v184 = vunpack.c.h.b16 %v34
  %v185 = vunpack.c.l.b16 %v35
  %v186 = vunpack.c.l.b16 %v36
  %v187 = vunpack.c.h.b16 %v36
  %v188 = vunpack.c.l.b16 %v37
  %v189 = vunpack.c.l.b16 %v38
  %v190 = vunpack.c.h.b16 %v38
  %v191 = vunpack.c.l.b16 %v39
  %v192 = vunpack.c.l.b16 %v40
  %v193 = vunpack.c.h.b16 %v40
  %v194 = vunpack.c.l.b16 %v41
  %v195 = vunpack.c.l.b16 %v42
  %v196 = vunpack.c.h.b16 %v42
  %v197 = vunpack.c.l.b16 %v43
  %v198 = vunpack.c.l.b16 %v44
  %v199 = vunpack.c.h.b16 %v44
  %v200 = vunpack.c.l.b16 %v45
  %v201 = vunpack.c.l.b16 %v46
  %v202 = vunpack.c.h.b16 %v46
  %v203 = vunpack.c.l.b16 %v47
  %v204 = vunpack.c.l.b16 %v48
  %v205 = vunpack.c.h.b16 %v48
  %v206 = vunpack.c.l.b16 %v49
  %v207 = vunpack.c.l.b16 %v50
  %v208 = vunpack.c.h.b16 %v50
  %v209 = vunpack.c.l.b16 %v51
  %v210 = vunpack.c.l.b16 %v52
  %v211 = vunpack.c.h.b16 %v52
  %v212 = vunpack.c.l.b16 %v53
  %v213 = vpack.c.b16 %v168, %v165
  %v214 = vpack.c.b16 %v169, %v166
  %v215 = vpack.c.b16 %v170, %v167
  %v216 = vpack.c.b16 %v174, %v171
  %v217 = vpack.c.b16 %v175, %v172
  %v218 = vpack.c.b16 %v176, %v173
  %v219 = vpack.c.b16 %v180, %v177
  %v220 = vpack.c.b16 %v181, %v178
  %v221 = vpack.c.b16 %v182, %v179
  %v222 = vpack.c.b16 %v186, %v183
  %v223 = vpack.c.b16 %v187, %v184
  %v224 = vpack.c.b16 %v188, %v185
  %v225 = vpack.c.b16 %v192, %v189
  %v226 = vpack.c.b16 %v193, %v190
  %v227 = vpack.c.b16 %v194, %v191
  %v228 = vpack.c.b16 %v198, %v195
  %v229 = vpack.c.b16 %v199, %v196
  %v230 = vpack.c.b16 %v200, %v197
  %v231 = vpack.c.b16 %v204, %v201
  %v232 = vpack.c.b16 %v205, %v202
  %v233 = vpack.c.b16 %v206, %v203
  %v234 = vpack.c.b16 %v210, %v207
  %v235 = vpack.c.b16 %v211, %v208
  %v236 = vpack.c.b16 %v212, %v209
  %v329 = vunpack.c.l.b16 %v57
  %v330 = vunpack.c.h.b16 %v57
  %v331 = vunpack.c.l.b16 %v58
  %v332 = vunpack.c.l.b16 %v59
  %v333 = vunpack.c.h.b16 %v59
  %v334 = vunpack.c.l.b16 %v60
  %v335 = vunpack.c.l.b16 %v61
  %v336 = vunpack.c.h.b16 %v61
  %v337 = vunpack.c.l.b16 %v62
  %v338 = vunpack.c.l.b16 %v63
  %v339 = vunpack.c.h.b16 %v63
  %v340 = vunpack.c.l.b16 %v64
  %v341 = vunpack.c.l.b16 %v65
  %v342 = vunpack.c.h.b16 %v65
  %v343 = vunpack.c.l.b16 %v66
  %v344 = vunpack.c.l.b16 %v67
  %v345 = vunpack.c.h.b16 %v67
  %v346 = vunpack.c.l.b16 %v68
  %v347 = vunpack.c.l.b16 %v69
  %v348 = vunpack.c.h.b16 %v69
  %v349 = vunpack.c.l.b16 %v70
  %v350 = vunpack.c.l.b16 %v71
  %v351 = vunpack.c.h.b16 %v71
  %v352 = vunpack.c.l.b16 %v72
  %v353 = vunpack.c.l.b16 %v73
  %v354 = vunpack.c.h.b16 %v73
  %v355 = vunpack.c.l.b16 %v74
  %v356 = vunpack.c.l.b16 %v75
  %v357 = vunpack.c.h.b16 %v75
  %v358 = vunpack.c.l.b16 %v76
  %v359 = vunpack.c.l.b16 %v77
  %v360 = vunpack.c.h.b16 %v77
  %v361 = vunpack.c.l.b16 %v78
  %v362 = vunpack.c.l.b16 %v79
  %v363 = vunpack.c.h.b16 %v79
  %v364 = vunpack.c.l.b16 %v80
  %v365 = vunpack.c.l.b16 %v81
  %v366 = vunpack.c.h.b16 %v81
  %v367 = vunpack.c.l.b16 %v82
  %v368 = vunpack.c.l.b16 %v83
  %v369 = vunpack.c.h.b16 %v83
  %v370 = vunpack.c.l.b16 %v84
  %v371 = vunpack.c.l.b16 %v85
  %v372 = vunpack.c.h.b16 %v85
  %v373 = vunpack.c.l.b16 %v86
  %v374 = vunpack.c.l.b16 %v87
  %v375 = vunpack.c.h.b16 %v87
  %v376 = vunpack.c.l.b16 %v88
  %v377 = vunpack.c.l.b16 %v89
  %v378 = vunpack.c.h.b16 %v89
  %v379 = vunpack.c.l.b16 %v90
  %v380 = vunpack.c.l.b16 %v91
  %v381 = vunpack.c.h.b16 %v91
  %v382 = vunpack.c.l.b16 %v92
  %v383 = vunpack.c.l.b16 %v93
  %v384 = vunpack.c.h.b16 %v93
  %v385 = vunpack.c.l.b16 %v94
  %v386 = vunpack.c.l.b16 %v95
  %v387 = vunpack.c.h.b16 %v95
  %v388 = vunpack.c.l.b16 %v96
  %v389 = vunpack.c.l.b16 %v97
  %v390 = vunpack.c.h.b16 %v97
  %v391 = vunpack.c.l.b16 %v98
  %v392 = vunpack.c.l.b16 %v99
  %v393 = vunpack.c.h.b16 %v99
  %v394 = vunpack.c.l.b16 %v100
  %v395 = vunpack.c.l.b16 %v101
  %v396 = vunpack.c.h.b16 %v101
  %v397 = vunpack.c.l.b16 %v102
  %v398 = vunpack.c.l.b16 %v103
  %v399 = vunpack.c.h.b16 %v103
  %v400 = vunpack.c.l.b16 %v104
  %v401 = vunpack.c.l.b16 %v105
  %v402 = vunpack.c.h.b16 %v105
  %v403 = vunpack.c.l.b16 %v106
  %v404 = vunpack.c.l.b16 %v107
  %v405 = vunpack.c.h.b16 %v107
  %v406 = vunpack.c.l.b16 %v108
  %v407 = vunpack.c.l.b16 %v109
  %v408 = vunpack.c.h.b16 %v109
  %v409 = vunpack.c.l.b16 %v110
  %v410 = vunpack.c.l.b16 %v111
  %v411 = vunpack.c.h.b16 %v111
  %v412 = vunpack.c.l.b16 %v112
  %v413 = vunpack.c.l.b16 %v113
  %v414 = vunpack.c.h.b16 %v113
  %v415 = vunpack.c.l.b16 %v114
  %v416 = vunpack.c.l.b16 %v115
  %v417 = vunpack.c.h.b16 %v115
  %v418 = vunpack.c.l.b16 %v116
  %v419 = vunpack.c.l.b16 %v117
  %v420 = vunpack.c.h.b16 %v117
  %v421 = vunpack.c.l.b16 %v118
  %v422 = vunpack.c.l.b16 %v119
  %v423 = vunpack.c.h.b16 %v119
  %v424 = vunpack.c.l.b16 %v120
  %v425 = vunpack.c.l.b16 %v121
  %v426 = vunpack.c.h.b16 %v121
  %v427 = vunpack.c.l.b16 %v122
  %v428 = vunpack.c.l.b16 %v123
  %v429 = vunpack.c.h.b16 %v123
  %v430 = vunpack.c.l.b16 %v124
  %v431 = vunpack.c.l.b16 %v125
  %v432 = vunpack.c.h.b16 %v125
  %v433 = vunpack.c.l.b16 %v126
  %v434 = vunpack.c.l.b16 %v127
  %v435 = vunpack.c.h.b16 %v127
  %v436 = vunpack.c.l.b16 %v128
  %v437 = vunpack.c.l.b16 %v129
  %v438 = vunpack.c.h.b16 %v129
  %v439 = vunpack.c.l.b16 %v130
  %v440 = vunpack.c.l.b16 %v131
  %v441 = vunpack.c.h.b16 %v131
  %v442 = vunpack.c.l.b16 %v132
  %v443 = vpack.c.b16 %v332, %v329
  %v444 = vpack.c.b16 %v333, %v330
  %v445 = vpack.c.b16 %v334, %v331
  %v446 = vpack.c.b16 %v338, %v335
  %v447 = vpack.c.b16 %v339, %v336
  %v448 = vpack.c.b16 %v340, %v337
  %v449 = vpack.c.b16 %v344, %v341
  %v450 = vpack.c.b16 %v345, %v342
  %v451 = vpack.c.b16 %v346, %v343
  %v452 = vpack.c.b16 %v350, %v347
  %v453 = vpack.c.b16 %v351, %v348
  %v454 = vpack.c.b16 %v352, %v349
  %v455 = vpack.c.b16 %v356, %v353
  %v456 = vpack.c.b16 %v357, %v354
  %v457 = vpack.c.b16 %v358, %v355
  %v458 = vpack.c.b16 %v362, %v359
  %v459 = vpack.c.b16 %v363, %v360
  %v460 = vpack.c.b16 %v364, %v361
  %v461 = vpack.c.b16 %v368, %v365
  %v462 = vpack.c.b16 %v369, %v366
  %v463 = vpack.c.b16 %v370, %v367
  %v464 = vpack.c.b16 %v374, %v371
  %v465 = vpack.c.b16 %v375, %v372
  %v466 = vpack.c.b16 %v376, %v373
  %v467 = vpack.c.b16 %v380, %v377
  %v468 = vpack.c.b16 %v381, %v378
  %v469 = vpack.c.b16 %v382, %v379
  %v470 = vpack.c.b16 %v386, %v383
  %v471 = vpack.c.b16 %v387, %v384
  %v472 = vpack.c.b16 %v388, %v385
  %v473 = vpack.c.b16 %v392, %v389
  %v474 = vpack.c.b16 %v393, %v390
  %v475 = vpack.c.b16 %v394, %v391
  %v476 = vpack.c.b16 %v398, %v395
  %v477 = vpack.c.b16 %v399, %v396
  %v478 = vpack.c.b16 %v400, %v397
  %v479 = vpack.c.b16 %v404, %v401
  %v480 = vpack.c.b16 %v405, %v402
  %v481 = vpack.c.b16 %v406, %v403
  %v482 = vpack.c.b16 %v410, %v407
  %v483 = vpack.c.b16 %v411, %v408
  %v484 = vpack.c.b16 %v412, %v409
  %v485 = vpack.c.b16 %v416, %v413
  %v486 = vpack.c.b16 %v417, %v414
  %v487 = vpack.c.b16 %v418, %v415
  %v488 = vpack.c.b16 %v422, %v419
  %v489 = vpack.c.b16 %v423, %v420
  %v490 = vpack.c.b16 %v424, %v421
  %v491 = vpack.c.b16 %v428, %v425
  %v492 = vpack.c.b16 %v429, %v426
  %v493 = vpack.c.b16 %v430, %v427
  %v494 = vpack.c.b16 %v434, %v431
  %v495 = vpack.c.b16 %v435, %v432
  %v496 = vpack.c.b16 %v436, %v433
  %v497 = vpack.c.b16 %v440, %v437
  %v498 = vpack.c.b16 %v441, %v438
  %v499 = vpack.c.b16 %v442, %v439
  %vm554 = vcmask 359424
  %v556 = vsel %vm554, %v215, 0
  %v559 = vsel %vm554, %v218, 0
  %v562 = vsel %vm554, %v221, 0
  %v565 = vsel %vm554, %v224, 0
  %v568 = vsel %vm554, %v227, 0
  %v571 = vsel %vm554, %v230, 0
  %v574 = vsel %vm554, %v233, 0
  %v577 = vsel %vm554, %v236, 0
  %vm579 = vcmask 1045504
  %v581 = vsel %vm579, %v497, 0
  %v584 = vsel %vm579, %v498, 0
  %v587 = vsel %vm579, %v499, 0
  %589 = vmatprep.subr.bf16.mxu0 %v465
  %590 = vmatpush1.bf16.msra.mxu0 %v464
  %591 = vmatprep.subr.bf16.mxu0 %v462
  %592 = vmatpush1.bf16.msra.mxu0 %v461
  %593 = vmatprep.subr.bf16.mxu0 %v459
  %594 = vmatpush1.bf16.msra.mxu0 %v458
  %595 = vmatprep.subr.bf16.mxu0 %v456
  %596 = vmatpush1.bf16.msra.mxu0 %v455
  %597 = vmatprep.subr.bf16.mxu0 %v453
  %598 = vmatpush1.bf16.msra.mxu0 %v452
  %599 = vmatprep.subr.bf16.mxu0 %v450
  %600 = vmatpush1.bf16.msra.mxu0 %v449
  %601 = vmatprep.subr.bf16.mxu0 %v447
  %602 = vmatpush1.bf16.msra.mxu0 %v446
  %603 = vmatprep.subr.bf16.mxu0 %v444
  %604 = vmatpush1.bf16.msra.mxu0 %v443
  %605 = vmatprep.subr.bf16.mxu0 %v489
  %606 = vmatpush2.bf16.msra.mxu0 %v488
  %607 = vmatprep.subr.bf16.mxu0 %v486
  %608 = vmatpush2.bf16.msra.mxu0 %v485
  %609 = vmatprep.subr.bf16.mxu0 %v483
  %610 = vmatpush2.bf16.msra.mxu0 %v482
  %611 = vmatprep.subr.bf16.mxu0 %v480
  %612 = vmatpush2.bf16.msra.mxu0 %v479
  %613 = vmatprep.subr.bf16.mxu0 %v477
  %614 = vmatpush2.bf16.msra.mxu0 %v476
  %615 = vmatprep.subr.bf16.mxu0 %v474
  %616 = vmatpush2.bf16.msra.mxu0 %v473
  %617 = vmatprep.subr.bf16.mxu0 %v471
  %618 = vmatpush2.bf16.msra.mxu0 %v470
  %619 = vmatprep.subr.bf16.mxu0 %v468
  %620 = vmatpush2.bf16.msra.mxu0 %v467
  %621 = vmatprep.mubr.bf16.mxu0 %v214
  %622 = vmatmul.mubr.bf16.gmra.mxu0 %v213
  %v623 = vpop.f32.mrf.mxu0
  %v624 = vadd.f32 0.0, %v623
  %v625 = vpop.f32.mrf.mxu0
  %v626 = vadd.f32 0.0, %v625
  %v627 = vpop.f32.mrf.mxu0
  %v628 = vadd.f32 0.0, %v627
  %v629 = vpop.f32.mrf.mxu0
  %v630 = vadd.f32 0.0, %v629
  %631 = vmatprep.mubr.bf16.mxu0 %v217
  %632 = vmatmul.mubr.bf16.gmra.mxu0 %v216
  %v633 = vpop.f32.mrf.mxu0
  %v634 = vadd.f32 0.0, %v633
  %v635 = vpop.f32.mrf.mxu0
  %v636 = vadd.f32 0.0, %v635
  %v637 = vpop.f32.mrf.mxu0
  %v638 = vadd.f32 0.0, %v637
  %v639 = vpop.f32.mrf.mxu0
  %v640 = vadd.f32 0.0, %v639
  %641 = vmatprep.mubr.bf16.mxu0 %v220
  %642 = vmatmul.mubr.bf16.gmra.mxu0 %v219
  %v643 = vpop.f32.mrf.mxu0
  %v644 = vadd.f32 0.0, %v643
  %v645 = vpop.f32.mrf.mxu0
  %v646 = vadd.f32 0.0, %v645
  %v647 = vpop.f32.mrf.mxu0
  %v648 = vadd.f32 0.0, %v647
  %v649 = vpop.f32.mrf.mxu0
  %v650 = vadd.f32 0.0, %v649
  %651 = vmatprep.mubr.bf16.mxu0 %v223
  %652 = vmatmul.mubr.bf16.gmra.mxu0 %v222
  %v653 = vpop.f32.mrf.mxu0
  %v654 = vadd.f32 0.0, %v653
  %v655 = vpop.f32.mrf.mxu0
  %v656 = vadd.f32 0.0, %v655
  %v657 = vpop.f32.mrf.mxu0
  %v658 = vadd.f32 0.0, %v657
  %v659 = vpop.f32.mrf.mxu0
  %v660 = vadd.f32 0.0, %v659
  %661 = vmatprep.mubr.bf16.mxu0 %v226
  %662 = vmatmul.mubr.bf16.gmra.mxu0 %v225
  %v663 = vpop.f32.mrf.mxu0
  %v664 = vadd.f32 0.0, %v663
  %v665 = vpop.f32.mrf.mxu0
  %v666 = vadd.f32 0.0, %v665
  %v667 = vpop.f32.mrf.mxu0
  %v668 = vadd.f32 0.0, %v667
  %v669 = vpop.f32.mrf.mxu0
  %v670 = vadd.f32 0.0, %v669
  %671 = vmatprep.mubr.bf16.mxu0 %v229
  %672 = vmatmul.mubr.bf16.gmra.mxu0 %v228
  %v673 = vpop.f32.mrf.mxu0
  %v674 = vadd.f32 0.0, %v673
  %v675 = vpop.f32.mrf.mxu0
  %v676 = vadd.f32 0.0, %v675
  %v677 = vpop.f32.mrf.mxu0
  %v678 = vadd.f32 0.0, %v677
  %v679 = vpop.f32.mrf.mxu0
  %v680 = vadd.f32 0.0, %v679
  %681 = vmatprep.mubr.bf16.mxu0 %v232
  %682 = vmatmul.mubr.bf16.gmra.mxu0 %v231
  %v683 = vpop.f32.mrf.mxu0
  %v684 = vadd.f32 0.0, %v683
  %v685 = vpop.f32.mrf.mxu0
  %v686 = vadd.f32 0.0, %v685
  %v687 = vpop.f32.mrf.mxu0
  %v688 = vadd.f32 0.0, %v687
  %v689 = vpop.f32.mrf.mxu0
  %v690 = vadd.f32 0.0, %v689
  %691 = vmatprep.mubr.bf16.mxu0 %v235
  %692 = vmatmul.mubr.bf16.gmra.mxu0 %v234
  %v693 = vpop.f32.mrf.mxu0
  %v694 = vadd.f32 0.0, %v693
  %v695 = vpop.f32.mrf.mxu0
  %v696 = vadd.f32 0.0, %v695
  %v697 = vpop.f32.mrf.mxu0
  %v698 = vadd.f32 0.0, %v697
  %v699 = vpop.f32.mrf.mxu0
  %v700 = vadd.f32 0.0, %v699
  %701 = vdwg.mxu0
  %702 = vmatprep.subr.bf16.mxu0 0
  %703 = vmatpush1.bf16.msra.mxu0 0
  %704 = vmatprep.subr.bf16.mxu0 0
  %705 = vmatpush1.bf16.msra.mxu0 0
  %706 = vmatprep.subr.bf16.mxu0 0
  %707 = vmatpush1.bf16.msra.mxu0 0
  %708 = vmatprep.subr.bf16.mxu0 0
  %709 = vmatpush1.bf16.msra.mxu0 0
  %710 = vmatprep.subr.bf16.mxu0 0
  %711 = vmatpush1.bf16.msra.mxu0 0
  %712 = vmatprep.subr.bf16.mxu0 %v584
  %713 = vmatpush1.bf16.msra.mxu0 %v581
  %714 = vmatprep.subr.bf16.mxu0 %v495
  %715 = vmatpush1.bf16.msra.mxu0 %v494
  %716 = vmatprep.subr.bf16.mxu0 %v492
  %717 = vmatpush1.bf16.msra.mxu0 %v491
  %718 = vmatprep.subr.bf16.mxu0 0
  %719 = vmatpush2.bf16.msra.mxu0 0
  %720 = vmatprep.subr.bf16.mxu0 0
  %721 = vmatpush2.bf16.msra.mxu0 0
  %722 = vmatprep.subr.bf16.mxu0 0
  %723 = vmatpush2.bf16.msra.mxu0 0
  %724 = vmatprep.subr.bf16.mxu0 0
  %725 = vmatpush2.bf16.msra.mxu0 0
  %726 = vmatprep.subr.bf16.mxu0 0
  %727 = vmatpush2.bf16.msra.mxu0 0
  %728 = vmatprep.subr.bf16.mxu0 0
  %729 = vmatpush2.bf16.msra.mxu0 0
  %730 = vmatprep.subr.bf16.mxu0 0
  %731 = vmatpush2.bf16.msra.mxu0 0
  %732 = vmatprep.subr.bf16.mxu0 0
  %733 = vmatpush2.bf16.msra.mxu0 0
  %734 = vmatprep.mubr.bf16.mxu0 0
  %735 = vmatmul.mubr.bf16.gmra.mxu0 %v556
  %v736 = vpop.f32.mrf.mxu0
  %v737 = vadd.f32 %v624, %v736
  %v738 = vpop.f32.mrf.mxu0
  %v739 = vadd.f32 %v626, %v738
  %v740 = vpop.f32.mrf.mxu0
  %v741 = vadd.f32 %v628, %v740
  %v742 = vpop.f32.mrf.mxu0
  %v743 = vadd.f32 %v630, %v742
  %744 = vmatprep.mubr.bf16.mxu0 0
  %745 = vmatmul.mubr.bf16.gmra.mxu0 %v559
  %v746 = vpop.f32.mrf.mxu0
  %v747 = vadd.f32 %v634, %v746
  %v748 = vpop.f32.mrf.mxu0
  %v749 = vadd.f32 %v636, %v748
  %v750 = vpop.f32.mrf.mxu0
  %v751 = vadd.f32 %v638, %v750
  %v752 = vpop.f32.mrf.mxu0
  %v753 = vadd.f32 %v640, %v752
  %754 = vmatprep.mubr.bf16.mxu0 0
  %755 = vmatmul.mubr.bf16.gmra.mxu0 %v562
  %v756 = vpop.f32.mrf.mxu0
  %v757 = vadd.f32 %v644, %v756
  %v758 = vpop.f32.mrf.mxu0
  %v759 = vadd.f32 %v646, %v758
  %v760 = vpop.f32.mrf.mxu0
  %v761 = vadd.f32 %v648, %v760
  %v762 = vpop.f32.mrf.mxu0
  %v763 = vadd.f32 %v650, %v762
  %764 = vmatprep.mubr.bf16.mxu0 0
  %765 = vmatmul.mubr.bf16.gmra.mxu0 %v565
  %v766 = vpop.f32.mrf.mxu0
  %v767 = vadd.f32 %v654, %v766
  %v768 = vpop.f32.mrf.mxu0
  %v769 = vadd.f32 %v656, %v768
  %v770 = vpop.f32.mrf.mxu0
  %v771 = vadd.f32 %v658, %v770
  %v772 = vpop.f32.mrf.mxu0
  %v773 = vadd.f32 %v660, %v772
  %774 = vmatprep.mubr.bf16.mxu0 0
  %775 = vmatmul.mubr.bf16.gmra.mxu0 %v568
  %v776 = vpop.f32.mrf.mxu0
  %v777 = vadd.f32 %v664, %v776
  %v778 = vpop.f32.mrf.mxu0
  %v779 = vadd.f32 %v666, %v778
  %v780 = vpop.f32.mrf.mxu0
  %v781 = vadd.f32 %v668, %v780
  %v782 = vpop.f32.mrf.mxu0
  %v783 = vadd.f32 %v670, %v782
  %784 = vmatprep.mubr.bf16.mxu0 0
  %785 = vmatmul.mubr.bf16.gmra.mxu0 %v571
  %v786 = vpop.f32.mrf.mxu0
  %v787 = vadd.f32 %v674, %v786
  %v788 = vpop.f32.mrf.mxu0
  %v789 = vadd.f32 %v676, %v788
  %v790 = vpop.f32.mrf.mxu0
  %v791 = vadd.f32 %v678, %v790
  %v792 = vpop.f32.mrf.mxu0
  %v793 = vadd.f32 %v680, %v792
  %794 = vmatprep.mubr.bf16.mxu0 0
  %795 = vmatmul.mubr.bf16.gmra.mxu0 %v574
  %v796 = vpop.f32.mrf.mxu0
  %v797 = vadd.f32 %v684, %v796
  %v798 = vpop.f32.mrf.mxu0
  %v799 = vadd.f32 %v686, %v798
  %v800 = vpop.f32.mrf.mxu0
  %v801 = vadd.f32 %v688, %v800
  %v802 = vpop.f32.mrf.mxu0
  %v803 = vadd.f32 %v690, %v802
  %804 = vmatprep.mubr.bf16.mxu0 0
  %805 = vmatmul.mubr.bf16.gmra.mxu0 %v577
  %v806 = vpop.f32.mrf.mxu0
  %v807 = vadd.f32 %v694, %v806
  %v808 = vpop.f32.mrf.mxu0
  %v809 = vadd.f32 %v696, %v808
  %v810 = vpop.f32.mrf.mxu0
  %v811 = vadd.f32 %v698, %v810
  %v812 = vpop.f32.mrf.mxu0
  %v813 = vadd.f32 %v700, %v812
  %814 = vdwg.mxu0
  %815 = vmatprep.subr.bf16.mxu0 0
  %816 = vmatpush1.bf16.msra.mxu0 %v466
  %817 = vmatprep.subr.bf16.mxu0 0
  %818 = vmatpush1.bf16.msra.mxu0 %v463
  %819 = vmatprep.subr.bf16.mxu0 0
  %820 = vmatpush1.bf16.msra.mxu0 %v460
  %821 = vmatprep.subr.bf16.mxu0 0
  %822 = vmatpush1.bf16.msra.mxu0 %v457
  %823 = vmatprep.subr.bf16.mxu0 0
  %824 = vmatpush1.bf16.msra.mxu0 %v454
  %825 = vmatprep.subr.bf16.mxu0 0
  %826 = vmatpush1.bf16.msra.mxu0 %v451
  %827 = vmatprep.subr.bf16.mxu0 0
  %828 = vmatpush1.bf16.msra.mxu0 %v448
  %829 = vmatprep.subr.bf16.mxu0 0
  %830 = vmatpush1.bf16.msra.mxu0 %v445
  %831 = vmatprep.subr.bf16.mxu0 0
  %832 = vmatpush2.bf16.msra.mxu0 %v490
  %833 = vmatprep.subr.bf16.mxu0 0
  %834 = vmatpush2.bf16.msra.mxu0 %v487
  %835 = vmatprep.subr.bf16.mxu0 0
  %836 = vmatpush2.bf16.msra.mxu0 %v484
  %837 = vmatprep.subr.bf16.mxu0 0
  %838 = vmatpush2.bf16.msra.mxu0 %v481
  %839 = vmatprep.subr.bf16.mxu0 0
  %840 = vmatpush2.bf16.msra.mxu0 %v478
  %841 = vmatprep.subr.bf16.mxu0 0
  %842 = vmatpush2.bf16.msra.mxu0 %v475
  %843 = vmatprep.subr.bf16.mxu0 0
  %844 = vmatpush2.bf16.msra.mxu0 %v472
  %845 = vmatprep.subr.bf16.mxu0 0
  %846 = vmatpush2.bf16.msra.mxu0 %v469
  %847 = vmatprep.mubr.bf16.mxu0 %v214
  %848 = vmatmul.mubr.bf16.gmra.mxu0 %v213
  %v849 = vpop.f32.mrf.mxu0
  %v850 = vadd.f32 0.0, %v849
  %v851 = vpop.f32.mrf.mxu0
  %v852 = vpop.f32.mrf.mxu0
  %v853 = vadd.f32 0.0, %v852
  %v854 = vpop.f32.mrf.mxu0
  %855 = vmatprep.mubr.bf16.mxu0 %v217
  %856 = vmatmul.mubr.bf16.gmra.mxu0 %v216
  %v857 = vpop.f32.mrf.mxu0
  %v858 = vadd.f32 0.0, %v857
  %v859 = vpop.f32.mrf.mxu0
  %v860 = vpop.f32.mrf.mxu0
  %v861 = vadd.f32 0.0, %v860
  %v862 = vpop.f32.mrf.mxu0
  %863 = vmatprep.mubr.bf16.mxu0 %v220
  %864 = vmatmul.mubr.bf16.gmra.mxu0 %v219
  %v865 = vpop.f32.mrf.mxu0
  %v866 = vadd.f32 0.0, %v865
  %v867 = vpop.f32.mrf.mxu0
  %v868 = vpop.f32.mrf.mxu0
  %v869 = vadd.f32 0.0, %v868
  %v870 = vpop.f32.mrf.mxu0
  %871 = vmatprep.mubr.bf16.mxu0 %v223
  %872 = vmatmul.mubr.bf16.gmra.mxu0 %v222
  %v873 = vpop.f32.mrf.mxu0
  %v874 = vadd.f32 0.0, %v873
  %v875 = vpop.f32.mrf.mxu0
  %v876 = vpop.f32.mrf.mxu0
  %v877 = vadd.f32 0.0, %v876
  %v878 = vpop.f32.mrf.mxu0
  %879 = vmatprep.mubr.bf16.mxu0 %v226
  %880 = vmatmul.mubr.bf16.gmra.mxu0 %v225
  %v881 = vpop.f32.mrf.mxu0
  %v882 = vadd.f32 0.0, %v881
  %v883 = vpop.f32.mrf.mxu0
  %v884 = vpop.f32.mrf.mxu0
  %v885 = vadd.f32 0.0, %v884
  %v886 = vpop.f32.mrf.mxu0
  %887 = vmatprep.mubr.bf16.mxu0 %v229
  %888 = vmatmul.mubr.bf16.gmra.mxu0 %v228
  %v889 = vpop.f32.mrf.mxu0
  %v890 = vadd.f32 0.0, %v889
  %v891 = vpop.f32.mrf.mxu0
  %v892 = vpop.f32.mrf.mxu0
  %v893 = vadd.f32 0.0, %v892
  %v894 = vpop.f32.mrf.mxu0
  %895 = vmatprep.mubr.bf16.mxu0 %v232
  %896 = vmatmul.mubr.bf16.gmra.mxu0 %v231
  %v897 = vpop.f32.mrf.mxu0
  %v898 = vadd.f32 0.0, %v897
  %v899 = vpop.f32.mrf.mxu0
  %v900 = vpop.f32.mrf.mxu0
  %v901 = vadd.f32 0.0, %v900
  %v902 = vpop.f32.mrf.mxu0
  %903 = vmatprep.mubr.bf16.mxu0 %v235
  %904 = vmatmul.mubr.bf16.gmra.mxu0 %v234
  %v905 = vpop.f32.mrf.mxu0
  %v906 = vadd.f32 0.0, %v905
  %v907 = vpop.f32.mrf.mxu0
  %v908 = vpop.f32.mrf.mxu0
  %v909 = vadd.f32 0.0, %v908
  %v910 = vpop.f32.mrf.mxu0
  %911 = vdwg.mxu0
  %912 = vmatprep.subr.bf16.mxu0 0
  %913 = vmatpush1.bf16.msra.mxu0 0
  %914 = vmatprep.subr.bf16.mxu0 0
  %915 = vmatpush1.bf16.msra.mxu0 0
  %916 = vmatprep.subr.bf16.mxu0 0
  %917 = vmatpush1.bf16.msra.mxu0 0
  %918 = vmatprep.subr.bf16.mxu0 0
  %919 = vmatpush1.bf16.msra.mxu0 0
  %920 = vmatprep.subr.bf16.mxu0 0
  %921 = vmatpush1.bf16.msra.mxu0 0
  %922 = vmatprep.subr.bf16.mxu0 0
  %923 = vmatpush1.bf16.msra.mxu0 %v587
  %924 = vmatprep.subr.bf16.mxu0 0
  %925 = vmatpush1.bf16.msra.mxu0 %v496
  %926 = vmatprep.subr.bf16.mxu0 0
  %927 = vmatpush1.bf16.msra.mxu0 %v493
  %928 = vmatprep.subr.bf16.mxu0 0
  %929 = vmatpush2.bf16.msra.mxu0 0
  %930 = vmatprep.subr.bf16.mxu0 0
  %931 = vmatpush2.bf16.msra.mxu0 0
  %932 = vmatprep.subr.bf16.mxu0 0
  %933 = vmatpush2.bf16.msra.mxu0 0
  %934 = vmatprep.subr.bf16.mxu0 0
  %935 = vmatpush2.bf16.msra.mxu0 0
  %936 = vmatprep.subr.bf16.mxu0 0
  %937 = vmatpush2.bf16.msra.mxu0 0
  %938 = vmatprep.subr.bf16.mxu0 0
  %939 = vmatpush2.bf16.msra.mxu0 0
  %940 = vmatprep.subr.bf16.mxu0 0
  %941 = vmatpush2.bf16.msra.mxu0 0
  %942 = vmatprep.subr.bf16.mxu0 0
  %943 = vmatpush2.bf16.msra.mxu0 0
  %944 = vmatprep.mubr.bf16.mxu0 0
  %945 = vmatmul.mubr.bf16.gmra.mxu0 %v556
  %v946 = vpop.f32.mrf.mxu0
  %v947 = vadd.f32 %v850, %v946
  %v948 = vpop.f32.mrf.mxu0
  %v949 = vpop.f32.mrf.mxu0
  %v950 = vadd.f32 %v853, %v949
  %v951 = vpop.f32.mrf.mxu0
  %952 = vmatprep.mubr.bf16.mxu0 0
  %953 = vmatmul.mubr.bf16.gmra.mxu0 %v559
  %v954 = vpop.f32.mrf.mxu0
  %v955 = vadd.f32 %v858, %v954
  %v956 = vpop.f32.mrf.mxu0
  %v957 = vpop.f32.mrf.mxu0
  %v958 = vadd.f32 %v861, %v957
  %v959 = vpop.f32.mrf.mxu0
  %960 = vmatprep.mubr.bf16.mxu0 0
  %961 = vmatmul.mubr.bf16.gmra.mxu0 %v562
  %v962 = vpop.f32.mrf.mxu0
  %v963 = vadd.f32 %v866, %v962
  %v964 = vpop.f32.mrf.mxu0
  %v965 = vpop.f32.mrf.mxu0
  %v966 = vadd.f32 %v869, %v965
  %v967 = vpop.f32.mrf.mxu0
  %968 = vmatprep.mubr.bf16.mxu0 0
  %969 = vmatmul.mubr.bf16.gmra.mxu0 %v565
  %v970 = vpop.f32.mrf.mxu0
  %v971 = vadd.f32 %v874, %v970
  %v972 = vpop.f32.mrf.mxu0
  %v973 = vpop.f32.mrf.mxu0
  %v974 = vadd.f32 %v877, %v973
  %v975 = vpop.f32.mrf.mxu0
  %976 = vmatprep.mubr.bf16.mxu0 0
  %977 = vmatmul.mubr.bf16.gmra.mxu0 %v568
  %v978 = vpop.f32.mrf.mxu0
  %v979 = vadd.f32 %v882, %v978
  %v980 = vpop.f32.mrf.mxu0
  %v981 = vpop.f32.mrf.mxu0
  %v982 = vadd.f32 %v885, %v981
  %v983 = vpop.f32.mrf.mxu0
  %984 = vmatprep.mubr.bf16.mxu0 0
  %985 = vmatmul.mubr.bf16.gmra.mxu0 %v571
  %v986 = vpop.f32.mrf.mxu0
  %v987 = vadd.f32 %v890, %v986
  %v988 = vpop.f32.mrf.mxu0
  %v989 = vpop.f32.mrf.mxu0
  %v990 = vadd.f32 %v893, %v989
  %v991 = vpop.f32.mrf.mxu0
  %992 = vmatprep.mubr.bf16.mxu0 0
  %993 = vmatmul.mubr.bf16.gmra.mxu0 %v574
  %v994 = vpop.f32.mrf.mxu0
  %v995 = vadd.f32 %v898, %v994
  %v996 = vpop.f32.mrf.mxu0
  %v997 = vpop.f32.mrf.mxu0
  %v998 = vadd.f32 %v901, %v997
  %v999 = vpop.f32.mrf.mxu0
  %1000 = vmatprep.mubr.bf16.mxu0 0
  %1001 = vmatmul.mubr.bf16.gmra.mxu0 %v577
  %v1002 = vpop.f32.mrf.mxu0
  %v1003 = vadd.f32 %v906, %v1002
  %v1004 = vpop.f32.mrf.mxu0
  %v1005 = vpop.f32.mrf.mxu0
  %v1006 = vadd.f32 %v909, %v1005
  %v1007 = vpop.f32.mrf.mxu0
  %1008 = vdwg.mxu0
  %v1009 = vrot.slane %v739, 1
  %v1010 = vrot.slane %v743, 1
  %v1011 = vrot.slane %v749, 1
  %v1012 = vrot.slane %v753, 1
  %v1013 = vrot.slane %v759, 1
  %v1014 = vrot.slane %v763, 1
  %v1015 = vrot.slane %v769, 1
  %v1016 = vrot.slane %v773, 1
  %v1017 = vrot.slane %v779, 1
  %v1018 = vrot.slane %v783, 1
  %v1019 = vrot.slane %v789, 1
  %v1020 = vrot.slane %v793, 1
  %v1021 = vrot.slane %v799, 1
  %v1022 = vrot.slane %v803, 1
  %v1023 = vrot.slane %v809, 1
  %v1024 = vrot.slane %v813, 1
  %vm1025 = vcmp.lt.s32.totalorder %v55, 7
  %v1026 = vsel %vm1025, %v1023, %v1024
  %v1027 = vsel %vm1025, %v1022, %v1023
  %v1028 = vsel %vm1025, %v1021, %v1022
  %v1029 = vsel %vm1025, %v1020, %v1021
  %v1030 = vsel %vm1025, %v1019, %v1020
  %v1031 = vsel %vm1025, %v1018, %v1019
  %v1032 = vsel %vm1025, %v1017, %v1018
  %v1033 = vsel %vm1025, %v1016, %v1017
  %v1034 = vsel %vm1025, %v1015, %v1016
  %v1035 = vsel %vm1025, %v1014, %v1015
  %v1036 = vsel %vm1025, %v1013, %v1014
  %v1037 = vsel %vm1025, %v1012, %v1013
  %v1038 = vsel %vm1025, %v1011, %v1012
  %v1039 = vsel %vm1025, %v1010, %v1011
  %v1040 = vsel %vm1025, %v1009, %v1010
  %v1041 = vsel %vm1025, %v1024, %v1009
  %v1042 = vadd.f32 %v737, %v1040
  %v1043 = vadd.f32 %v741, %v1039
  %v1044 = vadd.f32 %v747, %v1038
  %v1045 = vadd.f32 %v751, %v1037
  %v1046 = vadd.f32 %v757, %v1036
  %v1047 = vadd.f32 %v761, %v1035
  %v1048 = vadd.f32 %v767, %v1034
  %v1049 = vadd.f32 %v771, %v1033
  %v1050 = vadd.f32 %v777, %v1032
  %v1051 = vadd.f32 %v781, %v1031
  %v1052 = vadd.f32 %v787, %v1030
  %v1053 = vadd.f32 %v791, %v1029
  %v1054 = vadd.f32 %v797, %v1028
  %v1055 = vadd.f32 %v801, %v1027
  %v1056 = vadd.f32 %v807, %v1026
  %v1057 = vadd.f32 %v811, %v1041
  %v1058 = vrot.slane %v947, 2
  %v1059 = vrot.slane %v950, 2
  %v1060 = vrot.slane %v955, 2
  %v1061 = vrot.slane %v958, 2
  %v1062 = vrot.slane %v963, 2
  %v1063 = vrot.slane %v966, 2
  %v1064 = vrot.slane %v971, 2
  %v1065 = vrot.slane %v974, 2
  %v1066 = vrot.slane %v979, 2
  %v1067 = vrot.slane %v982, 2
  %v1068 = vrot.slane %v987, 2
  %v1069 = vrot.slane %v990, 2
  %v1070 = vrot.slane %v995, 2
  %v1071 = vrot.slane %v998, 2
  %v1072 = vrot.slane %v1003, 2
  %v1073 = vrot.slane %v1006, 2
  %vm1074 = vcmp.lt.s32.totalorder %v55, 6
  %v1075 = vsel %vm1074, %v1072, %v1073
  %v1076 = vsel %vm1074, %v1071, %v1072
  %v1077 = vsel %vm1074, %v1070, %v1071
  %v1078 = vsel %vm1074, %v1069, %v1070
  %v1079 = vsel %vm1074, %v1068, %v1069
  %v1080 = vsel %vm1074, %v1067, %v1068
  %v1081 = vsel %vm1074, %v1066, %v1067
  %v1082 = vsel %vm1074, %v1065, %v1066
  %v1083 = vsel %vm1074, %v1064, %v1065
  %v1084 = vsel %vm1074, %v1063, %v1064
  %v1085 = vsel %vm1074, %v1062, %v1063
  %v1086 = vsel %vm1074, %v1061, %v1062
  %v1087 = vsel %vm1074, %v1060, %v1061
  %v1088 = vsel %vm1074, %v1059, %v1060
  %v1089 = vsel %vm1074, %v1058, %v1059
  %v1090 = vsel %vm1074, %v1073, %v1058
  %v1091 = vadd.f32 %v1042, %v1089
  %v1092 = vadd.f32 %v1043, %v1088
  %v1093 = vadd.f32 %v1044, %v1087
  %v1094 = vadd.f32 %v1045, %v1086
  %v1095 = vadd.f32 %v1046, %v1085
  %v1096 = vadd.f32 %v1047, %v1084
  %v1097 = vadd.f32 %v1048, %v1083
  %v1098 = vadd.f32 %v1049, %v1082
  %v1099 = vadd.f32 %v1050, %v1081
  %v1100 = vadd.f32 %v1051, %v1080
  %v1101 = vadd.f32 %v1052, %v1079
  %v1102 = vadd.f32 %v1053, %v1078
  %v1103 = vadd.f32 %v1054, %v1077
  %v1104 = vadd.f32 %v1055, %v1076
  %v1105 = vadd.f32 %v1056, %v1075
  %v1106 = vadd.f32 %v1057, %v1090
  %v1107 = vld [vmem:[%s2] sm:$0x1]
  %v1108 = vlaneseq
  %v1109 = vshrl.u32 %v1108, 7
  %v1110 = vsub.s32 0, %v1109
  %v1111 = vrot.slane %v1107, %v1110
  %v1112 = vadd.f32 %v1091, %v1111
  %v1113 = vadd.f32 %v1092, %v1111
  %v1114 = vadd.f32 %v1093, %v1111
  %v1115 = vadd.f32 %v1094, %v1111
  %v1116 = vadd.f32 %v1095, %v1111
  %v1117 = vadd.f32 %v1096, %v1111
  %v1118 = vadd.f32 %v1097, %v1111
  %v1119 = vadd.f32 %v1098, %v1111
  %v1120 = vadd.f32 %v1099, %v1111
  %v1121 = vadd.f32 %v1100, %v1111
  %v1122 = vadd.f32 %v1101, %v1111
  %v1123 = vadd.f32 %v1102, %v1111
  %v1124 = vadd.f32 %v1103, %v1111
  %v1125 = vadd.f32 %v1104, %v1111
  %v1126 = vadd.f32 %v1105, %v1111
  %v1127 = vadd.f32 %v1106, %v1111
  %v1128 = vmax.f32 %v1112, 0.0
  %v1129 = vmax.f32 %v1113, 0.0
  %v1130 = vmax.f32 %v1114, 0.0
  %v1131 = vmax.f32 %v1115, 0.0
  %v1132 = vmax.f32 %v1116, 0.0
  %v1133 = vmax.f32 %v1117, 0.0
  %v1134 = vmax.f32 %v1118, 0.0
  %v1135 = vmax.f32 %v1119, 0.0
  %v1136 = vmax.f32 %v1120, 0.0
  %v1137 = vmax.f32 %v1121, 0.0
  %v1138 = vmax.f32 %v1122, 0.0
  %v1139 = vmax.f32 %v1123, 0.0
  %v1140 = vmax.f32 %v1124, 0.0
  %v1141 = vmax.f32 %v1125, 0.0
  %v1142 = vmax.f32 %v1126, 0.0
  %v1143 = vmax.f32 %v1127, 0.0
  %vm1144 = vcmp.lt.s32.totalorder %v55, 14
  %vm1145 = vcmp.lt.s32.totalorder %v56, 14
  %v1146 = vsel %vm1144, 1, 0
  %v1147 = vsel %vm1145, 1, 0
  %vm1148 = vcmp.eq.s32.totalorder %v1146, 1
  %vm1149 = vcmp.eq.s32.totalorder %v1147, 1
  %v1150 = vsel %vm1148, %v1128, 0.0
  %v1151 = vsel %vm1149, %v1129, 0.0
  %v1152 = vsel %vm1148, %v1130, 0.0
  %v1153 = vsel %vm1149, %v1131, 0.0
  %v1154 = vsel %vm1148, %v1132, 0.0
  %v1155 = vsel %vm1149, %v1133, 0.0
  %v1156 = vsel %vm1148, %v1134, 0.0
  %v1157 = vsel %vm1149, %v1135, 0.0
  %v1158 = vsel %vm1148, %v1136, 0.0
  %v1159 = vsel %vm1149, %v1137, 0.0
  %v1160 = vsel %vm1148, %v1138, 0.0
  %v1161 = vsel %vm1149, %v1139, 0.0
  %v1162 = vsel %vm1148, %v1140, 0.0
  %v1163 = vsel %vm1149, %v1141, 0.0
  %v1164 = vsel %vm1148, %v1142, 0.0
  %v1165 = vsel %vm1149, %v1143, 0.0
  %v1166 = vmax.f32 %v1150, %v1151
  %v1167 = vrot.slane %v1166, 4
  %v1168 = vmax.f32 %v1166, %v1167
  %v1169 = vrot.slane %v1168, 2
  %v1170 = vmax.f32 %v1168, %v1169
  %v1171 = vrot.slane %v1170, 1
  %v1172 = vmax.f32 %v1170, %v1171
  %v1173 = vmax.f32 %v1152, %v1153
  %v1174 = vrot.slane %v1173, 4
  %v1175 = vmax.f32 %v1173, %v1174
  %v1176 = vrot.slane %v1175, 2
  %v1177 = vmax.f32 %v1175, %v1176
  %v1178 = vrot.slane %v1177, 1
  %v1179 = vmax.f32 %v1177, %v1178
  %v1180 = vmax.f32 %v1154, %v1155
  %v1181 = vrot.slane %v1180, 4
  %v1182 = vmax.f32 %v1180, %v1181
  %v1183 = vrot.slane %v1182, 2
  %v1184 = vmax.f32 %v1182, %v1183
  %v1185 = vrot.slane %v1184, 1
  %v1186 = vmax.f32 %v1184, %v1185
  %v1187 = vmax.f32 %v1156, %v1157
  %v1188 = vrot.slane %v1187, 4
  %v1189 = vmax.f32 %v1187, %v1188
  %v1190 = vrot.slane %v1189, 2
  %v1191 = vmax.f32 %v1189, %v1190
  %v1192 = vrot.slane %v1191, 1
  %v1193 = vmax.f32 %v1191, %v1192
  %v1194 = vmax.f32 %v1158, %v1159
  %v1195 = vrot.slane %v1194, 4
  %v1196 = vmax.f32 %v1194, %v1195
  %v1197 = vrot.slane %v1196, 2
  %v1198 = vmax.f32 %v1196, %v1197
  %v1199 = vrot.slane %v1198, 1
  %v1200 = vmax.f32 %v1198, %v1199
  %v1201 = vmax.f32 %v1160, %v1161
  %v1202 = vrot.slane %v1201, 4
  %v1203 = vmax.f32 %v1201, %v1202
  %v1204 = vrot.slane %v1203, 2
  %v1205 = vmax.f32 %v1203, %v1204
  %v1206 = vrot.slane %v1205, 1
  %v1207 = vmax.f32 %v1205, %v1206
  %v1208 = vmax.f32 %v1162, %v1163
  %v1209 = vrot.slane %v1208, 4
  %v1210 = vmax.f32 %v1208, %v1209
  %v1211 = vrot.slane %v1210, 2
  %v1212 = vmax.f32 %v1210, %v1211
  %v1213 = vrot.slane %v1212, 1
  %v1214 = vmax.f32 %v1212, %v1213
  %v1215 = vmax.f32 %v1164, %v1165
  %v1216 = vrot.slane %v1215, 4
  %v1217 = vmax.f32 %v1215, %v1216
  %v1218 = vrot.slane %v1217, 2
  %v1219 = vmax.f32 %v1217, %v1218
  %v1220 = vrot.slane %v1219, 1
  %v1221 = vmax.f32 %v1219, %v1220
  %v1222 = vld [vmem:[%s1 + $0xc] sm:$0xff]
  %v1223 = vld [vmem:[%s1 + $0x14] sm:$0xff]
  %v1224 = vld [vmem:[%s1 + $0x3c] sm:$0xff]
  %v1225 = vld [vmem:[%s1 + $0x44] sm:$0xff]
  %v1226 = vld [vmem:[%s1 + $0x6c] sm:$0xff]
  %v1227 = vld [vmem:[%s1 + $0x74] sm:$0xff]
  %v1228 = vld [vmem:[%s1 + $0x9c] sm:$0xff]
  %v1229 = vld [vmem:[%s1 + $0xa4] sm:$0xff]
  %v1230 = vld [vmem:[%s1 + $0xcc] sm:$0xff]
  %v1231 = vld [vmem:[%s1 + $0xd4] sm:$0xff]
  %v1232 = vld [vmem:[%s1 + $0xfc] sm:$0xff]
  %v1233 = vld [vmem:[%s1 + $0x104] sm:$0xff]
  %v1234 = vld [vmem:[%s1 + $0x12c] sm:$0xff]
  %v1235 = vld [vmem:[%s1 + $0x134] sm:$0xff]
  %v1236 = vld [vmem:[%s1 + $0x15c] sm:$0xff]
  %v1237 = vld [vmem:[%s1 + $0x164] sm:$0xff]
  %v1238 = vld [vmem:[%s1 + $0x18c] sm:$0xff]
  %v1239 = vld [vmem:[%s1 + $0x194] sm:$0xff]
  %v1240 = vld [vmem:[%s1 + $0x1bc] sm:$0xff]
  %v1241 = vld [vmem:[%s1 + $0x1c4] sm:$0xff]
  %v1242 = vld [vmem:[%s1 + $0x1ec] sm:$0xff]
  %v1243 = vld [vmem:[%s1 + $0x1f4] sm:$0xff]
  %v1244 = vld [vmem:[%s1 + $0x21c] sm:$0xff]
  %v1245 = vld [vmem:[%s1 + $0x224] sm:$0xff]
  %v1246 = vld [vmem:[%s1 + $0x24c] sm:$0xff]
  %v1247 = vld [vmem:[%s1 + $0x254] sm:$0xff]
  %v1248 = vld [vmem:[%s1 + $0x27c] sm:$0xff]
  %v1249 = vld [vmem:[%s1 + $0x284] sm:$0xff]
  %v1250 = vld [vmem:[%s1 + $0x2ac] sm:$0xff]
  %v1251 = vld [vmem:[%s1 + $0x2b4] sm:$0xff]
  %v1252 = vld [vmem:[%s1 + $0x2dc] sm:$0xff]
  %v1253 = vld [vmem:[%s1 + $0x2e4] sm:$0xff]
  %v1254 = vld [vmem:[%s1 + $0x30c] sm:$0xff]
  %v1255 = vld [vmem:[%s1 + $0x314] sm:$0xff]
  %v1256 = vld [vmem:[%s1 + $0x33c] sm:$0xff]
  %v1257 = vld [vmem:[%s1 + $0x344] sm:$0xff]
  %v1258 = vld [vmem:[%s1 + $0x36c] sm:$0xff]
  %v1259 = vld [vmem:[%s1 + $0x374] sm:$0xff]
  %v1260 = vld [vmem:[%s1 + $0x39c] sm:$0xff]
  %v1261 = vld [vmem:[%s1 + $0x3a4] sm:$0xff]
  %v1262 = vld [vmem:[%s1 + $0x3cc] sm:$0xff]
  %v1263 = vld [vmem:[%s1 + $0x3d4] sm:$0xff]
  %v1264 = vld [vmem:[%s1 + $0x3fc] sm:$0xff]
  %v1265 = vld [vmem:[%s1 + $0x404] sm:$0xff]
  %v1266 = vld [vmem:[%s1 + $0x42c] sm:$0xff]
  %v1267 = vld [vmem:[%s1 + $0x434] sm:$0xff]
  %v1268 = vld [vmem:[%s1 + $0x45c] sm:$0xff]
  %v1269 = vld [vmem:[%s1 + $0x464] sm:$0xff]
  %v1270 = vld [vmem:[%s1 + $0x48c] sm:$0xff]
  %v1271 = vld [vmem:[%s1 + $0x494] sm:$0xff]
  %v1272 = vld [vmem:[%s1 + $0x4bc] sm:$0xff]
  %v1273 = vld [vmem:[%s1 + $0x4c4] sm:$0xff]
  %v1274 = vld [vmem:[%s1 + $0x4ec] sm:$0xff]
  %v1275 = vld [vmem:[%s1 + $0x4f4] sm:$0xff]
  %v1276 = vld [vmem:[%s1 + $0x51c] sm:$0xff]
  %v1277 = vld [vmem:[%s1 + $0x524] sm:$0xff]
  %v1278 = vld [vmem:[%s1 + $0x54c] sm:$0xff]
  %v1279 = vld [vmem:[%s1 + $0x554] sm:$0xff]
  %v1280 = vld [vmem:[%s1 + $0x57c] sm:$0xff]
  %v1281 = vld [vmem:[%s1 + $0x584] sm:$0xff]
  %v1282 = vld [vmem:[%s1 + $0x5ac] sm:$0xff]
  %v1283 = vld [vmem:[%s1 + $0x5b4] sm:$0xff]
  %v1284 = vld [vmem:[%s1 + $0x5dc] sm:$0xff]
  %v1285 = vld [vmem:[%s1 + $0x5e4] sm:$0xff]
  %v1286 = vld [vmem:[%s1 + $0x60c] sm:$0xff]
  %v1287 = vld [vmem:[%s1 + $0x614] sm:$0xff]
  %v1288 = vld [vmem:[%s1 + $0x63c] sm:$0xff]
  %v1289 = vld [vmem:[%s1 + $0x644] sm:$0xff]
  %v1290 = vld [vmem:[%s1 + $0x66c] sm:$0xff]
  %v1291 = vld [vmem:[%s1 + $0x674] sm:$0xff]
  %v1292 = vld [vmem:[%s1 + $0x69c] sm:$0xff]
  %v1293 = vld [vmem:[%s1 + $0x6a4] sm:$0xff]
  %v1294 = vld [vmem:[%s1 + $0x6cc] sm:$0xff]
  %v1295 = vld [vmem:[%s1 + $0x6d4] sm:$0xff]
  %v1296 = vld [vmem:[%s1 + $0x6fc] sm:$0x33]
  %v1297 = vld [vmem:[%s1 + $0x704] sm:$0x33]
  %v1374 = vunpack.c.l.b16 %v1222
  %v1375 = vunpack.c.h.b16 %v1222
  %v1376 = vunpack.c.l.b16 %v1223
  %v1377 = vunpack.c.h.b16 %v1223
  %v1378 = vunpack.c.l.b16 %v1224
  %v1379 = vunpack.c.h.b16 %v1224
  %v1380 = vunpack.c.l.b16 %v1225
  %v1381 = vunpack.c.h.b16 %v1225
  %v1382 = vunpack.c.l.b16 %v1226
  %v1383 = vunpack.c.h.b16 %v1226
  %v1384 = vunpack.c.l.b16 %v1227
  %v1385 = vunpack.c.h.b16 %v1227
  %v1386 = vunpack.c.l.b16 %v1228
  %v1387 = vunpack.c.h.b16 %v1228
  %v1388 = vunpack.c.l.b16 %v1229
  %v1389 = vunpack.c.h.b16 %v1229
  %v1390 = vunpack.c.l.b16 %v1230
  %v1391 = vunpack.c.h.b16 %v1230
  %v1392 = vunpack.c.l.b16 %v1231
  %v1393 = vunpack.c.h.b16 %v1231
  %v1394 = vunpack.c.l.b16 %v1232
  %v1395 = vunpack.c.h.b16 %v1232
  %v1396 = vunpack.c.l.b16 %v1233
  %v1397 = vunpack.c.h.b16 %v1233
  %v1398 = vunpack.c.l.b16 %v1234
  %v1399 = vunpack.c.h.b16 %v1234
  %v1400 = vunpack.c.l.b16 %v1235
  %v1401 = vunpack.c.h.b16 %v1235
  %v1402 = vunpack.c.l.b16 %v1236
  %v1403 = vunpack.c.h.b16 %v1236
  %v1404 = vunpack.c.l.b16 %v1237
  %v1405 = vunpack.c.h.b16 %v1237
  %v1406 = vunpack.c.l.b16 %v1238
  %v1407 = vunpack.c.h.b16 %v1238
  %v1408 = vunpack.c.l.b16 %v1239
  %v1409 = vunpack.c.h.b16 %v1239
  %v1410 = vunpack.c.l.b16 %v1240
  %v1411 = vunpack.c.h.b16 %v1240
  %v1412 = vunpack.c.l.b16 %v1241
  %v1413 = vunpack.c.h.b16 %v1241
  %v1414 = vunpack.c.l.b16 %v1242
  %v1415 = vunpack.c.h.b16 %v1242
  %v1416 = vunpack.c.l.b16 %v1243
  %v1417 = vunpack.c.h.b16 %v1243
  %v1418 = vunpack.c.l.b16 %v1244
  %v1419 = vunpack.c.h.b16 %v1244
  %v1420 = vunpack.c.l.b16 %v1245
  %v1421 = vunpack.c.h.b16 %v1245
  %v1422 = vunpack.c.l.b16 %v1246
  %v1423 = vunpack.c.h.b16 %v1246
  %v1424 = vunpack.c.l.b16 %v1247
  %v1425 = vunpack.c.h.b16 %v1247
  %v1426 = vunpack.c.l.b16 %v1248
  %v1427 = vunpack.c.h.b16 %v1248
  %v1428 = vunpack.c.l.b16 %v1249
  %v1429 = vunpack.c.h.b16 %v1249
  %v1430 = vunpack.c.l.b16 %v1250
  %v1431 = vunpack.c.h.b16 %v1250
  %v1432 = vunpack.c.l.b16 %v1251
  %v1433 = vunpack.c.h.b16 %v1251
  %v1434 = vunpack.c.l.b16 %v1252
  %v1435 = vunpack.c.h.b16 %v1252
  %v1436 = vunpack.c.l.b16 %v1253
  %v1437 = vunpack.c.h.b16 %v1253
  %v1438 = vunpack.c.l.b16 %v1254
  %v1439 = vunpack.c.h.b16 %v1254
  %v1440 = vunpack.c.l.b16 %v1255
  %v1441 = vunpack.c.h.b16 %v1255
  %v1442 = vunpack.c.l.b16 %v1256
  %v1443 = vunpack.c.h.b16 %v1256
  %v1444 = vunpack.c.l.b16 %v1257
  %v1445 = vunpack.c.h.b16 %v1257
  %v1446 = vunpack.c.l.b16 %v1258
  %v1447 = vunpack.c.h.b16 %v1258
  %v1448 = vunpack.c.l.b16 %v1259
  %v1449 = vunpack.c.h.b16 %v1259
  %v1450 = vunpack.c.l.b16 %v1260
  %v1451 = vunpack.c.h.b16 %v1260
  %v1452 = vunpack.c.l.b16 %v1261
  %v1453 = vunpack.c.h.b16 %v1261
  %v1454 = vunpack.c.l.b16 %v1262
  %v1455 = vunpack.c.h.b16 %v1262
  %v1456 = vunpack.c.l.b16 %v1263
  %v1457 = vunpack.c.h.b16 %v1263
  %v1458 = vunpack.c.l.b16 %v1264
  %v1459 = vunpack.c.h.b16 %v1264
  %v1460 = vunpack.c.l.b16 %v1265
  %v1461 = vunpack.c.h.b16 %v1265
  %v1462 = vunpack.c.l.b16 %v1266
  %v1463 = vunpack.c.h.b16 %v1266
  %v1464 = vunpack.c.l.b16 %v1267
  %v1465 = vunpack.c.h.b16 %v1267
  %v1466 = vunpack.c.l.b16 %v1268
  %v1467 = vunpack.c.h.b16 %v1268
  %v1468 = vunpack.c.l.b16 %v1269
  %v1469 = vunpack.c.h.b16 %v1269
  %v1470 = vunpack.c.l.b16 %v1270
  %v1471 = vunpack.c.h.b16 %v1270
  %v1472 = vunpack.c.l.b16 %v1271
  %v1473 = vunpack.c.h.b16 %v1271
  %v1474 = vunpack.c.l.b16 %v1272
  %v1475 = vunpack.c.h.b16 %v1272
  %v1476 = vunpack.c.l.b16 %v1273
  %v1477 = vunpack.c.h.b16 %v1273
  %v1478 = vunpack.c.l.b16 %v1274
  %v1479 = vunpack.c.h.b16 %v1274
  %v1480 = vunpack.c.l.b16 %v1275
  %v1481 = vunpack.c.h.b16 %v1275
  %v1482 = vunpack.c.l.b16 %v1276
  %v1483 = vunpack.c.h.b16 %v1276
  %v1484 = vunpack.c.l.b16 %v1277
  %v1485 = vunpack.c.h.b16 %v1277
  %v1486 = vunpack.c.l.b16 %v1278
  %v1487 = vunpack.c.h.b16 %v1278
  %v1488 = vunpack.c.l.b16 %v1279
  %v1489 = vunpack.c.h.b16 %v1279
  %v1490 = vunpack.c.l.b16 %v1280
  %v1491 = vunpack.c.h.b16 %v1280
  %v1492 = vunpack.c.l.b16 %v1281
  %v1493 = vunpack.c.h.b16 %v1281
  %v1494 = vunpack.c.l.b16 %v1282
  %v1495 = vunpack.c.h.b16 %v1282
  %v1496 = vunpack.c.l.b16 %v1283
  %v1497 = vunpack.c.h.b16 %v1283
  %v1498 = vunpack.c.l.b16 %v1284
  %v1499 = vunpack.c.h.b16 %v1284
  %v1500 = vunpack.c.l.b16 %v1285
  %v1501 = vunpack.c.h.b16 %v1285
  %v1502 = vunpack.c.l.b16 %v1286
  %v1503 = vunpack.c.h.b16 %v1286
  %v1504 = vunpack.c.l.b16 %v1287
  %v1505 = vunpack.c.h.b16 %v1287
  %v1506 = vunpack.c.l.b16 %v1288
  %v1507 = vunpack.c.h.b16 %v1288
  %v1508 = vunpack.c.l.b16 %v1289
  %v1509 = vunpack.c.h.b16 %v1289
  %v1510 = vunpack.c.l.b16 %v1290
  %v1511 = vunpack.c.h.b16 %v1290
  %v1512 = vunpack.c.l.b16 %v1291
  %v1513 = vunpack.c.h.b16 %v1291
  %v1514 = vunpack.c.l.b16 %v1292
  %v1515 = vunpack.c.h.b16 %v1292
  %v1516 = vunpack.c.l.b16 %v1293
  %v1517 = vunpack.c.h.b16 %v1293
  %v1518 = vunpack.c.l.b16 %v1294
  %v1519 = vunpack.c.h.b16 %v1294
  %v1520 = vunpack.c.l.b16 %v1295
  %v1521 = vunpack.c.h.b16 %v1295
  %v1522 = vunpack.c.l.b16 %v1296
  %v1523 = vunpack.c.h.b16 %v1296
  %v1524 = vunpack.c.l.b16 %v1297
  %v1525 = vunpack.c.h.b16 %v1297
  %v1526 = vpack.c.b16 %v1378, %v1374
  %v1527 = vpack.c.b16 %v1379, %v1375
  %v1528 = vpack.c.b16 %v1380, %v1376
  %v1529 = vpack.c.b16 %v1381, %v1377
  %v1530 = vpack.c.b16 %v1386, %v1382
  %v1531 = vpack.c.b16 %v1387, %v1383
  %v1532 = vpack.c.b16 %v1388, %v1384
  %v1533 = vpack.c.b16 %v1389, %v1385
  %v1534 = vpack.c.b16 %v1394, %v1390
  %v1535 = vpack.c.b16 %v1395, %v1391
  %v1536 = vpack.c.b16 %v1396, %v1392
  %v1537 = vpack.c.b16 %v1397, %v1393
  %v1538 = vpack.c.b16 %v1402, %v1398
  %v1539 = vpack.c.b16 %v1403, %v1399
  %v1540 = vpack.c.b16 %v1404, %v1400
  %v1541 = vpack.c.b16 %v1405, %v1401
  %v1542 = vpack.c.b16 %v1410, %v1406
  %v1543 = vpack.c.b16 %v1411, %v1407
  %v1544 = vpack.c.b16 %v1412, %v1408
  %v1545 = vpack.c.b16 %v1413, %v1409
  %v1546 = vpack.c.b16 %v1418, %v1414
  %v1547 = vpack.c.b16 %v1419, %v1415
  %v1548 = vpack.c.b16 %v1420, %v1416
  %v1549 = vpack.c.b16 %v1421, %v1417
  %v1550 = vpack.c.b16 %v1426, %v1422
  %v1551 = vpack.c.b16 %v1427, %v1423
  %v1552 = vpack.c.b16 %v1428, %v1424
  %v1553 = vpack.c.b16 %v1429, %v1425
  %v1554 = vpack.c.b16 %v1434, %v1430
  %v1555 = vpack.c.b16 %v1435, %v1431
  %v1556 = vpack.c.b16 %v1436, %v1432
  %v1557 = vpack.c.b16 %v1437, %v1433
  %v1558 = vpack.c.b16 %v1442, %v1438
  %v1559 = vpack.c.b16 %v1443, %v1439
  %v1560 = vpack.c.b16 %v1444, %v1440
  %v1561 = vpack.c.b16 %v1445, %v1441
  %v1562 = vpack.c.b16 %v1450, %v1446
  %v1563 = vpack.c.b16 %v1451, %v1447
  %v1564 = vpack.c.b16 %v1452, %v1448
  %v1565 = vpack.c.b16 %v1453, %v1449
  %v1566 = vpack.c.b16 %v1458, %v1454
  %v1567 = vpack.c.b16 %v1459, %v1455
  %v1568 = vpack.c.b16 %v1460, %v1456
  %v1569 = vpack.c.b16 %v1461, %v1457
  %v1570 = vpack.c.b16 %v1466, %v1462
  %v1571 = vpack.c.b16 %v1467, %v1463
  %v1572 = vpack.c.b16 %v1468, %v1464
  %v1573 = vpack.c.b16 %v1469, %v1465
  %v1574 = vpack.c.b16 %v1474, %v1470
  %v1575 = vpack.c.b16 %v1475, %v1471
  %v1576 = vpack.c.b16 %v1476, %v1472
  %v1577 = vpack.c.b16 %v1477, %v1473
  %v1578 = vpack.c.b16 %v1482, %v1478
  %v1579 = vpack.c.b16 %v1483, %v1479
  %v1580 = vpack.c.b16 %v1484, %v1480
  %v1581 = vpack.c.b16 %v1485, %v1481
  %v1582 = vpack.c.b16 %v1490, %v1486
  %v1583 = vpack.c.b16 %v1491, %v1487
  %v1584 = vpack.c.b16 %v1492, %v1488
  %v1585 = vpack.c.b16 %v1493, %v1489
  %v1586 = vpack.c.b16 %v1498, %v1494
  %v1587 = vpack.c.b16 %v1499, %v1495
  %v1588 = vpack.c.b16 %v1500, %v1496
  %v1589 = vpack.c.b16 %v1501, %v1497
  %v1590 = vpack.c.b16 %v1506, %v1502
  %v1591 = vpack.c.b16 %v1507, %v1503
  %v1592 = vpack.c.b16 %v1508, %v1504
  %v1593 = vpack.c.b16 %v1509, %v1505
  %v1594 = vpack.c.b16 %v1514, %v1510
  %v1595 = vpack.c.b16 %v1515, %v1511
  %v1596 = vpack.c.b16 %v1516, %v1512
  %v1597 = vpack.c.b16 %v1517, %v1513
  %v1598 = vpack.c.b16 %v1522, %v1518
  %v1599 = vpack.c.b16 %v1523, %v1519
  %v1600 = vpack.c.b16 %v1524, %v1520
  %v1601 = vpack.c.b16 %v1525, %v1521
  %v1675 = vsel %vm579, %v1598, 0
  %v1678 = vsel %vm579, %v1599, 0
  %v1681 = vsel %vm579, %v1600, 0
  %v1684 = vsel %vm579, %v1601, 0
  %1686 = vmatprep.subr.bf16.mxu0 %v1555
  %1687 = vmatpush1.bf16.msra.mxu0 %v1554
  %1688 = vmatprep.subr.bf16.mxu0 %v1551
  %1689 = vmatpush1.bf16.msra.mxu0 %v1550
  %1690 = vmatprep.subr.bf16.mxu0 %v1547
  %1691 = vmatpush1.bf16.msra.mxu0 %v1546
  %1692 = vmatprep.subr.bf16.mxu0 %v1543
  %1693 = vmatpush1.bf16.msra.mxu0 %v1542
  %1694 = vmatprep.subr.bf16.mxu0 %v1539
  %1695 = vmatpush1.bf16.msra.mxu0 %v1538
  %1696 = vmatprep.subr.bf16.mxu0 %v1535
  %1697 = vmatpush1.bf16.msra.mxu0 %v1534
  %1698 = vmatprep.subr.bf16.mxu0 %v1531
  %1699 = vmatpush1.bf16.msra.mxu0 %v1530
  %1700 = vmatprep.subr.bf16.mxu0 %v1527
  %1701 = vmatpush1.bf16.msra.mxu0 %v1526
  %1702 = vmatprep.subr.bf16.mxu0 %v1587
  %1703 = vmatpush2.bf16.msra.mxu0 %v1586
  %1704 = vmatprep.subr.bf16.mxu0 %v1583
  %1705 = vmatpush2.bf16.msra.mxu0 %v1582
  %1706 = vmatprep.subr.bf16.mxu0 %v1579
  %1707 = vmatpush2.bf16.msra.mxu0 %v1578
  %1708 = vmatprep.subr.bf16.mxu0 %v1575
  %1709 = vmatpush2.bf16.msra.mxu0 %v1574
  %1710 = vmatprep.subr.bf16.mxu0 %v1571
  %1711 = vmatpush2.bf16.msra.mxu0 %v1570
  %1712 = vmatprep.subr.bf16.mxu0 %v1567
  %1713 = vmatpush2.bf16.msra.mxu0 %v1566
  %1714 = vmatprep.subr.bf16.mxu0 %v1563
  %1715 = vmatpush2.bf16.msra.mxu0 %v1562
  %1716 = vmatprep.subr.bf16.mxu0 %v1559
  %1717 = vmatpush2.bf16.msra.mxu0 %v1558
  %1718 = vmatprep.mubr.bf16.mxu0 %v214
  %1719 = vmatmul.mubr.bf16.gmra.mxu0 %v213
  %v1720 = vpop.f32.mrf.mxu0
  %v1721 = vadd.f32 0.0, %v1720
  %v1722 = vpop.f32.mrf.mxu0
  %v1723 = vadd.f32 0.0, %v1722
  %v1724 = vpop.f32.mrf.mxu0
  %v1725 = vadd.f32 0.0, %v1724
  %v1726 = vpop.f32.mrf.mxu0
  %v1727 = vadd.f32 0.0, %v1726
  %1728 = vmatprep.mubr.bf16.mxu0 %v217
  %1729 = vmatmul.mubr.bf16.gmra.mxu0 %v216
  %v1730 = vpop.f32.mrf.mxu0
  %v1731 = vadd.f32 0.0, %v1730
  %v1732 = vpop.f32.mrf.mxu0
  %v1733 = vadd.f32 0.0, %v1732
  %v1734 = vpop.f32.mrf.mxu0
  %v1735 = vadd.f32 0.0, %v1734
  %v1736 = vpop.f32.mrf.mxu0
  %v1737 = vadd.f32 0.0, %v1736
  %1738 = vmatprep.mubr.bf16.mxu0 %v220
  %1739 = vmatmul.mubr.bf16.gmra.mxu0 %v219
  %v1740 = vpop.f32.mrf.mxu0
  %v1741 = vadd.f32 0.0, %v1740
  %v1742 = vpop.f32.mrf.mxu0
  %v1743 = vadd.f32 0.0, %v1742
  %v1744 = vpop.f32.mrf.mxu0
  %v1745 = vadd.f32 0.0, %v1744
  %v1746 = vpop.f32.mrf.mxu0
  %v1747 = vadd.f32 0.0, %v1746
  %1748 = vmatprep.mubr.bf16.mxu0 %v223
  %1749 = vmatmul.mubr.bf16.gmra.mxu0 %v222
  %v1750 = vpop.f32.mrf.mxu0
  %v1751 = vadd.f32 0.0, %v1750
  %v1752 = vpop.f32.mrf.mxu0
  %v1753 = vadd.f32 0.0, %v1752
  %v1754 = vpop.f32.mrf.mxu0
  %v1755 = vadd.f32 0.0, %v1754
  %v1756 = vpop.f32.mrf.mxu0
  %v1757 = vadd.f32 0.0, %v1756
  %1758 = vmatprep.mubr.bf16.mxu0 %v226
  %1759 = vmatmul.mubr.bf16.gmra.mxu0 %v225
  %v1760 = vpop.f32.mrf.mxu0
  %v1761 = vadd.f32 0.0, %v1760
  %v1762 = vpop.f32.mrf.mxu0
  %v1763 = vadd.f32 0.0, %v1762
  %v1764 = vpop.f32.mrf.mxu0
  %v1765 = vadd.f32 0.0, %v1764
  %v1766 = vpop.f32.mrf.mxu0
  %v1767 = vadd.f32 0.0, %v1766
  %1768 = vmatprep.mubr.bf16.mxu0 %v229
  %1769 = vmatmul.mubr.bf16.gmra.mxu0 %v228
  %v1770 = vpop.f32.mrf.mxu0
  %v1771 = vadd.f32 0.0, %v1770
  %v1772 = vpop.f32.mrf.mxu0
  %v1773 = vadd.f32 0.0, %v1772
  %v1774 = vpop.f32.mrf.mxu0
  %v1775 = vadd.f32 0.0, %v1774
  %v1776 = vpop.f32.mrf.mxu0
  %v1777 = vadd.f32 0.0, %v1776
  %1778 = vmatprep.mubr.bf16.mxu0 %v232
  %1779 = vmatmul.mubr.bf16.gmra.mxu0 %v231
  %v1780 = vpop.f32.mrf.mxu0
  %v1781 = vadd.f32 0.0, %v1780
  %v1782 = vpop.f32.mrf.mxu0
  %v1783 = vadd.f32 0.0, %v1782
  %v1784 = vpop.f32.mrf.mxu0
  %v1785 = vadd.f32 0.0, %v1784
  %v1786 = vpop.f32.mrf.mxu0
  %v1787 = vadd.f32 0.0, %v1786
  %1788 = vmatprep.mubr.bf16.mxu0 %v235
  %1789 = vmatmul.mubr.bf16.gmra.mxu0 %v234
  %v1790 = vpop.f32.mrf.mxu0
  %v1791 = vadd.f32 0.0, %v1790
  %v1792 = vpop.f32.mrf.mxu0
  %v1793 = vadd.f32 0.0, %v1792
  %v1794 = vpop.f32.mrf.mxu0
  %v1795 = vadd.f32 0.0, %v1794
  %v1796 = vpop.f32.mrf.mxu0
  %v1797 = vadd.f32 0.0, %v1796
  %1798 = vdwg.mxu0
  %1799 = vmatprep.subr.bf16.mxu0 0
  %1800 = vmatpush1.bf16.msra.mxu0 0
  %1801 = vmatprep.subr.bf16.mxu0 0
  %1802 = vmatpush1.bf16.msra.mxu0 0
  %1803 = vmatprep.subr.bf16.mxu0 0
  %1804 = vmatpush1.bf16.msra.mxu0 0
  %1805 = vmatprep.subr.bf16.mxu0 0
  %1806 = vmatpush1.bf16.msra.mxu0 0
  %1807 = vmatprep.subr.bf16.mxu0 0
  %1808 = vmatpush1.bf16.msra.mxu0 0
  %1809 = vmatprep.subr.bf16.mxu0 %v1678
  %1810 = vmatpush1.bf16.msra.mxu0 %v1675
  %1811 = vmatprep.subr.bf16.mxu0 %v1595
  %1812 = vmatpush1.bf16.msra.mxu0 %v1594
  %1813 = vmatprep.subr.bf16.mxu0 %v1591
  %1814 = vmatpush1.bf16.msra.mxu0 %v1590
  %1815 = vmatprep.subr.bf16.mxu0 0
  %1816 = vmatpush2.bf16.msra.mxu0 0
  %1817 = vmatprep.subr.bf16.mxu0 0
  %1818 = vmatpush2.bf16.msra.mxu0 0
  %1819 = vmatprep.subr.bf16.mxu0 0
  %1820 = vmatpush2.bf16.msra.mxu0 0
  %1821 = vmatprep.subr.bf16.mxu0 0
  %1822 = vmatpush2.bf16.msra.mxu0 0
  %1823 = vmatprep.subr.bf16.mxu0 0
  %1824 = vmatpush2.bf16.msra.mxu0 0
  %1825 = vmatprep.subr.bf16.mxu0 0
  %1826 = vmatpush2.bf16.msra.mxu0 0
  %1827 = vmatprep.subr.bf16.mxu0 0
  %1828 = vmatpush2.bf16.msra.mxu0 0
  %1829 = vmatprep.subr.bf16.mxu0 0
  %1830 = vmatpush2.bf16.msra.mxu0 0
  %1831 = vmatprep.mubr.bf16.mxu0 0
  %1832 = vmatmul.mubr.bf16.gmra.mxu0 %v556
  %v1833 = vpop.f32.mrf.mxu0
  %v1834 = vadd.f32 %v1721, %v1833
  %v1835 = vpop.f32.mrf.mxu0
  %v1836 = vadd.f32 %v1723, %v1835
  %v1837 = vpop.f32.mrf.mxu0
  %v1838 = vadd.f32 %v1725, %v1837
  %v1839 = vpop.f32.mrf.mxu0
  %v1840 = vadd.f32 %v1727, %v1839
  %1841 = vmatprep.mubr.bf16.mxu0 0
  %1842 = vmatmul.mubr.bf16.gmra.mxu0 %v559
  %v1843 = vpop.f32.mrf.mxu0
  %v1844 = vadd.f32 %v1731, %v1843
  %v1845 = vpop.f32.mrf.mxu0
  %v1846 = vadd.f32 %v1733, %v1845
  %v1847 = vpop.f32.mrf.mxu0
  %v1848 = vadd.f32 %v1735, %v1847
  %v1849 = vpop.f32.mrf.mxu0
  %v1850 = vadd.f32 %v1737, %v1849
  %1851 = vmatprep.mubr.bf16.mxu0 0
  %1852 = vmatmul.mubr.bf16.gmra.mxu0 %v562
  %v1853 = vpop.f32.mrf.mxu0
  %v1854 = vadd.f32 %v1741, %v1853
  %v1855 = vpop.f32.mrf.mxu0
  %v1856 = vadd.f32 %v1743, %v1855
  %v1857 = vpop.f32.mrf.mxu0
  %v1858 = vadd.f32 %v1745, %v1857
  %v1859 = vpop.f32.mrf.mxu0
  %v1860 = vadd.f32 %v1747, %v1859
  %1861 = vmatprep.mubr.bf16.mxu0 0
  %1862 = vmatmul.mubr.bf16.gmra.mxu0 %v565
  %v1863 = vpop.f32.mrf.mxu0
  %v1864 = vadd.f32 %v1751, %v1863
  %v1865 = vpop.f32.mrf.mxu0
  %v1866 = vadd.f32 %v1753, %v1865
  %v1867 = vpop.f32.mrf.mxu0
  %v1868 = vadd.f32 %v1755, %v1867
  %v1869 = vpop.f32.mrf.mxu0
  %v1870 = vadd.f32 %v1757, %v1869
  %1871 = vmatprep.mubr.bf16.mxu0 0
  %1872 = vmatmul.mubr.bf16.gmra.mxu0 %v568
  %v1873 = vpop.f32.mrf.mxu0
  %v1874 = vadd.f32 %v1761, %v1873
  %v1875 = vpop.f32.mrf.mxu0
  %v1876 = vadd.f32 %v1763, %v1875
  %v1877 = vpop.f32.mrf.mxu0
  %v1878 = vadd.f32 %v1765, %v1877
  %v1879 = vpop.f32.mrf.mxu0
  %v1880 = vadd.f32 %v1767, %v1879
  %1881 = vmatprep.mubr.bf16.mxu0 0
  %1882 = vmatmul.mubr.bf16.gmra.mxu0 %v571
  %v1883 = vpop.f32.mrf.mxu0
  %v1884 = vadd.f32 %v1771, %v1883
  %v1885 = vpop.f32.mrf.mxu0
  %v1886 = vadd.f32 %v1773, %v1885
  %v1887 = vpop.f32.mrf.mxu0
  %v1888 = vadd.f32 %v1775, %v1887
  %v1889 = vpop.f32.mrf.mxu0
  %v1890 = vadd.f32 %v1777, %v1889
  %1891 = vmatprep.mubr.bf16.mxu0 0
  %1892 = vmatmul.mubr.bf16.gmra.mxu0 %v574
  %v1893 = vpop.f32.mrf.mxu0
  %v1894 = vadd.f32 %v1781, %v1893
  %v1895 = vpop.f32.mrf.mxu0
  %v1896 = vadd.f32 %v1783, %v1895
  %v1897 = vpop.f32.mrf.mxu0
  %v1898 = vadd.f32 %v1785, %v1897
  %v1899 = vpop.f32.mrf.mxu0
  %v1900 = vadd.f32 %v1787, %v1899
  %1901 = vmatprep.mubr.bf16.mxu0 0
  %1902 = vmatmul.mubr.bf16.gmra.mxu0 %v577
  %v1903 = vpop.f32.mrf.mxu0
  %v1904 = vadd.f32 %v1791, %v1903
  %v1905 = vpop.f32.mrf.mxu0
  %v1906 = vadd.f32 %v1793, %v1905
  %v1907 = vpop.f32.mrf.mxu0
  %v1908 = vadd.f32 %v1795, %v1907
  %v1909 = vpop.f32.mrf.mxu0
  %v1910 = vadd.f32 %v1797, %v1909
  %1911 = vdwg.mxu0
  %1912 = vmatprep.subr.bf16.mxu0 %v1557
  %1913 = vmatpush1.bf16.msra.mxu0 %v1556
  %1914 = vmatprep.subr.bf16.mxu0 %v1553
  %1915 = vmatpush1.bf16.msra.mxu0 %v1552
  %1916 = vmatprep.subr.bf16.mxu0 %v1549
  %1917 = vmatpush1.bf16.msra.mxu0 %v1548
  %1918 = vmatprep.subr.bf16.mxu0 %v1545
  %1919 = vmatpush1.bf16.msra.mxu0 %v1544
  %1920 = vmatprep.subr.bf16.mxu0 %v1541
  %1921 = vmatpush1.bf16.msra.mxu0 %v1540
  %1922 = vmatprep.subr.bf16.mxu0 %v1537
  %1923 = vmatpush1.bf16.msra.mxu0 %v1536
  %1924 = vmatprep.subr.bf16.mxu0 %v1533
  %1925 = vmatpush1.bf16.msra.mxu0 %v1532
  %1926 = vmatprep.subr.bf16.mxu0 %v1529
  %1927 = vmatpush1.bf16.msra.mxu0 %v1528
  %1928 = vmatprep.subr.bf16.mxu0 %v1589
  %1929 = vmatpush2.bf16.msra.mxu0 %v1588
  %1930 = vmatprep.subr.bf16.mxu0 %v1585
  %1931 = vmatpush2.bf16.msra.mxu0 %v1584
  %1932 = vmatprep.subr.bf16.mxu0 %v1581
  %1933 = vmatpush2.bf16.msra.mxu0 %v1580
  %1934 = vmatprep.subr.bf16.mxu0 %v1577
  %1935 = vmatpush2.bf16.msra.mxu0 %v1576
  %1936 = vmatprep.subr.bf16.mxu0 %v1573
  %1937 = vmatpush2.bf16.msra.mxu0 %v1572
  %1938 = vmatprep.subr.bf16.mxu0 %v1569
  %1939 = vmatpush2.bf16.msra.mxu0 %v1568
  %1940 = vmatprep.subr.bf16.mxu0 %v1565
  %1941 = vmatpush2.bf16.msra.mxu0 %v1564
  %1942 = vmatprep.subr.bf16.mxu0 %v1561
  %1943 = vmatpush2.bf16.msra.mxu0 %v1560
  %1944 = vmatprep.mubr.bf16.mxu0 %v214
  %1945 = vmatmul.mubr.bf16.gmra.mxu0 %v213
  %v1946 = vpop.f32.mrf.mxu0
  %v1947 = vadd.f32 0.0, %v1946
  %v1948 = vpop.f32.mrf.mxu0
  %v1949 = vadd.f32 0.0, %v1948
  %v1950 = vpop.f32.mrf.mxu0
  %v1951 = vadd.f32 0.0, %v1950
  %v1952 = vpop.f32.mrf.mxu0
  %v1953 = vadd.f32 0.0, %v1952
  %1954 = vmatprep.mubr.bf16.mxu0 %v217
  %1955 = vmatmul.mubr.bf16.gmra.mxu0 %v216
  %v1956 = vpop.f32.mrf.mxu0
  %v1957 = vadd.f32 0.0, %v1956
  %v1958 = vpop.f32.mrf.mxu0
  %v1959 = vadd.f32 0.0, %v1958
  %v1960 = vpop.f32.mrf.mxu0
  %v1961 = vadd.f32 0.0, %v1960
  %v1962 = vpop.f32.mrf.mxu0
  %v1963 = vadd.f32 0.0, %v1962
  %1964 = vmatprep.mubr.bf16.mxu0 %v220
  %1965 = vmatmul.mubr.bf16.gmra.mxu0 %v219
  %v1966 = vpop.f32.mrf.mxu0
  %v1967 = vadd.f32 0.0, %v1966
  %v1968 = vpop.f32.mrf.mxu0
  %v1969 = vadd.f32 0.0, %v1968
  %v1970 = vpop.f32.mrf.mxu0
  %v1971 = vadd.f32 0.0, %v1970
  %v1972 = vpop.f32.mrf.mxu0
  %v1973 = vadd.f32 0.0, %v1972
  %1974 = vmatprep.mubr.bf16.mxu0 %v223
  %1975 = vmatmul.mubr.bf16.gmra.mxu0 %v222
  %v1976 = vpop.f32.mrf.mxu0
  %v1977 = vadd.f32 0.0, %v1976
  %v1978 = vpop.f32.mrf.mxu0
  %v1979 = vadd.f32 0.0, %v1978
  %v1980 = vpop.f32.mrf.mxu0
  %v1981 = vadd.f32 0.0, %v1980
  %v1982 = vpop.f32.mrf.mxu0
  %v1983 = vadd.f32 0.0, %v1982
  %1984 = vmatprep.mubr.bf16.mxu0 %v226
  %1985 = vmatmul.mubr.bf16.gmra.mxu0 %v225
  %v1986 = vpop.f32.mrf.mxu0
  %v1987 = vadd.f32 0.0, %v1986
  %v1988 = vpop.f32.mrf.mxu0
  %v1989 = vadd.f32 0.0, %v1988
  %v1990 = vpop.f32.mrf.mxu0
  %v1991 = vadd.f32 0.0, %v1990
  %v1992 = vpop.f32.mrf.mxu0
  %v1993 = vadd.f32 0.0, %v1992
  %1994 = vmatprep.mubr.bf16.mxu0 %v229
  %1995 = vmatmul.mubr.bf16.gmra.mxu0 %v228
  %v1996 = vpop.f32.mrf.mxu0
  %v1997 = vadd.f32 0.0, %v1996
  %v1998 = vpop.f32.mrf.mxu0
  %v1999 = vadd.f32 0.0, %v1998
  %v2000 = vpop.f32.mrf.mxu0
  %v2001 = vadd.f32 0.0, %v2000
  %v2002 = vpop.f32.mrf.mxu0
  %v2003 = vadd.f32 0.0, %v2002
  %2004 = vmatprep.mubr.bf16.mxu0 %v232
  %2005 = vmatmul.mubr.bf16.gmra.mxu0 %v231
  %v2006 = vpop.f32.mrf.mxu0
  %v2007 = vadd.f32 0.0, %v2006
  %v2008 = vpop.f32.mrf.mxu0
  %v2009 = vadd.f32 0.0, %v2008
  %v2010 = vpop.f32.mrf.mxu0
  %v2011 = vadd.f32 0.0, %v2010
  %v2012 = vpop.f32.mrf.mxu0
  %v2013 = vadd.f32 0.0, %v2012
  %2014 = vmatprep.mubr.bf16.mxu0 %v235
  %2015 = vmatmul.mubr.bf16.gmra.mxu0 %v234
  %v2016 = vpop.f32.mrf.mxu0
  %v2017 = vadd.f32 0.0, %v2016
  %v2018 = vpop.f32.mrf.mxu0
  %v2019 = vadd.f32 0.0, %v2018
  %v2020 = vpop.f32.mrf.mxu0
  %v2021 = vadd.f32 0.0, %v2020
  %v2022 = vpop.f32.mrf.mxu0
  %v2023 = vadd.f32 0.0, %v2022
  %2024 = vdwg.mxu0
  %2025 = vmatprep.subr.bf16.mxu0 0
  %2026 = vmatpush1.bf16.msra.mxu0 0
  %2027 = vmatprep.subr.bf16.mxu0 0
  %2028 = vmatpush1.bf16.msra.mxu0 0
  %2029 = vmatprep.subr.bf16.mxu0 0
  %2030 = vmatpush1.bf16.msra.mxu0 0
  %2031 = vmatprep.subr.bf16.mxu0 0
  %2032 = vmatpush1.bf16.msra.mxu0 0
  %2033 = vmatprep.subr.bf16.mxu0 0
  %2034 = vmatpush1.bf16.msra.mxu0 0
  %2035 = vmatprep.subr.bf16.mxu0 %v1684
  %2036 = vmatpush1.bf16.msra.mxu0 %v1681
  %2037 = vmatprep.subr.bf16.mxu0 %v1597
  %2038 = vmatpush1.bf16.msra.mxu0 %v1596
  %2039 = vmatprep.subr.bf16.mxu0 %v1593
  %2040 = vmatpush1.bf16.msra.mxu0 %v1592
  %2041 = vmatprep.subr.bf16.mxu0 0
  %2042 = vmatpush2.bf16.msra.mxu0 0
  %2043 = vmatprep.subr.bf16.mxu0 0
  %2044 = vmatpush2.bf16.msra.mxu0 0
  %2045 = vmatprep.subr.bf16.mxu0 0
  %2046 = vmatpush2.bf16.msra.mxu0 0
  %2047 = vmatprep.subr.bf16.mxu0 0
  %2048 = vmatpush2.bf16.msra.mxu0 0
  %2049 = vmatprep.subr.bf16.mxu0 0
  %2050 = vmatpush2.bf16.msra.mxu0 0
  %2051 = vmatprep.subr.bf16.mxu0 0
  %2052 = vmatpush2.bf16.msra.mxu0 0
  %2053 = vmatprep.subr.bf16.mxu0 0
  %2054 = vmatpush2.bf16.msra.mxu0 0
  %2055 = vmatprep.subr.bf16.mxu0 0
  %2056 = vmatpush2.bf16.msra.mxu0 0
  %2057 = vmatprep.mubr.bf16.mxu0 0
  %2058 = vmatmul.mubr.bf16.gmra.mxu0 %v556
  %v2059 = vpop.f32.mrf.mxu0
  %v2060 = vadd.f32 %v1947, %v2059
  %v2061 = vpop.f32.mrf.mxu0
  %v2062 = vadd.f32 %v1949, %v2061
  %v2063 = vpop.f32.mrf.mxu0
  %v2064 = vadd.f32 %v1951, %v2063
  %v2065 = vpop.f32.mrf.mxu0
  %v2066 = vadd.f32 %v1953, %v2065
  %2067 = vmatprep.mubr.bf16.mxu0 0
  %2068 = vmatmul.mubr.bf16.gmra.mxu0 %v559
  %v2069 = vpop.f32.mrf.mxu0
  %v2070 = vadd.f32 %v1957, %v2069
  %v2071 = vpop.f32.mrf.mxu0
  %v2072 = vadd.f32 %v1959, %v2071
  %v2073 = vpop.f32.mrf.mxu0
  %v2074 = vadd.f32 %v1961, %v2073
  %v2075 = vpop.f32.mrf.mxu0
  %v2076 = vadd.f32 %v1963, %v2075
  %2077 = vmatprep.mubr.bf16.mxu0 0
  %2078 = vmatmul.mubr.bf16.gmra.mxu0 %v562
  %v2079 = vpop.f32.mrf.mxu0
  %v2080 = vadd.f32 %v1967, %v2079
  %v2081 = vpop.f32.mrf.mxu0
  %v2082 = vadd.f32 %v1969, %v2081
  %v2083 = vpop.f32.mrf.mxu0
  %v2084 = vadd.f32 %v1971, %v2083
  %v2085 = vpop.f32.mrf.mxu0
  %v2086 = vadd.f32 %v1973, %v2085
  %2087 = vmatprep.mubr.bf16.mxu0 0
  %2088 = vmatmul.mubr.bf16.gmra.mxu0 %v565
  %v2089 = vpop.f32.mrf.mxu0
  %v2090 = vadd.f32 %v1977, %v2089
  %v2091 = vpop.f32.mrf.mxu0
  %v2092 = vadd.f32 %v1979, %v2091
  %v2093 = vpop.f32.mrf.mxu0
  %v2094 = vadd.f32 %v1981, %v2093
  %v2095 = vpop.f32.mrf.mxu0
  %v2096 = vadd.f32 %v1983, %v2095
  %2097 = vmatprep.mubr.bf16.mxu0 0
  %2098 = vmatmul.mubr.bf16.gmra.mxu0 %v568
  %v2099 = vpop.f32.mrf.mxu0
  %v2100 = vadd.f32 %v1987, %v2099
  %v2101 = vpop.f32.mrf.mxu0
  %v2102 = vadd.f32 %v1989, %v2101
  %v2103 = vpop.f32.mrf.mxu0
  %v2104 = vadd.f32 %v1991, %v2103
  %v2105 = vpop.f32.mrf.mxu0
  %v2106 = vadd.f32 %v1993, %v2105
  %2107 = vmatprep.mubr.bf16.mxu0 0
  %2108 = vmatmul.mubr.bf16.gmra.mxu0 %v571
  %v2109 = vpop.f32.mrf.mxu0
  %v2110 = vadd.f32 %v1997, %v2109
  %v2111 = vpop.f32.mrf.mxu0
  %v2112 = vadd.f32 %v1999, %v2111
  %v2113 = vpop.f32.mrf.mxu0
  %v2114 = vadd.f32 %v2001, %v2113
  %v2115 = vpop.f32.mrf.mxu0
  %v2116 = vadd.f32 %v2003, %v2115
  %2117 = vmatprep.mubr.bf16.mxu0 0
  %2118 = vmatmul.mubr.bf16.gmra.mxu0 %v574
  %v2119 = vpop.f32.mrf.mxu0
  %v2120 = vadd.f32 %v2007, %v2119
  %v2121 = vpop.f32.mrf.mxu0
  %v2122 = vadd.f32 %v2009, %v2121
  %v2123 = vpop.f32.mrf.mxu0
  %v2124 = vadd.f32 %v2011, %v2123
  %v2125 = vpop.f32.mrf.mxu0
  %v2126 = vadd.f32 %v2013, %v2125
  %2127 = vmatprep.mubr.bf16.mxu0 0
  %2128 = vmatmul.mubr.bf16.gmra.mxu0 %v577
  %v2129 = vpop.f32.mrf.mxu0
  %v2130 = vadd.f32 %v2017, %v2129
  %v2131 = vpop.f32.mrf.mxu0
  %v2132 = vadd.f32 %v2019, %v2131
  %v2133 = vpop.f32.mrf.mxu0
  %v2134 = vadd.f32 %v2021, %v2133
  %v2135 = vpop.f32.mrf.mxu0
  %v2136 = vadd.f32 %v2023, %v2135
  %2137 = vdwg.mxu0
  %v2138 = vrot.slane %v1836, 1
  %v2139 = vrot.slane %v1840, 1
  %v2140 = vrot.slane %v1846, 1
  %v2141 = vrot.slane %v1850, 1
  %v2142 = vrot.slane %v1856, 1
  %v2143 = vrot.slane %v1860, 1
  %v2144 = vrot.slane %v1866, 1
  %v2145 = vrot.slane %v1870, 1
  %v2146 = vrot.slane %v1876, 1
  %v2147 = vrot.slane %v1880, 1
  %v2148 = vrot.slane %v1886, 1
  %v2149 = vrot.slane %v1890, 1
  %v2150 = vrot.slane %v1896, 1
  %v2151 = vrot.slane %v1900, 1
  %v2152 = vrot.slane %v1906, 1
  %v2153 = vrot.slane %v1910, 1
  %v2154 = vsel %vm1025, %v2152, %v2153
  %v2155 = vsel %vm1025, %v2151, %v2152
  %v2156 = vsel %vm1025, %v2150, %v2151
  %v2157 = vsel %vm1025, %v2149, %v2150
  %v2158 = vsel %vm1025, %v2148, %v2149
  %v2159 = vsel %vm1025, %v2147, %v2148
  %v2160 = vsel %vm1025, %v2146, %v2147
  %v2161 = vsel %vm1025, %v2145, %v2146
  %v2162 = vsel %vm1025, %v2144, %v2145
  %v2163 = vsel %vm1025, %v2143, %v2144
  %v2164 = vsel %vm1025, %v2142, %v2143
  %v2165 = vsel %vm1025, %v2141, %v2142
  %v2166 = vsel %vm1025, %v2140, %v2141
  %v2167 = vsel %vm1025, %v2139, %v2140
  %v2168 = vsel %vm1025, %v2138, %v2139
  %v2169 = vsel %vm1025, %v2153, %v2138
  %v2170 = vadd.f32 %v1834, %v2168
  %v2171 = vadd.f32 %v1838, %v2167
  %v2172 = vadd.f32 %v1844, %v2166
  %v2173 = vadd.f32 %v1848, %v2165
  %v2174 = vadd.f32 %v1854, %v2164
  %v2175 = vadd.f32 %v1858, %v2163
  %v2176 = vadd.f32 %v1864, %v2162
  %v2177 = vadd.f32 %v1868, %v2161
  %v2178 = vadd.f32 %v1874, %v2160
  %v2179 = vadd.f32 %v1878, %v2159
  %v2180 = vadd.f32 %v1884, %v2158
  %v2181 = vadd.f32 %v1888, %v2157
  %v2182 = vadd.f32 %v1894, %v2156
  %v2183 = vadd.f32 %v1898, %v2155
  %v2184 = vadd.f32 %v1904, %v2154
  %v2185 = vadd.f32 %v1908, %v2169
  %v2186 = vrot.slane %v2060, 2
  %v2187 = vrot.slane %v2064, 2
  %v2188 = vrot.slane %v2070, 2
  %v2189 = vrot.slane %v2074, 2
  %v2190 = vrot.slane %v2080, 2
  %v2191 = vrot.slane %v2084, 2
  %v2192 = vrot.slane %v2090, 2
  %v2193 = vrot.slane %v2094, 2
  %v2194 = vrot.slane %v2100, 2
  %v2195 = vrot.slane %v2104, 2
  %v2196 = vrot.slane %v2110, 2
  %v2197 = vrot.slane %v2114, 2
  %v2198 = vrot.slane %v2120, 2
  %v2199 = vrot.slane %v2124, 2
  %v2200 = vrot.slane %v2130, 2
  %v2201 = vrot.slane %v2134, 2
  %v2202 = vsel %vm1074, %v2200, %v2201
  %v2203 = vsel %vm1074, %v2199, %v2200
  %v2204 = vsel %vm1074, %v2198, %v2199
  %v2205 = vsel %vm1074, %v2197, %v2198
  %v2206 = vsel %vm1074, %v2196, %v2197
  %v2207 = vsel %vm1074, %v2195, %v2196
  %v2208 = vsel %vm1074, %v2194, %v2195
  %v2209 = vsel %vm1074, %v2193, %v2194
  %v2210 = vsel %vm1074, %v2192, %v2193
  %v2211 = vsel %vm1074, %v2191, %v2192
  %v2212 = vsel %vm1074, %v2190, %v2191
  %v2213 = vsel %vm1074, %v2189, %v2190
  %v2214 = vsel %vm1074, %v2188, %v2189
  %v2215 = vsel %vm1074, %v2187, %v2188
  %v2216 = vsel %vm1074, %v2186, %v2187
  %v2217 = vsel %vm1074, %v2201, %v2186
  %v2218 = vadd.f32 %v2170, %v2216
  %v2219 = vadd.f32 %v2171, %v2215
  %v2220 = vadd.f32 %v2172, %v2214
  %v2221 = vadd.f32 %v2173, %v2213
  %v2222 = vadd.f32 %v2174, %v2212
  %v2223 = vadd.f32 %v2175, %v2211
  %v2224 = vadd.f32 %v2176, %v2210
  %v2225 = vadd.f32 %v2177, %v2209
  %v2226 = vadd.f32 %v2178, %v2208
  %v2227 = vadd.f32 %v2179, %v2207
  %v2228 = vadd.f32 %v2180, %v2206
  %v2229 = vadd.f32 %v2181, %v2205
  %v2230 = vadd.f32 %v2182, %v2204
  %v2231 = vadd.f32 %v2183, %v2203
  %v2232 = vadd.f32 %v2184, %v2202
  %v2233 = vadd.f32 %v2185, %v2217
  %v2234 = vrot.slane %v2062, 3
  %v2235 = vrot.slane %v2066, 3
  %v2236 = vrot.slane %v2072, 3
  %v2237 = vrot.slane %v2076, 3
  %v2238 = vrot.slane %v2082, 3
  %v2239 = vrot.slane %v2086, 3
  %v2240 = vrot.slane %v2092, 3
  %v2241 = vrot.slane %v2096, 3
  %v2242 = vrot.slane %v2102, 3
  %v2243 = vrot.slane %v2106, 3
  %v2244 = vrot.slane %v2112, 3
  %v2245 = vrot.slane %v2116, 3
  %v2246 = vrot.slane %v2122, 3
  %v2247 = vrot.slane %v2126, 3
  %v2248 = vrot.slane %v2132, 3
  %v2249 = vrot.slane %v2136, 3
  %vm2250 = vcmp.lt.s32.totalorder %v55, 5
  %v2251 = vsel %vm2250, %v2248, %v2249
  %v2252 = vsel %vm2250, %v2247, %v2248
  %v2253 = vsel %vm2250, %v2246, %v2247
  %v2254 = vsel %vm2250, %v2245, %v2246
  %v2255 = vsel %vm2250, %v2244, %v2245
  %v2256 = vsel %vm2250, %v2243, %v2244
  %v2257 = vsel %vm2250, %v2242, %v2243
  %v2258 = vsel %vm2250, %v2241, %v2242
  %v2259 = vsel %vm2250, %v2240, %v2241
  %v2260 = vsel %vm2250, %v2239, %v2240
  %v2261 = vsel %vm2250, %v2238, %v2239
  %v2262 = vsel %vm2250, %v2237, %v2238
  %v2263 = vsel %vm2250, %v2236, %v2237
  %v2264 = vsel %vm2250, %v2235, %v2236
  %v2265 = vsel %vm2250, %v2234, %v2235
  %v2266 = vsel %vm2250, %v2249, %v2234
  %v2267 = vadd.f32 %v2218, %v2265
  %v2268 = vadd.f32 %v2219, %v2264
  %v2269 = vadd.f32 %v2220, %v2263
  %v2270 = vadd.f32 %v2221, %v2262
  %v2271 = vadd.f32 %v2222, %v2261
  %v2272 = vadd.f32 %v2223, %v2260
  %v2273 = vadd.f32 %v2224, %v2259
  %v2274 = vadd.f32 %v2225, %v2258
  %v2275 = vadd.f32 %v2226, %v2257
  %v2276 = vadd.f32 %v2227, %v2256
  %v2277 = vadd.f32 %v2228, %v2255
  %v2278 = vadd.f32 %v2229, %v2254
  %v2279 = vadd.f32 %v2230, %v2253
  %v2280 = vadd.f32 %v2231, %v2252
  %v2281 = vadd.f32 %v2232, %v2251
  %v2282 = vadd.f32 %v2233, %v2266
  %v2283 = vld [vmem:[%s2 + $0x1] sm:$0x1]
  %v2284 = vlaneseq
  %v2285 = vshrl.u32 %v2284, 7
  %v2286 = vsub.s32 0, %v2285
  %v2287 = vrot.slane %v2283, %v2286
  %v2288 = vadd.f32 %v2267, %v2287
  %v2289 = vadd.f32 %v2268, %v2287
  %v2290 = vadd.f32 %v2269, %v2287
  %v2291 = vadd.f32 %v2270, %v2287
  %v2292 = vadd.f32 %v2271, %v2287
  %v2293 = vadd.f32 %v2272, %v2287
  %v2294 = vadd.f32 %v2273, %v2287
  %v2295 = vadd.f32 %v2274, %v2287
  %v2296 = vadd.f32 %v2275, %v2287
  %v2297 = vadd.f32 %v2276, %v2287
  %v2298 = vadd.f32 %v2277, %v2287
  %v2299 = vadd.f32 %v2278, %v2287
  %v2300 = vadd.f32 %v2279, %v2287
  %v2301 = vadd.f32 %v2280, %v2287
  %v2302 = vadd.f32 %v2281, %v2287
  %v2303 = vadd.f32 %v2282, %v2287
  %v2304 = vmax.f32 %v2288, 0.0
  %v2305 = vmax.f32 %v2289, 0.0
  %v2306 = vmax.f32 %v2290, 0.0
  %v2307 = vmax.f32 %v2291, 0.0
  %v2308 = vmax.f32 %v2292, 0.0
  %v2309 = vmax.f32 %v2293, 0.0
  %v2310 = vmax.f32 %v2294, 0.0
  %v2311 = vmax.f32 %v2295, 0.0
  %v2312 = vmax.f32 %v2296, 0.0
  %v2313 = vmax.f32 %v2297, 0.0
  %v2314 = vmax.f32 %v2298, 0.0
  %v2315 = vmax.f32 %v2299, 0.0
  %v2316 = vmax.f32 %v2300, 0.0
  %v2317 = vmax.f32 %v2301, 0.0
  %v2318 = vmax.f32 %v2302, 0.0
  %v2319 = vmax.f32 %v2303, 0.0
  %vm2320 = vcmp.lt.s32.totalorder %v55, 13
  %vm2321 = vcmp.lt.s32.totalorder %v56, 13
  %v2322 = vsel %vm2320, 1, 0
  %v2323 = vsel %vm2321, 1, 0
  %vm2324 = vcmp.eq.s32.totalorder %v2322, 1
  %vm2325 = vcmp.eq.s32.totalorder %v2323, 1
  %v2326 = vsel %vm2324, %v2304, 0.0
  %v2327 = vsel %vm2325, %v2305, 0.0
  %v2328 = vsel %vm2324, %v2306, 0.0
  %v2329 = vsel %vm2325, %v2307, 0.0
  %v2330 = vsel %vm2324, %v2308, 0.0
  %v2331 = vsel %vm2325, %v2309, 0.0
  %v2332 = vsel %vm2324, %v2310, 0.0
  %v2333 = vsel %vm2325, %v2311, 0.0
  %v2334 = vsel %vm2324, %v2312, 0.0
  %v2335 = vsel %vm2325, %v2313, 0.0
  %v2336 = vsel %vm2324, %v2314, 0.0
  %v2337 = vsel %vm2325, %v2315, 0.0
  %v2338 = vsel %vm2324, %v2316, 0.0
  %v2339 = vsel %vm2325, %v2317, 0.0
  %v2340 = vsel %vm2324, %v2318, 0.0
  %v2341 = vsel %vm2325, %v2319, 0.0
  %v2342 = vmax.f32 %v2326, %v2327
  %v2343 = vrot.slane %v2342, 4
  %v2344 = vmax.f32 %v2342, %v2343
  %v2345 = vrot.slane %v2344, 2
  %v2346 = vmax.f32 %v2344, %v2345
  %v2347 = vrot.slane %v2346, 1
  %v2348 = vmax.f32 %v2346, %v2347
  %v2349 = vmax.f32 %v2328, %v2329
  %v2350 = vrot.slane %v2349, 4
  %v2351 = vmax.f32 %v2349, %v2350
  %v2352 = vrot.slane %v2351, 2
  %v2353 = vmax.f32 %v2351, %v2352
  %v2354 = vrot.slane %v2353, 1
  %v2355 = vmax.f32 %v2353, %v2354
  %v2356 = vmax.f32 %v2330, %v2331
  %v2357 = vrot.slane %v2356, 4
  %v2358 = vmax.f32 %v2356, %v2357
  %v2359 = vrot.slane %v2358, 2
  %v2360 = vmax.f32 %v2358, %v2359
  %v2361 = vrot.slane %v2360, 1
  %v2362 = vmax.f32 %v2360, %v2361
  %v2363 = vmax.f32 %v2332, %v2333
  %v2364 = vrot.slane %v2363, 4
  %v2365 = vmax.f32 %v2363, %v2364
  %v2366 = vrot.slane %v2365, 2
  %v2367 = vmax.f32 %v2365, %v2366
  %v2368 = vrot.slane %v2367, 1
  %v2369 = vmax.f32 %v2367, %v2368
  %v2370 = vmax.f32 %v2334, %v2335
  %v2371 = vrot.slane %v2370, 4
  %v2372 = vmax.f32 %v2370, %v2371
  %v2373 = vrot.slane %v2372, 2
  %v2374 = vmax.f32 %v2372, %v2373
  %v2375 = vrot.slane %v2374, 1
  %v2376 = vmax.f32 %v2374, %v2375
  %v2377 = vmax.f32 %v2336, %v2337
  %v2378 = vrot.slane %v2377, 4
  %v2379 = vmax.f32 %v2377, %v2378
  %v2380 = vrot.slane %v2379, 2
  %v2381 = vmax.f32 %v2379, %v2380
  %v2382 = vrot.slane %v2381, 1
  %v2383 = vmax.f32 %v2381, %v2382
  %v2384 = vmax.f32 %v2338, %v2339
  %v2385 = vrot.slane %v2384, 4
  %v2386 = vmax.f32 %v2384, %v2385
  %v2387 = vrot.slane %v2386, 2
  %v2388 = vmax.f32 %v2386, %v2387
  %v2389 = vrot.slane %v2388, 1
  %v2390 = vmax.f32 %v2388, %v2389
  %v2391 = vmax.f32 %v2340, %v2341
  %v2392 = vrot.slane %v2391, 4
  %v2393 = vmax.f32 %v2391, %v2392
  %v2394 = vrot.slane %v2393, 2
  %v2395 = vmax.f32 %v2393, %v2394
  %v2396 = vrot.slane %v2395, 1
  %v2397 = vmax.f32 %v2395, %v2396
  %v2398 = vld [vmem:[%s1 + $0x1c] sm:$0xff]
  %v2399 = vld [vmem:[%s1 + $0x24] sm:$0xff]
  %v2400 = vld [vmem:[%s1 + $0x2c] sm:$0xf]
  %v2401 = vld [vmem:[%s1 + $0x4c] sm:$0xff]
  %v2402 = vld [vmem:[%s1 + $0x54] sm:$0xff]
  %v2403 = vld [vmem:[%s1 + $0x5c] sm:$0xf]
  %v2404 = vld [vmem:[%s1 + $0x7c] sm:$0xff]
  %v2405 = vld [vmem:[%s1 + $0x84] sm:$0xff]
  %v2406 = vld [vmem:[%s1 + $0x8c] sm:$0xf]
  %v2407 = vld [vmem:[%s1 + $0xac] sm:$0xff]
  %v2408 = vld [vmem:[%s1 + $0xb4] sm:$0xff]
  %v2409 = vld [vmem:[%s1 + $0xbc] sm:$0xf]
  %v2410 = vld [vmem:[%s1 + $0xdc] sm:$0xff]
  %v2411 = vld [vmem:[%s1 + $0xe4] sm:$0xff]
  %v2412 = vld [vmem:[%s1 + $0xec] sm:$0xf]
  %v2413 = vld [vmem:[%s1 + $0x10c] sm:$0xff]
  %v2414 = vld [vmem:[%s1 + $0x114] sm:$0xff]
  %v2415 = vld [vmem:[%s1 + $0x11c] sm:$0xf]
  %v2416 = vld [vmem:[%s1 + $0x13c] sm:$0xff]
  %v2417 = vld [vmem:[%s1 + $0x144] sm:$0xff]
  %v2418 = vld [vmem:[%s1 + $0x14c] sm:$0xf]
  %v2419 = vld [vmem:[%s1 + $0x16c] sm:$0xff]
  %v2420 = vld [vmem:[%s1 + $0x174] sm:$0xff]
  %v2421 = vld [vmem:[%s1 + $0x17c] sm:$0xf]
  %v2422 = vld [vmem:[%s1 + $0x19c] sm:$0xff]
  %v2423 = vld [vmem:[%s1 + $0x1a4] sm:$0xff]
  %v2424 = vld [vmem:[%s1 + $0x1ac] sm:$0xf]
  %v2425 = vld [vmem:[%s1 + $0x1cc] sm:$0xff]
  %v2426 = vld [vmem:[%s1 + $0x1d4] sm:$0xff]
  %v2427 = vld [vmem:[%s1 + $0x1dc] sm:$0xf]
  %v2428 = vld [vmem:[%s1 + $0x1fc] sm:$0xff]
  %v2429 = vld [vmem:[%s1 + $0x204] sm:$0xff]
  %v2430 = vld [vmem:[%s1 + $0x20c] sm:$0xf]
  %v2431 = vld [vmem:[%s1 + $0x22c] sm:$0xff]
  %v2432 = vld [vmem:[%s1 + $0x234] sm:$0xff]
  %v2433 = vld [vmem:[%s1 + $0x23c] sm:$0xf]
  %v2434 = vld [vmem:[%s1 + $0x25c] sm:$0xff]
  %v2435 = vld [vmem:[%s1 + $0x264] sm:$0xff]
  %v2436 = vld [vmem:[%s1 + $0x26c] sm:$0xf]
  %v2437 = vld [vmem:[%s1 + $0x28c] sm:$0xff]
  %v2438 = vld [vmem:[%s1 + $0x294] sm:$0xff]
  %v2439 = vld [vmem:[%s1 + $0x29c] sm:$0xf]
  %v2440 = vld [vmem:[%s1 + $0x2bc] sm:$0xff]
  %v2441 = vld [vmem:[%s1 + $0x2c4] sm:$0xff]
  %v2442 = vld [vmem:[%s1 + $0x2cc] sm:$0xf]
  %v2443 = vld [vmem:[%s1 + $0x2ec] sm:$0xff]
  %v2444 = vld [vmem:[%s1 + $0x2f4] sm:$0xff]
  %v2445 = vld [vmem:[%s1 + $0x2fc] sm:$0xf]
  %v2446 = vld [vmem:[%s1 + $0x31c] sm:$0xff]
  %v2447 = vld [vmem:[%s1 + $0x324] sm:$0xff]
  %v2448 = vld [vmem:[%s1 + $0x32c] sm:$0xf]
  %v2449 = vld [vmem:[%s1 + $0x34c] sm:$0xff]
  %v2450 = vld [vmem:[%s1 + $0x354] sm:$0xff]
  %v2451 = vld [vmem:[%s1 + $0x35c] sm:$0xf]
  %v2452 = vld [vmem:[%s1 + $0x37c] sm:$0xff]
  %v2453 = vld [vmem:[%s1 + $0x384] sm:$0xff]
  %v2454 = vld [vmem:[%s1 + $0x38c] sm:$0xf]
  %v2455 = vld [vmem:[%s1 + $0x3ac] sm:$0xff]
  %v2456 = vld [vmem:[%s1 + $0x3b4] sm:$0xff]
  %v2457 = vld [vmem:[%s1 + $0x3bc] sm:$0xf]
  %v2458 = vld [vmem:[%s1 + $0x3dc] sm:$0xff]
  %v2459 = vld [vmem:[%s1 + $0x3e4] sm:$0xff]
  %v2460 = vld [vmem:[%s1 + $0x3ec] sm:$0xf]
  %v2461 = vld [vmem:[%s1 + $0x40c] sm:$0xff]
  %v2462 = vld [vmem:[%s1 + $0x414] sm:$0xff]
  %v2463 = vld [vmem:[%s1 + $0x41c] sm:$0xf]
  %v2464 = vld [vmem:[%s1 + $0x43c] sm:$0xff]
  %v2465 = vld [vmem:[%s1 + $0x444] sm:$0xff]
  %v2466 = vld [vmem:[%s1 + $0x44c] sm:$0xf]
  %v2467 = vld [vmem:[%s1 + $0x46c] sm:$0xff]
  %v2468 = vld [vmem:[%s1 + $0x474] sm:$0xff]
  %v2469 = vld [vmem:[%s1 + $0x47c] sm:$0xf]
  %v2470 = vld [vmem:[%s1 + $0x49c] sm:$0xff]
  %v2471 = vld [vmem:[%s1 + $0x4a4] sm:$0xff]
  %v2472 = vld [vmem:[%s1 + $0x4ac] sm:$0xf]
  %v2473 = vld [vmem:[%s1 + $0x4cc] sm:$0xff]
  %v2474 = vld [vmem:[%s1 + $0x4d4] sm:$0xff]
  %v2475 = vld [vmem:[%s1 + $0x4dc] sm:$0xf]
  %v2476 = vld [vmem:[%s1 + $0x4fc] sm:$0xff]
  %v2477 = vld [vmem:[%s1 + $0x504] sm:$0xff]
  %v2478 = vld [vmem:[%s1 + $0x50c] sm:$0xf]
  %v2479 = vld [vmem:[%s1 + $0x52c] sm:$0xff]
  %v2480 = vld [vmem:[%s1 + $0x534] sm:$0xff]
  %v2481 = vld [vmem:[%s1 + $0x53c] sm:$0xf]
  %v2482 = vld [vmem:[%s1 + $0x55c] sm:$0xff]
  %v2483 = vld [vmem:[%s1 + $0x564] sm:$0xff]
  %v2484 = vld [vmem:[%s1 + $0x56c] sm:$0xf]
  %v2485 = vld [vmem:[%s1 + $0x58c] sm:$0xff]
  %v2486 = vld [vmem:[%s1 + $0x594] sm:$0xff]
  %v2487 = vld [vmem:[%s1 + $0x59c] sm:$0xf]
  %v2488 = vld [vmem:[%s1 + $0x5bc] sm:$0xff]
  %v2489 = vld [vmem:[%s1 + $0x5c4] sm:$0xff]
  %v2490 = vld [vmem:[%s1 + $0x5cc] sm:$0xf]
  %v2491 = vld [vmem:[%s1 + $0x5ec] sm:$0xff]
  %v2492 = vld [vmem:[%s1 + $0x5f4] sm:$0xff]
  %v2493 = vld [vmem:[%s1 + $0x5fc] sm:$0xf]
  %v2494 = vld [vmem:[%s1 + $0x61c] sm:$0xff]
  %v2495 = vld [vmem:[%s1 + $0x624] sm:$0xff]
  %v2496 = vld [vmem:[%s1 + $0x62c] sm:$0xf]
  %v2497 = vld [vmem:[%s1 + $0x64c] sm:$0xff]
  %v2498 = vld [vmem:[%s1 + $0x654] sm:$0xff]
  %v2499 = vld [vmem:[%s1 + $0x65c] sm:$0xf]
  %v2500 = vld [vmem:[%s1 + $0x67c] sm:$0xff]
  %v2501 = vld [vmem:[%s1 + $0x684] sm:$0xff]
  %v2502 = vld [vmem:[%s1 + $0x68c] sm:$0xf]
  %v2503 = vld [vmem:[%s1 + $0x6ac] sm:$0xff]
  %v2504 = vld [vmem:[%s1 + $0x6b4] sm:$0xff]
  %v2505 = vld [vmem:[%s1 + $0x6bc] sm:$0xf]
  %v2506 = vld [vmem:[%s1 + $0x6dc] sm:$0xff]
  %v2507 = vld [vmem:[%s1 + $0x6e4] sm:$0xff]
  %v2508 = vld [vmem:[%s1 + $0x6ec] sm:$0xf]
  %v2509 = vld [vmem:[%s1 + $0x70c] sm:$0x33]
  %v2510 = vld [vmem:[%s1 + $0x714] sm:$0x33]
  %v2511 = vld [vmem:[%s1 + $0x71c] sm:$0x3]
  %v2626 = vunpack.c.l.b16 %v2398
  %v2627 = vunpack.c.h.b16 %v2398
  %v2628 = vunpack.c.l.b16 %v2399
  %v2629 = vunpack.c.h.b16 %v2399
  %v2630 = vunpack.c.l.b16 %v2400
  %v2631 = vunpack.c.l.b16 %v2401
  %v2632 = vunpack.c.h.b16 %v2401
  %v2633 = vunpack.c.l.b16 %v2402
  %v2634 = vunpack.c.h.b16 %v2402
  %v2635 = vunpack.c.l.b16 %v2403
  %v2636 = vunpack.c.l.b16 %v2404
  %v2637 = vunpack.c.h.b16 %v2404
  %v2638 = vunpack.c.l.b16 %v2405
  %v2639 = vunpack.c.h.b16 %v2405
  %v2640 = vunpack.c.l.b16 %v2406
  %v2641 = vunpack.c.l.b16 %v2407
  %v2642 = vunpack.c.h.b16 %v2407
  %v2643 = vunpack.c.l.b16 %v2408
  %v2644 = vunpack.c.h.b16 %v2408
  %v2645 = vunpack.c.l.b16 %v2409
  %v2646 = vunpack.c.l.b16 %v2410
  %v2647 = vunpack.c.h.b16 %v2410
  %v2648 = vunpack.c.l.b16 %v2411
  %v2649 = vunpack.c.h.b16 %v2411
  %v2650 = vunpack.c.l.b16 %v2412
  %v2651 = vunpack.c.l.b16 %v2413
  %v2652 = vunpack.c.h.b16 %v2413
  %v2653 = vunpack.c.l.b16 %v2414
  %v2654 = vunpack.c.h.b16 %v2414
  %v2655 = vunpack.c.l.b16 %v2415
  %v2656 = vunpack.c.l.b16 %v2416
  %v2657 = vunpack.c.h.b16 %v2416
  %v2658 = vunpack.c.l.b16 %v2417
  %v2659 = vunpack.c.h.b16 %v2417
  %v2660 = vunpack.c.l.b16 %v2418
  %v2661 = vunpack.c.l.b16 %v2419
  %v2662 = vunpack.c.h.b16 %v2419
  %v2663 = vunpack.c.l.b16 %v2420
  %v2664 = vunpack.c.h.b16 %v2420
  %v2665 = vunpack.c.l.b16 %v2421
  %v2666 = vunpack.c.l.b16 %v2422
  %v2667 = vunpack.c.h.b16 %v2422
  %v2668 = vunpack.c.l.b16 %v2423
  %v2669 = vunpack.c.h.b16 %v2423
  %v2670 = vunpack.c.l.b16 %v2424
  %v2671 = vunpack.c.l.b16 %v2425
  %v2672 = vunpack.c.h.b16 %v2425
  %v2673 = vunpack.c.l.b16 %v2426
  %v2674 = vunpack.c.h.b16 %v2426
  %v2675 = vunpack.c.l.b16 %v2427
  %v2676 = vunpack.c.l.b16 %v2428
  %v2677 = vunpack.c.h.b16 %v2428
  %v2678 = vunpack.c.l.b16 %v2429
  %v2679 = vunpack.c.h.b16 %v2429
  %v2680 = vunpack.c.l.b16 %v2430
  %v2681 = vunpack.c.l.b16 %v2431
  %v2682 = vunpack.c.h.b16 %v2431
  %v2683 = vunpack.c.l.b16 %v2432
  %v2684 = vunpack.c.h.b16 %v2432
  %v2685 = vunpack.c.l.b16 %v2433
  %v2686 = vunpack.c.l.b16 %v2434
  %v2687 = vunpack.c.h.b16 %v2434
  %v2688 = vunpack.c.l.b16 %v2435
  %v2689 = vunpack.c.h.b16 %v2435
  %v2690 = vunpack.c.l.b16 %v2436
  %v2691 = vunpack.c.l.b16 %v2437
  %v2692 = vunpack.c.h.b16 %v2437
  %v2693 = vunpack.c.l.b16 %v2438
  %v2694 = vunpack.c.h.b16 %v2438
  %v2695 = vunpack.c.l.b16 %v2439
  %v2696 = vunpack.c.l.b16 %v2440
  %v2697 = vunpack.c.h.b16 %v2440
  %v2698 = vunpack.c.l.b16 %v2441
  %v2699 = vunpack.c.h.b16 %v2441
  %v2700 = vunpack.c.l.b16 %v2442
  %v2701 = vunpack.c.l.b16 %v2443
  %v2702 = vunpack.c.h.b16 %v2443
  %v2703 = vunpack.c.l.b16 %v2444
  %v2704 = vunpack.c.h.b16 %v2444
  %v2705 = vunpack.c.l.b16 %v2445
  %v2706 = vunpack.c.l.b16 %v2446
  %v2707 = vunpack.c.h.b16 %v2446
  %v2708 = vunpack.c.l.b16 %v2447
  %v2709 = vunpack.c.h.b16 %v2447
  %v2710 = vunpack.c.l.b16 %v2448
  %v2711 = vunpack.c.l.b16 %v2449
  %v2712 = vunpack.c.h.b16 %v2449
  %v2713 = vunpack.c.l.b16 %v2450
  %v2714 = vunpack.c.h.b16 %v2450
  %v2715 = vunpack.c.l.b16 %v2451
  %v2716 = vunpack.c.l.b16 %v2452
  %v2717 = vunpack.c.h.b16 %v2452
  %v2718 = vunpack.c.l.b16 %v2453
  %v2719 = vunpack.c.h.b16 %v2453
  %v2720 = vunpack.c.l.b16 %v2454
  %v2721 = vunpack.c.l.b16 %v2455
  %v2722 = vunpack.c.h.b16 %v2455
  %v2723 = vunpack.c.l.b16 %v2456
  %v2724 = vunpack.c.h.b16 %v2456
  %v2725 = vunpack.c.l.b16 %v2457
  %v2726 = vunpack.c.l.b16 %v2458
  %v2727 = vunpack.c.h.b16 %v2458
  %v2728 = vunpack.c.l.b16 %v2459
  %v2729 = vunpack.c.h.b16 %v2459
  %v2730 = vunpack.c.l.b16 %v2460
  %v2731 = vunpack.c.l.b16 %v2461
  %v2732 = vunpack.c.h.b16 %v2461
  %v2733 = vunpack.c.l.b16 %v2462
  %v2734 = vunpack.c.h.b16 %v2462
  %v2735 = vunpack.c.l.b16 %v2463
  %v2736 = vunpack.c.l.b16 %v2464
  %v2737 = vunpack.c.h.b16 %v2464
  %v2738 = vunpack.c.l.b16 %v2465
  %v2739 = vunpack.c.h.b16 %v2465
  %v2740 = vunpack.c.l.b16 %v2466
  %v2741 = vunpack.c.l.b16 %v2467
  %v2742 = vunpack.c.h.b16 %v2467
  %v2743 = vunpack.c.l.b16 %v2468
  %v2744 = vunpack.c.h.b16 %v2468
  %v2745 = vunpack.c.l.b16 %v2469
  %v2746 = vunpack.c.l.b16 %v2470
  %v2747 = vunpack.c.h.b16 %v2470
  %v2748 = vunpack.c.l.b16 %v2471
  %v2749 = vunpack.c.h.b16 %v2471
  %v2750 = vunpack.c.l.b16 %v2472
  %v2751 = vunpack.c.l.b16 %v2473
  %v2752 = vunpack.c.h.b16 %v2473
  %v2753 = vunpack.c.l.b16 %v2474
  %v2754 = vunpack.c.h.b16 %v2474
  %v2755 = vunpack.c.l.b16 %v2475
  %v2756 = vunpack.c.l.b16 %v2476
  %v2757 = vunpack.c.h.b16 %v2476
  %v2758 = vunpack.c.l.b16 %v2477
  %v2759 = vunpack.c.h.b16 %v2477
  %v2760 = vunpack.c.l.b16 %v2478
  %v2761 = vunpack.c.l.b16 %v2479
  %v2762 = vunpack.c.h.b16 %v2479
  %v2763 = vunpack.c.l.b16 %v2480
  %v2764 = vunpack.c.h.b16 %v2480
  %v2765 = vunpack.c.l.b16 %v2481
  %v2766 = vunpack.c.l.b16 %v2482
  %v2767 = vunpack.c.h.b16 %v2482
  %v2768 = vunpack.c.l.b16 %v2483
  %v2769 = vunpack.c.h.b16 %v2483
  %v2770 = vunpack.c.l.b16 %v2484
  %v2771 = vunpack.c.l.b16 %v2485
  %v2772 = vunpack.c.h.b16 %v2485
  %v2773 = vunpack.c.l.b16 %v2486
  %v2774 = vunpack.c.h.b16 %v2486
  %v2775 = vunpack.c.l.b16 %v2487
  %v2776 = vunpack.c.l.b16 %v2488
  %v2777 = vunpack.c.h.b16 %v2488
  %v2778 = vunpack.c.l.b16 %v2489
  %v2779 = vunpack.c.h.b16 %v2489
  %v2780 = vunpack.c.l.b16 %v2490
  %v2781 = vunpack.c.l.b16 %v2491
  %v2782 = vunpack.c.h.b16 %v2491
  %v2783 = vunpack.c.l.b16 %v2492
  %v2784 = vunpack.c.h.b16 %v2492
  %v2785 = vunpack.c.l.b16 %v2493
  %v2786 = vunpack.c.l.b16 %v2494
  %v2787 = vunpack.c.h.b16 %v2494
  %v2788 = vunpack.c.l.b16 %v2495
  %v2789 = vunpack.c.h.b16 %v2495
  %v2790 = vunpack.c.l.b16 %v2496
  %v2791 = vunpack.c.l.b16 %v2497
  %v2792 = vunpack.c.h.b16 %v2497
  %v2793 = vunpack.c.l.b16 %v2498
  %v2794 = vunpack.c.h.b16 %v2498
  %v2795 = vunpack.c.l.b16 %v2499
  %v2796 = vunpack.c.l.b16 %v2500
  %v2797 = vunpack.c.h.b16 %v2500
  %v2798 = vunpack.c.l.b16 %v2501
  %v2799 = vunpack.c.h.b16 %v2501
  %v2800 = vunpack.c.l.b16 %v2502
  %v2801 = vunpack.c.l.b16 %v2503
  %v2802 = vunpack.c.h.b16 %v2503
  %v2803 = vunpack.c.l.b16 %v2504
  %v2804 = vunpack.c.h.b16 %v2504
  %v2805 = vunpack.c.l.b16 %v2505
  %v2806 = vunpack.c.l.b16 %v2506
  %v2807 = vunpack.c.h.b16 %v2506
  %v2808 = vunpack.c.l.b16 %v2507
  %v2809 = vunpack.c.h.b16 %v2507
  %v2810 = vunpack.c.l.b16 %v2508
  %v2811 = vunpack.c.l.b16 %v2509
  %v2812 = vunpack.c.h.b16 %v2509
  %v2813 = vunpack.c.l.b16 %v2510
  %v2814 = vunpack.c.h.b16 %v2510
  %v2815 = vunpack.c.l.b16 %v2511
  %v2816 = vpack.c.b16 %v2631, %v2626
  %v2817 = vpack.c.b16 %v2632, %v2627
  %v2818 = vpack.c.b16 %v2633, %v2628
  %v2819 = vpack.c.b16 %v2634, %v2629
  %v2820 = vpack.c.b16 %v2635, %v2630
  %v2821 = vpack.c.b16 %v2641, %v2636
  %v2822 = vpack.c.b16 %v2642, %v2637
  %v2823 = vpack.c.b16 %v2643, %v2638
  %v2824 = vpack.c.b16 %v2644, %v2639
  %v2825 = vpack.c.b16 %v2645, %v2640
  %v2826 = vpack.c.b16 %v2651, %v2646
  %v2827 = vpack.c.b16 %v2652, %v2647
  %v2828 = vpack.c.b16 %v2653, %v2648
  %v2829 = vpack.c.b16 %v2654, %v2649
  %v2830 = vpack.c.b16 %v2655, %v2650
  %v2831 = vpack.c.b16 %v2661, %v2656
  %v2832 = vpack.c.b16 %v2662, %v2657
  %v2833 = vpack.c.b16 %v2663, %v2658
  %v2834 = vpack.c.b16 %v2664, %v2659
  %v2835 = vpack.c.b16 %v2665, %v2660
  %v2836 = vpack.c.b16 %v2671, %v2666
  %v2837 = vpack.c.b16 %v2672, %v2667
  %v2838 = vpack.c.b16 %v2673, %v2668
  %v2839 = vpack.c.b16 %v2674, %v2669
  %v2840 = vpack.c.b16 %v2675, %v2670
  %v2841 = vpack.c.b16 %v2681, %v2676
  %v2842 = vpack.c.b16 %v2682, %v2677
  %v2843 = vpack.c.b16 %v2683, %v2678
  %v2844 = vpack.c.b16 %v2684, %v2679
  %v2845 = vpack.c.b16 %v2685, %v2680
  %v2846 = vpack.c.b16 %v2691, %v2686
  %v2847 = vpack.c.b16 %v2692, %v2687
  %v2848 = vpack.c.b16 %v2693, %v2688
  %v2849 = vpack.c.b16 %v2694, %v2689
  %v2850 = vpack.c.b16 %v2695, %v2690
  %v2851 = vpack.c.b16 %v2701, %v2696
  %v2852 = vpack.c.b16 %v2702, %v2697
  %v2853 = vpack.c.b16 %v2703, %v2698
  %v2854 = vpack.c.b16 %v2704, %v2699
  %v2855 = vpack.c.b16 %v2705, %v2700
  %v2856 = vpack.c.b16 %v2711, %v2706
  %v2857 = vpack.c.b16 %v2712, %v2707
  %v2858 = vpack.c.b16 %v2713, %v2708
  %v2859 = vpack.c.b16 %v2714, %v2709
  %v2860 = vpack.c.b16 %v2715, %v2710
  %v2861 = vpack.c.b16 %v2721, %v2716
  %v2862 = vpack.c.b16 %v2722, %v2717
  %v2863 = vpack.c.b16 %v2723, %v2718
  %v2864 = vpack.c.b16 %v2724, %v2719
  %v2865 = vpack.c.b16 %v2725, %v2720
  %v2866 = vpack.c.b16 %v2731, %v2726
  %v2867 = vpack.c.b16 %v2732, %v2727
  %v2868 = vpack.c.b16 %v2733, %v2728
  %v2869 = vpack.c.b16 %v2734, %v2729
  %v2870 = vpack.c.b16 %v2735, %v2730
  %v2871 = vpack.c.b16 %v2741, %v2736
  %v2872 = vpack.c.b16 %v2742, %v2737
  %v2873 = vpack.c.b16 %v2743, %v2738
  %v2874 = vpack.c.b16 %v2744, %v2739
  %v2875 = vpack.c.b16 %v2745, %v2740
  %v2876 = vpack.c.b16 %v2751, %v2746
  %v2877 = vpack.c.b16 %v2752, %v2747
  %v2878 = vpack.c.b16 %v2753, %v2748
  %v2879 = vpack.c.b16 %v2754, %v2749
  %v2880 = vpack.c.b16 %v2755, %v2750
  %v2881 = vpack.c.b16 %v2761, %v2756
  %v2882 = vpack.c.b16 %v2762, %v2757
  %v2883 = vpack.c.b16 %v2763, %v2758
  %v2884 = vpack.c.b16 %v2764, %v2759
  %v2885 = vpack.c.b16 %v2765, %v2760
  %v2886 = vpack.c.b16 %v2771, %v2766
  %v2887 = vpack.c.b16 %v2772, %v2767
  %v2888 = vpack.c.b16 %v2773, %v2768
  %v2889 = vpack.c.b16 %v2774, %v2769
  %v2890 = vpack.c.b16 %v2775, %v2770
  %v2891 = vpack.c.b16 %v2781, %v2776
  %v2892 = vpack.c.b16 %v2782, %v2777
  %v2893 = vpack.c.b16 %v2783, %v2778
  %v2894 = vpack.c.b16 %v2784, %v2779
  %v2895 = vpack.c.b16 %v2785, %v2780
  %v2896 = vpack.c.b16 %v2791, %v2786
  %v2897 = vpack.c.b16 %v2792, %v2787
  %v2898 = vpack.c.b16 %v2793, %v2788
  %v2899 = vpack.c.b16 %v2794, %v2789
  %v2900 = vpack.c.b16 %v2795, %v2790
  %v2901 = vpack.c.b16 %v2801, %v2796
  %v2902 = vpack.c.b16 %v2802, %v2797
  %v2903 = vpack.c.b16 %v2803, %v2798
  %v2904 = vpack.c.b16 %v2804, %v2799
  %v2905 = vpack.c.b16 %v2805, %v2800
  %v2906 = vpack.c.b16 %v2811, %v2806
  %v2907 = vpack.c.b16 %v2812, %v2807
  %v2908 = vpack.c.b16 %v2813, %v2808
  %v2909 = vpack.c.b16 %v2814, %v2809
  %v2910 = vpack.c.b16 %v2815, %v2810
  %v3002 = vsel %vm579, %v2906, 0
  %v3005 = vsel %vm579, %v2907, 0
  %v3008 = vsel %vm579, %v2908, 0
  %v3011 = vsel %vm579, %v2909, 0
  %v3014 = vsel %vm579, %v2910, 0
  %3016 = vmatprep.subr.bf16.mxu0 %v2852
  %3017 = vmatpush1.bf16.msra.mxu0 %v2851
  %3018 = vmatprep.subr.bf16.mxu0 %v2847
  %3019 = vmatpush1.bf16.msra.mxu0 %v2846
  %3020 = vmatprep.subr.bf16.mxu0 %v2842
  %3021 = vmatpush1.bf16.msra.mxu0 %v2841
  %3022 = vmatprep.subr.bf16.mxu0 %v2837
  %3023 = vmatpush1.bf16.msra.mxu0 %v2836
  %3024 = vmatprep.subr.bf16.mxu0 %v2832
  %3025 = vmatpush1.bf16.msra.mxu0 %v2831
  %3026 = vmatprep.subr.bf16.mxu0 %v2827
  %3027 = vmatpush1.bf16.msra.mxu0 %v2826
  %3028 = vmatprep.subr.bf16.mxu0 %v2822
  %3029 = vmatpush1.bf16.msra.mxu0 %v2821
  %3030 = vmatprep.subr.bf16.mxu0 %v2817
  %3031 = vmatpush1.bf16.msra.mxu0 %v2816
  %3032 = vmatprep.subr.bf16.mxu0 %v2892
  %3033 = vmatpush2.bf16.msra.mxu0 %v2891
  %3034 = vmatprep.subr.bf16.mxu0 %v2887
  %3035 = vmatpush2.bf16.msra.mxu0 %v2886
  %3036 = vmatprep.subr.bf16.mxu0 %v2882
  %3037 = vmatpush2.bf16.msra.mxu0 %v2881
  %3038 = vmatprep.subr.bf16.mxu0 %v2877
  %3039 = vmatpush2.bf16.msra.mxu0 %v2876
  %3040 = vmatprep.subr.bf16.mxu0 %v2872
  %3041 = vmatpush2.bf16.msra.mxu0 %v2871
  %3042 = vmatprep.subr.bf16.mxu0 %v2867
  %3043 = vmatpush2.bf16.msra.mxu0 %v2866
  %3044 = vmatprep.subr.bf16.mxu0 %v2862
  %3045 = vmatpush2.bf16.msra.mxu0 %v2861
  %3046 = vmatprep.subr.bf16.mxu0 %v2857
  %3047 = vmatpush2.bf16.msra.mxu0 %v2856
  %3048 = vmatprep.mubr.bf16.mxu0 %v214
  %3049 = vmatmul.mubr.bf16.gmra.mxu0 %v213
  %v3050 = vpop.f32.mrf.mxu0
  %v3051 = vadd.f32 0.0, %v3050
  %v3052 = vpop.f32.mrf.mxu0
  %v3053 = vadd.f32 0.0, %v3052
  %v3054 = vpop.f32.mrf.mxu0
  %v3055 = vadd.f32 0.0, %v3054
  %v3056 = vpop.f32.mrf.mxu0
  %v3057 = vadd.f32 0.0, %v3056
  %3058 = vmatprep.mubr.bf16.mxu0 %v217
  %3059 = vmatmul.mubr.bf16.gmra.mxu0 %v216
  %v3060 = vpop.f32.mrf.mxu0
  %v3061 = vadd.f32 0.0, %v3060
  %v3062 = vpop.f32.mrf.mxu0
  %v3063 = vadd.f32 0.0, %v3062
  %v3064 = vpop.f32.mrf.mxu0
  %v3065 = vadd.f32 0.0, %v3064
  %v3066 = vpop.f32.mrf.mxu0
  %v3067 = vadd.f32 0.0, %v3066
  %3068 = vmatprep.mubr.bf16.mxu0 %v220
  %3069 = vmatmul.mubr.bf16.gmra.mxu0 %v219
  %v3070 = vpop.f32.mrf.mxu0
  %v3071 = vadd.f32 0.0, %v3070
  %v3072 = vpop.f32.mrf.mxu0
  %v3073 = vadd.f32 0.0, %v3072
  %v3074 = vpop.f32.mrf.mxu0
  %v3075 = vadd.f32 0.0, %v3074
  %v3076 = vpop.f32.mrf.mxu0
  %v3077 = vadd.f32 0.0, %v3076
  %3078 = vmatprep.mubr.bf16.mxu0 %v223
  %3079 = vmatmul.mubr.bf16.gmra.mxu0 %v222
  %v3080 = vpop.f32.mrf.mxu0
  %v3081 = vadd.f32 0.0, %v3080
  %v3082 = vpop.f32.mrf.mxu0
  %v3083 = vadd.f32 0.0, %v3082
  %v3084 = vpop.f32.mrf.mxu0
  %v3085 = vadd.f32 0.0, %v3084
  %v3086 = vpop.f32.mrf.mxu0
  %v3087 = vadd.f32 0.0, %v3086
  %3088 = vmatprep.mubr.bf16.mxu0 %v226
  %3089 = vmatmul.mubr.bf16.gmra.mxu0 %v225
  %v3090 = vpop.f32.mrf.mxu0
  %v3091 = vadd.f32 0.0, %v3090
  %v3092 = vpop.f32.mrf.mxu0
  %v3093 = vadd.f32 0.0, %v3092
  %v3094 = vpop.f32.mrf.mxu0
  %v3095 = vadd.f32 0.0, %v3094
  %v3096 = vpop.f32.mrf.mxu0
  %v3097 = vadd.f32 0.0, %v3096
  %3098 = vmatprep.mubr.bf16.mxu0 %v229
  %3099 = vmatmul.mubr.bf16.gmra.mxu0 %v228
  %v3100 = vpop.f32.mrf.mxu0
  %v3101 = vadd.f32 0.0, %v3100
  %v3102 = vpop.f32.mrf.mxu0
  %v3103 = vadd.f32 0.0, %v3102
  %v3104 = vpop.f32.mrf.mxu0
  %v3105 = vadd.f32 0.0, %v3104
  %v3106 = vpop.f32.mrf.mxu0
  %v3107 = vadd.f32 0.0, %v3106
  %3108 = vmatprep.mubr.bf16.mxu0 %v232
  %3109 = vmatmul.mubr.bf16.gmra.mxu0 %v231
  %v3110 = vpop.f32.mrf.mxu0
  %v3111 = vadd.f32 0.0, %v3110
  %v3112 = vpop.f32.mrf.mxu0
  %v3113 = vadd.f32 0.0, %v3112
  %v3114 = vpop.f32.mrf.mxu0
  %v3115 = vadd.f32 0.0, %v3114
  %v3116 = vpop.f32.mrf.mxu0
  %v3117 = vadd.f32 0.0, %v3116
  %3118 = vmatprep.mubr.bf16.mxu0 %v235
  %3119 = vmatmul.mubr.bf16.gmra.mxu0 %v234
  %v3120 = vpop.f32.mrf.mxu0
  %v3121 = vadd.f32 0.0, %v3120
  %v3122 = vpop.f32.mrf.mxu0
  %v3123 = vadd.f32 0.0, %v3122
  %v3124 = vpop.f32.mrf.mxu0
  %v3125 = vadd.f32 0.0, %v3124
  %v3126 = vpop.f32.mrf.mxu0
  %v3127 = vadd.f32 0.0, %v3126
  %3128 = vdwg.mxu0
  %3129 = vmatprep.subr.bf16.mxu0 0
  %3130 = vmatpush1.bf16.msra.mxu0 0
  %3131 = vmatprep.subr.bf16.mxu0 0
  %3132 = vmatpush1.bf16.msra.mxu0 0
  %3133 = vmatprep.subr.bf16.mxu0 0
  %3134 = vmatpush1.bf16.msra.mxu0 0
  %3135 = vmatprep.subr.bf16.mxu0 0
  %3136 = vmatpush1.bf16.msra.mxu0 0
  %3137 = vmatprep.subr.bf16.mxu0 0
  %3138 = vmatpush1.bf16.msra.mxu0 0
  %3139 = vmatprep.subr.bf16.mxu0 %v3005
  %3140 = vmatpush1.bf16.msra.mxu0 %v3002
  %3141 = vmatprep.subr.bf16.mxu0 %v2902
  %3142 = vmatpush1.bf16.msra.mxu0 %v2901
  %3143 = vmatprep.subr.bf16.mxu0 %v2897
  %3144 = vmatpush1.bf16.msra.mxu0 %v2896
  %3145 = vmatprep.subr.bf16.mxu0 0
  %3146 = vmatpush2.bf16.msra.mxu0 0
  %3147 = vmatprep.subr.bf16.mxu0 0
  %3148 = vmatpush2.bf16.msra.mxu0 0
  %3149 = vmatprep.subr.bf16.mxu0 0
  %3150 = vmatpush2.bf16.msra.mxu0 0
  %3151 = vmatprep.subr.bf16.mxu0 0
  %3152 = vmatpush2.bf16.msra.mxu0 0
  %3153 = vmatprep.subr.bf16.mxu0 0
  %3154 = vmatpush2.bf16.msra.mxu0 0
  %3155 = vmatprep.subr.bf16.mxu0 0
  %3156 = vmatpush2.bf16.msra.mxu0 0
  %3157 = vmatprep.subr.bf16.mxu0 0
  %3158 = vmatpush2.bf16.msra.mxu0 0
  %3159 = vmatprep.subr.bf16.mxu0 0
  %3160 = vmatpush2.bf16.msra.mxu0 0
  %3161 = vmatprep.mubr.bf16.mxu0 0
  %3162 = vmatmul.mubr.bf16.gmra.mxu0 %v556
  %v3163 = vpop.f32.mrf.mxu0
  %v3164 = vadd.f32 %v3051, %v3163
  %v3165 = vpop.f32.mrf.mxu0
  %v3166 = vadd.f32 %v3053, %v3165
  %v3167 = vpop.f32.mrf.mxu0
  %v3168 = vadd.f32 %v3055, %v3167
  %v3169 = vpop.f32.mrf.mxu0
  %v3170 = vadd.f32 %v3057, %v3169
  %3171 = vmatprep.mubr.bf16.mxu0 0
  %3172 = vmatmul.mubr.bf16.gmra.mxu0 %v559
  %v3173 = vpop.f32.mrf.mxu0
  %v3174 = vadd.f32 %v3061, %v3173
  %v3175 = vpop.f32.mrf.mxu0
  %v3176 = vadd.f32 %v3063, %v3175
  %v3177 = vpop.f32.mrf.mxu0
  %v3178 = vadd.f32 %v3065, %v3177
  %v3179 = vpop.f32.mrf.mxu0
  %v3180 = vadd.f32 %v3067, %v3179
  %3181 = vmatprep.mubr.bf16.mxu0 0
  %3182 = vmatmul.mubr.bf16.gmra.mxu0 %v562
  %v3183 = vpop.f32.mrf.mxu0
  %v3184 = vadd.f32 %v3071, %v3183
  %v3185 = vpop.f32.mrf.mxu0
  %v3186 = vadd.f32 %v3073, %v3185
  %v3187 = vpop.f32.mrf.mxu0
  %v3188 = vadd.f32 %v3075, %v3187
  %v3189 = vpop.f32.mrf.mxu0
  %v3190 = vadd.f32 %v3077, %v3189
  %3191 = vmatprep.mubr.bf16.mxu0 0
  %3192 = vmatmul.mubr.bf16.gmra.mxu0 %v565
  %v3193 = vpop.f32.mrf.mxu0
  %v3194 = vadd.f32 %v3081, %v3193
  %v3195 = vpop.f32.mrf.mxu0
  %v3196 = vadd.f32 %v3083, %v3195
  %v3197 = vpop.f32.mrf.mxu0
  %v3198 = vadd.f32 %v3085, %v3197
  %v3199 = vpop.f32.mrf.mxu0
  %v3200 = vadd.f32 %v3087, %v3199
  %3201 = vmatprep.mubr.bf16.mxu0 0
  %3202 = vmatmul.mubr.bf16.gmra.mxu0 %v568
  %v3203 = vpop.f32.mrf.mxu0
  %v3204 = vadd.f32 %v3091, %v3203
  %v3205 = vpop.f32.mrf.mxu0
  %v3206 = vadd.f32 %v3093, %v3205
  %v3207 = vpop.f32.mrf.mxu0
  %v3208 = vadd.f32 %v3095, %v3207
  %v3209 = vpop.f32.mrf.mxu0
  %v3210 = vadd.f32 %v3097, %v3209
  %3211 = vmatprep.mubr.bf16.mxu0 0
  %3212 = vmatmul.mubr.bf16.gmra.mxu0 %v571
  %v3213 = vpop.f32.mrf.mxu0
  %v3214 = vadd.f32 %v3101, %v3213
  %v3215 = vpop.f32.mrf.mxu0
  %v3216 = vadd.f32 %v3103, %v3215
  %v3217 = vpop.f32.mrf.mxu0
  %v3218 = vadd.f32 %v3105, %v3217
  %v3219 = vpop.f32.mrf.mxu0
  %v3220 = vadd.f32 %v3107, %v3219
  %3221 = vmatprep.mubr.bf16.mxu0 0
  %3222 = vmatmul.mubr.bf16.gmra.mxu0 %v574
  %v3223 = vpop.f32.mrf.mxu0
  %v3224 = vadd.f32 %v3111, %v3223
  %v3225 = vpop.f32.mrf.mxu0
  %v3226 = vadd.f32 %v3113, %v3225
  %v3227 = vpop.f32.mrf.mxu0
  %v3228 = vadd.f32 %v3115, %v3227
  %v3229 = vpop.f32.mrf.mxu0
  %v3230 = vadd.f32 %v3117, %v3229
  %3231 = vmatprep.mubr.bf16.mxu0 0
  %3232 = vmatmul.mubr.bf16.gmra.mxu0 %v577
  %v3233 = vpop.f32.mrf.mxu0
  %v3234 = vadd.f32 %v3121, %v3233
  %v3235 = vpop.f32.mrf.mxu0
  %v3236 = vadd.f32 %v3123, %v3235
  %v3237 = vpop.f32.mrf.mxu0
  %v3238 = vadd.f32 %v3125, %v3237
  %v3239 = vpop.f32.mrf.mxu0
  %v3240 = vadd.f32 %v3127, %v3239
  %3241 = vdwg.mxu0
  %3242 = vmatprep.subr.bf16.mxu0 %v2854
  %3243 = vmatpush1.bf16.msra.mxu0 %v2853
  %3244 = vmatprep.subr.bf16.mxu0 %v2849
  %3245 = vmatpush1.bf16.msra.mxu0 %v2848
  %3246 = vmatprep.subr.bf16.mxu0 %v2844
  %3247 = vmatpush1.bf16.msra.mxu0 %v2843
  %3248 = vmatprep.subr.bf16.mxu0 %v2839
  %3249 = vmatpush1.bf16.msra.mxu0 %v2838
  %3250 = vmatprep.subr.bf16.mxu0 %v2834
  %3251 = vmatpush1.bf16.msra.mxu0 %v2833
  %3252 = vmatprep.subr.bf16.mxu0 %v2829
  %3253 = vmatpush1.bf16.msra.mxu0 %v2828
  %3254 = vmatprep.subr.bf16.mxu0 %v2824
  %3255 = vmatpush1.bf16.msra.mxu0 %v2823
  %3256 = vmatprep.subr.bf16.mxu0 %v2819
  %3257 = vmatpush1.bf16.msra.mxu0 %v2818
  %3258 = vmatprep.subr.bf16.mxu0 %v2894
  %3259 = vmatpush2.bf16.msra.mxu0 %v2893
  %3260 = vmatprep.subr.bf16.mxu0 %v2889
  %3261 = vmatpush2.bf16.msra.mxu0 %v2888
  %3262 = vmatprep.subr.bf16.mxu0 %v2884
  %3263 = vmatpush2.bf16.msra.mxu0 %v2883
  %3264 = vmatprep.subr.bf16.mxu0 %v2879
  %3265 = vmatpush2.bf16.msra.mxu0 %v2878
  %3266 = vmatprep.subr.bf16.mxu0 %v2874
  %3267 = vmatpush2.bf16.msra.mxu0 %v2873
  %3268 = vmatprep.subr.bf16.mxu0 %v2869
  %3269 = vmatpush2.bf16.msra.mxu0 %v2868
  %3270 = vmatprep.subr.bf16.mxu0 %v2864
  %3271 = vmatpush2.bf16.msra.mxu0 %v2863
  %3272 = vmatprep.subr.bf16.mxu0 %v2859
  %3273 = vmatpush2.bf16.msra.mxu0 %v2858
  %3274 = vmatprep.mubr.bf16.mxu0 %v214
  %3275 = vmatmul.mubr.bf16.gmra.mxu0 %v213
  %v3276 = vpop.f32.mrf.mxu0
  %v3277 = vadd.f32 0.0, %v3276
  %v3278 = vpop.f32.mrf.mxu0
  %v3279 = vadd.f32 0.0, %v3278
  %v3280 = vpop.f32.mrf.mxu0
  %v3281 = vadd.f32 0.0, %v3280
  %v3282 = vpop.f32.mrf.mxu0
  %v3283 = vadd.f32 0.0, %v3282
  %3284 = vmatprep.mubr.bf16.mxu0 %v217
  %3285 = vmatmul.mubr.bf16.gmra.mxu0 %v216
  %v3286 = vpop.f32.mrf.mxu0
  %v3287 = vadd.f32 0.0, %v3286
  %v3288 = vpop.f32.mrf.mxu0
  %v3289 = vadd.f32 0.0, %v3288
  %v3290 = vpop.f32.mrf.mxu0
  %v3291 = vadd.f32 0.0, %v3290
  %v3292 = vpop.f32.mrf.mxu0
  %v3293 = vadd.f32 0.0, %v3292
  %3294 = vmatprep.mubr.bf16.mxu0 %v220
  %3295 = vmatmul.mubr.bf16.gmra.mxu0 %v219
  %v3296 = vpop.f32.mrf.mxu0
  %v3297 = vadd.f32 0.0, %v3296
  %v3298 = vpop.f32.mrf.mxu0
  %v3299 = vadd.f32 0.0, %v3298
  %v3300 = vpop.f32.mrf.mxu0
  %v3301 = vadd.f32 0.0, %v3300
  %v3302 = vpop.f32.mrf.mxu0
  %v3303 = vadd.f32 0.0, %v3302
  %3304 = vmatprep.mubr.bf16.mxu0 %v223
  %3305 = vmatmul.mubr.bf16.gmra.mxu0 %v222
  %v3306 = vpop.f32.mrf.mxu0
  %v3307 = vadd.f32 0.0, %v3306
  %v3308 = vpop.f32.mrf.mxu0
  %v3309 = vadd.f32 0.0, %v3308
  %v3310 = vpop.f32.mrf.mxu0
  %v3311 = vadd.f32 0.0, %v3310
  %v3312 = vpop.f32.mrf.mxu0
  %v3313 = vadd.f32 0.0, %v3312
  %3314 = vmatprep.mubr.bf16.mxu0 %v226
  %3315 = vmatmul.mubr.bf16.gmra.mxu0 %v225
  %v3316 = vpop.f32.mrf.mxu0
  %v3317 = vadd.f32 0.0, %v3316
  %v3318 = vpop.f32.mrf.mxu0
  %v3319 = vadd.f32 0.0, %v3318
  %v3320 = vpop.f32.mrf.mxu0
  %v3321 = vadd.f32 0.0, %v3320
  %v3322 = vpop.f32.mrf.mxu0
  %v3323 = vadd.f32 0.0, %v3322
  %3324 = vmatprep.mubr.bf16.mxu0 %v229
  %3325 = vmatmul.mubr.bf16.gmra.mxu0 %v228
  %v3326 = vpop.f32.mrf.mxu0
  %v3327 = vadd.f32 0.0, %v3326
  %v3328 = vpop.f32.mrf.mxu0
  %v3329 = vadd.f32 0.0, %v3328
  %v3330 = vpop.f32.mrf.mxu0
  %v3331 = vadd.f32 0.0, %v3330
  %v3332 = vpop.f32.mrf.mxu0
  %v3333 = vadd.f32 0.0, %v3332
  %3334 = vmatprep.mubr.bf16.mxu0 %v232
  %3335 = vmatmul.mubr.bf16.gmra.mxu0 %v231
  %v3336 = vpop.f32.mrf.mxu0
  %v3337 = vadd.f32 0.0, %v3336
  %v3338 = vpop.f32.mrf.mxu0
  %v3339 = vadd.f32 0.0, %v3338
  %v3340 = vpop.f32.mrf.mxu0
  %v3341 = vadd.f32 0.0, %v3340
  %v3342 = vpop.f32.mrf.mxu0
  %v3343 = vadd.f32 0.0, %v3342
  %3344 = vmatprep.mubr.bf16.mxu0 %v235
  %3345 = vmatmul.mubr.bf16.gmra.mxu0 %v234
  %v3346 = vpop.f32.mrf.mxu0
  %v3347 = vadd.f32 0.0, %v3346
  %v3348 = vpop.f32.mrf.mxu0
  %v3349 = vadd.f32 0.0, %v3348
  %v3350 = vpop.f32.mrf.mxu0
  %v3351 = vadd.f32 0.0, %v3350
  %v3352 = vpop.f32.mrf.mxu0
  %v3353 = vadd.f32 0.0, %v3352
  %3354 = vdwg.mxu0
  %3355 = vmatprep.subr.bf16.mxu0 0
  %3356 = vmatpush1.bf16.msra.mxu0 0
  %3357 = vmatprep.subr.bf16.mxu0 0
  %3358 = vmatpush1.bf16.msra.mxu0 0
  %3359 = vmatprep.subr.bf16.mxu0 0
  %3360 = vmatpush1.bf16.msra.mxu0 0
  %3361 = vmatprep.subr.bf16.mxu0 0
  %3362 = vmatpush1.bf16.msra.mxu0 0
  %3363 = vmatprep.subr.bf16.mxu0 0
  %3364 = vmatpush1.bf16.msra.mxu0 0
  %3365 = vmatprep.subr.bf16.mxu0 %v3011
  %3366 = vmatpush1.bf16.msra.mxu0 %v3008
  %3367 = vmatprep.subr.bf16.mxu0 %v2904
  %3368 = vmatpush1.bf16.msra.mxu0 %v2903
  %3369 = vmatprep.subr.bf16.mxu0 %v2899
  %3370 = vmatpush1.bf16.msra.mxu0 %v2898
  %3371 = vmatprep.subr.bf16.mxu0 0
  %3372 = vmatpush2.bf16.msra.mxu0 0
  %3373 = vmatprep.subr.bf16.mxu0 0
  %3374 = vmatpush2.bf16.msra.mxu0 0
  %3375 = vmatprep.subr.bf16.mxu0 0
  %3376 = vmatpush2.bf16.msra.mxu0 0
  %3377 = vmatprep.subr.bf16.mxu0 0
  %3378 = vmatpush2.bf16.msra.mxu0 0
  %3379 = vmatprep.subr.bf16.mxu0 0
  %3380 = vmatpush2.bf16.msra.mxu0 0
  %3381 = vmatprep.subr.bf16.mxu0 0
  %3382 = vmatpush2.bf16.msra.mxu0 0
  %3383 = vmatprep.subr.bf16.mxu0 0
  %3384 = vmatpush2.bf16.msra.mxu0 0
  %3385 = vmatprep.subr.bf16.mxu0 0
  %3386 = vmatpush2.bf16.msra.mxu0 0
  %3387 = vmatprep.mubr.bf16.mxu0 0
  %3388 = vmatmul.mubr.bf16.gmra.mxu0 %v556
  %v3389 = vpop.f32.mrf.mxu0
  %v3390 = vadd.f32 %v3277, %v3389
  %v3391 = vpop.f32.mrf.mxu0
  %v3392 = vadd.f32 %v3279, %v3391
  %v3393 = vpop.f32.mrf.mxu0
  %v3394 = vadd.f32 %v3281, %v3393
  %v3395 = vpop.f32.mrf.mxu0
  %v3396 = vadd.f32 %v3283, %v3395
  %3397 = vmatprep.mubr.bf16.mxu0 0
  %3398 = vmatmul.mubr.bf16.gmra.mxu0 %v559
  %v3399 = vpop.f32.mrf.mxu0
  %v3400 = vadd.f32 %v3287, %v3399
  %v3401 = vpop.f32.mrf.mxu0
  %v3402 = vadd.f32 %v3289, %v3401
  %v3403 = vpop.f32.mrf.mxu0
  %v3404 = vadd.f32 %v3291, %v3403
  %v3405 = vpop.f32.mrf.mxu0
  %v3406 = vadd.f32 %v3293, %v3405
  %3407 = vmatprep.mubr.bf16.mxu0 0
  %3408 = vmatmul.mubr.bf16.gmra.mxu0 %v562
  %v3409 = vpop.f32.mrf.mxu0
  %v3410 = vadd.f32 %v3297, %v3409
  %v3411 = vpop.f32.mrf.mxu0
  %v3412 = vadd.f32 %v3299, %v3411
  %v3413 = vpop.f32.mrf.mxu0
  %v3414 = vadd.f32 %v3301, %v3413
  %v3415 = vpop.f32.mrf.mxu0
  %v3416 = vadd.f32 %v3303, %v3415
  %3417 = vmatprep.mubr.bf16.mxu0 0
  %3418 = vmatmul.mubr.bf16.gmra.mxu0 %v565
  %v3419 = vpop.f32.mrf.mxu0
  %v3420 = vadd.f32 %v3307, %v3419
  %v3421 = vpop.f32.mrf.mxu0
  %v3422 = vadd.f32 %v3309, %v3421
  %v3423 = vpop.f32.mrf.mxu0
  %v3424 = vadd.f32 %v3311, %v3423
  %v3425 = vpop.f32.mrf.mxu0
  %v3426 = vadd.f32 %v3313, %v3425
  %3427 = vmatprep.mubr.bf16.mxu0 0
  %3428 = vmatmul.mubr.bf16.gmra.mxu0 %v568
  %v3429 = vpop.f32.mrf.mxu0
  %v3430 = vadd.f32 %v3317, %v3429
  %v3431 = vpop.f32.mrf.mxu0
  %v3432 = vadd.f32 %v3319, %v3431
  %v3433 = vpop.f32.mrf.mxu0
  %v3434 = vadd.f32 %v3321, %v3433
  %v3435 = vpop.f32.mrf.mxu0
  %v3436 = vadd.f32 %v3323, %v3435
  %3437 = vmatprep.mubr.bf16.mxu0 0
  %3438 = vmatmul.mubr.bf16.gmra.mxu0 %v571
  %v3439 = vpop.f32.mrf.mxu0
  %v3440 = vadd.f32 %v3327, %v3439
  %v3441 = vpop.f32.mrf.mxu0
  %v3442 = vadd.f32 %v3329, %v3441
  %v3443 = vpop.f32.mrf.mxu0
  %v3444 = vadd.f32 %v3331, %v3443
  %v3445 = vpop.f32.mrf.mxu0
  %v3446 = vadd.f32 %v3333, %v3445
  %3447 = vmatprep.mubr.bf16.mxu0 0
  %3448 = vmatmul.mubr.bf16.gmra.mxu0 %v574
  %v3449 = vpop.f32.mrf.mxu0
  %v3450 = vadd.f32 %v3337, %v3449
  %v3451 = vpop.f32.mrf.mxu0
  %v3452 = vadd.f32 %v3339, %v3451
  %v3453 = vpop.f32.mrf.mxu0
  %v3454 = vadd.f32 %v3341, %v3453
  %v3455 = vpop.f32.mrf.mxu0
  %v3456 = vadd.f32 %v3343, %v3455
  %3457 = vmatprep.mubr.bf16.mxu0 0
  %3458 = vmatmul.mubr.bf16.gmra.mxu0 %v577
  %v3459 = vpop.f32.mrf.mxu0
  %v3460 = vadd.f32 %v3347, %v3459
  %v3461 = vpop.f32.mrf.mxu0
  %v3462 = vadd.f32 %v3349, %v3461
  %v3463 = vpop.f32.mrf.mxu0
  %v3464 = vadd.f32 %v3351, %v3463
  %v3465 = vpop.f32.mrf.mxu0
  %v3466 = vadd.f32 %v3353, %v3465
  %3467 = vdwg.mxu0
  %3468 = vmatprep.subr.bf16.mxu0 0
  %3469 = vmatpush1.bf16.msra.mxu0 %v2855
  %3470 = vmatprep.subr.bf16.mxu0 0
  %3471 = vmatpush1.bf16.msra.mxu0 %v2850
  %3472 = vmatprep.subr.bf16.mxu0 0
  %3473 = vmatpush1.bf16.msra.mxu0 %v2845
  %3474 = vmatprep.subr.bf16.mxu0 0
  %3475 = vmatpush1.bf16.msra.mxu0 %v2840
  %3476 = vmatprep.subr.bf16.mxu0 0
  %3477 = vmatpush1.bf16.msra.mxu0 %v2835
  %3478 = vmatprep.subr.bf16.mxu0 0
  %3479 = vmatpush1.bf16.msra.mxu0 %v2830
  %3480 = vmatprep.subr.bf16.mxu0 0
  %3481 = vmatpush1.bf16.msra.mxu0 %v2825
  %3482 = vmatprep.subr.bf16.mxu0 0
  %3483 = vmatpush1.bf16.msra.mxu0 %v2820
  %3484 = vmatprep.subr.bf16.mxu0 0
  %3485 = vmatpush2.bf16.msra.mxu0 %v2895
  %3486 = vmatprep.subr.bf16.mxu0 0
  %3487 = vmatpush2.bf16.msra.mxu0 %v2890
  %3488 = vmatprep.subr.bf16.mxu0 0
  %3489 = vmatpush2.bf16.msra.mxu0 %v2885
  %3490 = vmatprep.subr.bf16.mxu0 0
  %3491 = vmatpush2.bf16.msra.mxu0 %v2880
  %3492 = vmatprep.subr.bf16.mxu0 0
  %3493 = vmatpush2.bf16.msra.mxu0 %v2875
  %3494 = vmatprep.subr.bf16.mxu0 0
  %3495 = vmatpush2.bf16.msra.mxu0 %v2870
  %3496 = vmatprep.subr.bf16.mxu0 0
  %3497 = vmatpush2.bf16.msra.mxu0 %v2865
  %3498 = vmatprep.subr.bf16.mxu0 0
  %3499 = vmatpush2.bf16.msra.mxu0 %v2860
  %3500 = vmatprep.mubr.bf16.mxu0 %v214
  %3501 = vmatmul.mubr.bf16.gmra.mxu0 %v213
  %v3502 = vpop.f32.mrf.mxu0
  %v3503 = vadd.f32 0.0, %v3502
  %v3504 = vpop.f32.mrf.mxu0
  %v3505 = vpop.f32.mrf.mxu0
  %v3506 = vadd.f32 0.0, %v3505
  %v3507 = vpop.f32.mrf.mxu0
  %3508 = vmatprep.mubr.bf16.mxu0 %v217
  %3509 = vmatmul.mubr.bf16.gmra.mxu0 %v216
  %v3510 = vpop.f32.mrf.mxu0
  %v3511 = vadd.f32 0.0, %v3510
  %v3512 = vpop.f32.mrf.mxu0
  %v3513 = vpop.f32.mrf.mxu0
  %v3514 = vadd.f32 0.0, %v3513
  %v3515 = vpop.f32.mrf.mxu0
  %3516 = vmatprep.mubr.bf16.mxu0 %v220
  %3517 = vmatmul.mubr.bf16.gmra.mxu0 %v219
  %v3518 = vpop.f32.mrf.mxu0
  %v3519 = vadd.f32 0.0, %v3518
  %v3520 = vpop.f32.mrf.mxu0
  %v3521 = vpop.f32.mrf.mxu0
  %v3522 = vadd.f32 0.0, %v3521
  %v3523 = vpop.f32.mrf.mxu0
  %3524 = vmatprep.mubr.bf16.mxu0 %v223
  %3525 = vmatmul.mubr.bf16.gmra.mxu0 %v222
  %v3526 = vpop.f32.mrf.mxu0
  %v3527 = vadd.f32 0.0, %v3526
  %v3528 = vpop.f32.mrf.mxu0
  %v3529 = vpop.f32.mrf.mxu0
  %v3530 = vadd.f32 0.0, %v3529
  %v3531 = vpop.f32.mrf.mxu0
  %3532 = vmatprep.mubr.bf16.mxu0 %v226
  %3533 = vmatmul.mubr.bf16.gmra.mxu0 %v225
  %v3534 = vpop.f32.mrf.mxu0
  %v3535 = vadd.f32 0.0, %v3534
  %v3536 = vpop.f32.mrf.mxu0
  %v3537 = vpop.f32.mrf.mxu0
  %v3538 = vadd.f32 0.0, %v3537
  %v3539 = vpop.f32.mrf.mxu0
  %3540 = vmatprep.mubr.bf16.mxu0 %v229
  %3541 = vmatmul.mubr.bf16.gmra.mxu0 %v228
  %v3542 = vpop.f32.mrf.mxu0
  %v3543 = vadd.f32 0.0, %v3542
  %v3544 = vpop.f32.mrf.mxu0
  %v3545 = vpop.f32.mrf.mxu0
  %v3546 = vadd.f32 0.0, %v3545
  %v3547 = vpop.f32.mrf.mxu0
  %3548 = vmatprep.mubr.bf16.mxu0 %v232
  %3549 = vmatmul.mubr.bf16.gmra.mxu0 %v231
  %v3550 = vpop.f32.mrf.mxu0
  %v3551 = vadd.f32 0.0, %v3550
  %v3552 = vpop.f32.mrf.mxu0
  %v3553 = vpop.f32.mrf.mxu0
  %v3554 = vadd.f32 0.0, %v3553
  %v3555 = vpop.f32.mrf.mxu0
  %3556 = vmatprep.mubr.bf16.mxu0 %v235
  %3557 = vmatmul.mubr.bf16.gmra.mxu0 %v234
  %v3558 = vpop.f32.mrf.mxu0
  %v3559 = vadd.f32 0.0, %v3558
  %v3560 = vpop.f32.mrf.mxu0
  %v3561 = vpop.f32.mrf.mxu0
  %v3562 = vadd.f32 0.0, %v3561
  %v3563 = vpop.f32.mrf.mxu0
  %3564 = vdwg.mxu0
  %3565 = vmatprep.subr.bf16.mxu0 0
  %3566 = vmatpush1.bf16.msra.mxu0 0
  %3567 = vmatprep.subr.bf16.mxu0 0
  %3568 = vmatpush1.bf16.msra.mxu0 0
  %3569 = vmatprep.subr.bf16.mxu0 0
  %3570 = vmatpush1.bf16.msra.mxu0 0
  %3571 = vmatprep.subr.bf16.mxu0 0
  %3572 = vmatpush1.bf16.msra.mxu0 0
  %3573 = vmatprep.subr.bf16.mxu0 0
  %3574 = vmatpush1.bf16.msra.mxu0 0
  %3575 = vmatprep.subr.bf16.mxu0 0
  %3576 = vmatpush1.bf16.msra.mxu0 %v3014
  %3577 = vmatprep.subr.bf16.mxu0 0
  %3578 = vmatpush1.bf16.msra.mxu0 %v2905
  %3579 = vmatprep.subr.bf16.mxu0 0
  %3580 = vmatpush1.bf16.msra.mxu0 %v2900
  %3581 = vmatprep.subr.bf16.mxu0 0
  %3582 = vmatpush2.bf16.msra.mxu0 0
  %3583 = vmatprep.subr.bf16.mxu0 0
  %3584 = vmatpush2.bf16.msra.mxu0 0
  %3585 = vmatprep.subr.bf16.mxu0 0
  %3586 = vmatpush2.bf16.msra.mxu0 0
  %3587 = vmatprep.subr.bf16.mxu0 0
  %3588 = vmatpush2.bf16.msra.mxu0 0
  %3589 = vmatprep.subr.bf16.mxu0 0
  %3590 = vmatpush2.bf16.msra.mxu0 0
  %3591 = vmatprep.subr.bf16.mxu0 0
  %3592 = vmatpush2.bf16.msra.mxu0 0
  %3593 = vmatprep.subr.bf16.mxu0 0
  %3594 = vmatpush2.bf16.msra.mxu0 0
  %3595 = vmatprep.subr.bf16.mxu0 0
  %3596 = vmatpush2.bf16.msra.mxu0 0
  %3597 = vmatprep.mubr.bf16.mxu0 0
  %3598 = vmatmul.mubr.bf16.gmra.mxu0 %v556
  %v3599 = vpop.f32.mrf.mxu0
  %v3600 = vadd.f32 %v3503, %v3599
  %v3601 = vpop.f32.mrf.mxu0
  %v3602 = vpop.f32.mrf.mxu0
  %v3603 = vadd.f32 %v3506, %v3602
  %v3604 = vpop.f32.mrf.mxu0
  %3605 = vmatprep.mubr.bf16.mxu0 0
  %3606 = vmatmul.mubr.bf16.gmra.mxu0 %v559
  %v3607 = vpop.f32.mrf.mxu0
  %v3608 = vadd.f32 %v3511, %v3607
  %v3609 = vpop.f32.mrf.mxu0
  %v3610 = vpop.f32.mrf.mxu0
  %v3611 = vadd.f32 %v3514, %v3610
  %v3612 = vpop.f32.mrf.mxu0
  %3613 = vmatprep.mubr.bf16.mxu0 0
  %3614 = vmatmul.mubr.bf16.gmra.mxu0 %v562
  %v3615 = vpop.f32.mrf.mxu0
  %v3616 = vadd.f32 %v3519, %v3615
  %v3617 = vpop.f32.mrf.mxu0
  %v3618 = vpop.f32.mrf.mxu0
  %v3619 = vadd.f32 %v3522, %v3618
  %v3620 = vpop.f32.mrf.mxu0
  %3621 = vmatprep.mubr.bf16.mxu0 0
  %3622 = vmatmul.mubr.bf16.gmra.mxu0 %v565
  %v3623 = vpop.f32.mrf.mxu0
  %v3624 = vadd.f32 %v3527, %v3623
  %v3625 = vpop.f32.mrf.mxu0
  %v3626 = vpop.f32.mrf.mxu0
  %v3627 = vadd.f32 %v3530, %v3626
  %v3628 = vpop.f32.mrf.mxu0
  %3629 = vmatprep.mubr.bf16.mxu0 0
  %3630 = vmatmul.mubr.bf16.gmra.mxu0 %v568
  %v3631 = vpop.f32.mrf.mxu0
  %v3632 = vadd.f32 %v3535, %v3631
  %v3633 = vpop.f32.mrf.mxu0
  %v3634 = vpop.f32.mrf.mxu0
  %v3635 = vadd.f32 %v3538, %v3634
  %v3636 = vpop.f32.mrf.mxu0
  %3637 = vmatprep.mubr.bf16.mxu0 0
  %3638 = vmatmul.mubr.bf16.gmra.mxu0 %v571
  %v3639 = vpop.f32.mrf.mxu0
  %v3640 = vadd.f32 %v3543, %v3639
  %v3641 = vpop.f32.mrf.mxu0
  %v3642 = vpop.f32.mrf.mxu0
  %v3643 = vadd.f32 %v3546, %v3642
  %v3644 = vpop.f32.mrf.mxu0
  %3645 = vmatprep.mubr.bf16.mxu0 0
  %3646 = vmatmul.mubr.bf16.gmra.mxu0 %v574
  %v3647 = vpop.f32.mrf.mxu0
  %v3648 = vadd.f32 %v3551, %v3647
  %v3649 = vpop.f32.mrf.mxu0
  %v3650 = vpop.f32.mrf.mxu0
  %v3651 = vadd.f32 %v3554, %v3650
  %v3652 = vpop.f32.mrf.mxu0
  %3653 = vmatprep.mubr.bf16.mxu0 0
  %3654 = vmatmul.mubr.bf16.gmra.mxu0 %v577
  %v3655 = vpop.f32.mrf.mxu0
  %v3656 = vadd.f32 %v3559, %v3655
  %v3657 = vpop.f32.mrf.mxu0
  %v3658 = vpop.f32.mrf.mxu0
  %v3659 = vadd.f32 %v3562, %v3658
  %v3660 = vpop.f32.mrf.mxu0
  %3661 = vdwg.mxu0
  %v3662 = vrot.slane %v3166, 1
  %v3663 = vrot.slane %v3170, 1
  %v3664 = vrot.slane %v3176, 1
  %v3665 = vrot.slane %v3180, 1
  %v3666 = vrot.slane %v3186, 1
  %v3667 = vrot.slane %v3190, 1
  %v3668 = vrot.slane %v3196, 1
  %v3669 = vrot.slane %v3200, 1
  %v3670 = vrot.slane %v3206, 1
  %v3671 = vrot.slane %v3210, 1
  %v3672 = vrot.slane %v3216, 1
  %v3673 = vrot.slane %v3220, 1
  %v3674 = vrot.slane %v3226, 1
  %v3675 = vrot.slane %v3230, 1
  %v3676 = vrot.slane %v3236, 1
  %v3677 = vrot.slane %v3240, 1
  %v3678 = vsel %vm1025, %v3676, %v3677
  %v3679 = vsel %vm1025, %v3675, %v3676
  %v3680 = vsel %vm1025, %v3674, %v3675
  %v3681 = vsel %vm1025, %v3673, %v3674
  %v3682 = vsel %vm1025, %v3672, %v3673
  %v3683 = vsel %vm1025, %v3671, %v3672
  %v3684 = vsel %vm1025, %v3670, %v3671
  %v3685 = vsel %vm1025, %v3669, %v3670
  %v3686 = vsel %vm1025, %v3668, %v3669
  %v3687 = vsel %vm1025, %v3667, %v3668
  %v3688 = vsel %vm1025, %v3666, %v3667
  %v3689 = vsel %vm1025, %v3665, %v3666
  %v3690 = vsel %vm1025, %v3664, %v3665
  %v3691 = vsel %vm1025, %v3663, %v3664
  %v3692 = vsel %vm1025, %v3662, %v3663
  %v3693 = vsel %vm1025, %v3677, %v3662
  %v3694 = vadd.f32 %v3164, %v3692
  %v3695 = vadd.f32 %v3168, %v3691
  %v3696 = vadd.f32 %v3174, %v3690
  %v3697 = vadd.f32 %v3178, %v3689
  %v3698 = vadd.f32 %v3184, %v3688
  %v3699 = vadd.f32 %v3188, %v3687
  %v3700 = vadd.f32 %v3194, %v3686
  %v3701 = vadd.f32 %v3198, %v3685
  %v3702 = vadd.f32 %v3204, %v3684
  %v3703 = vadd.f32 %v3208, %v3683
  %v3704 = vadd.f32 %v3214, %v3682
  %v3705 = vadd.f32 %v3218, %v3681
  %v3706 = vadd.f32 %v3224, %v3680
  %v3707 = vadd.f32 %v3228, %v3679
  %v3708 = vadd.f32 %v3234, %v3678
  %v3709 = vadd.f32 %v3238, %v3693
  %v3710 = vrot.slane %v3390, 2
  %v3711 = vrot.slane %v3394, 2
  %v3712 = vrot.slane %v3400, 2
  %v3713 = vrot.slane %v3404, 2
  %v3714 = vrot.slane %v3410, 2
  %v3715 = vrot.slane %v3414, 2
  %v3716 = vrot.slane %v3420, 2
  %v3717 = vrot.slane %v3424, 2
  %v3718 = vrot.slane %v3430, 2
  %v3719 = vrot.slane %v3434, 2
  %v3720 = vrot.slane %v3440, 2
  %v3721 = vrot.slane %v3444, 2
  %v3722 = vrot.slane %v3450, 2
  %v3723 = vrot.slane %v3454, 2
  %v3724 = vrot.slane %v3460, 2
  %v3725 = vrot.slane %v3464, 2
  %v3726 = vsel %vm1074, %v3724, %v3725
  %v3727 = vsel %vm1074, %v3723, %v3724
  %v3728 = vsel %vm1074, %v3722, %v3723
  %v3729 = vsel %vm1074, %v3721, %v3722
  %v3730 = vsel %vm1074, %v3720, %v3721
  %v3731 = vsel %vm1074, %v3719, %v3720
  %v3732 = vsel %vm1074, %v3718, %v3719
  %v3733 = vsel %vm1074, %v3717, %v3718
  %v3734 = vsel %vm1074, %v3716, %v3717
  %v3735 = vsel %vm1074, %v3715, %v3716
  %v3736 = vsel %vm1074, %v3714, %v3715
  %v3737 = vsel %vm1074, %v3713, %v3714
  %v3738 = vsel %vm1074, %v3712, %v3713
  %v3739 = vsel %vm1074, %v3711, %v3712
  %v3740 = vsel %vm1074, %v3710, %v3711
  %v3741 = vsel %vm1074, %v3725, %v3710
  %v3742 = vadd.f32 %v3694, %v3740
  %v3743 = vadd.f32 %v3695, %v3739
  %v3744 = vadd.f32 %v3696, %v3738
  %v3745 = vadd.f32 %v3697, %v3737
  %v3746 = vadd.f32 %v3698, %v3736
  %v3747 = vadd.f32 %v3699, %v3735
  %v3748 = vadd.f32 %v3700, %v3734
  %v3749 = vadd.f32 %v3701, %v3733
  %v3750 = vadd.f32 %v3702, %v3732
  %v3751 = vadd.f32 %v3703, %v3731
  %v3752 = vadd.f32 %v3704, %v3730
  %v3753 = vadd.f32 %v3705, %v3729
  %v3754 = vadd.f32 %v3706, %v3728
  %v3755 = vadd.f32 %v3707, %v3727
  %v3756 = vadd.f32 %v3708, %v3726
  %v3757 = vadd.f32 %v3709, %v3741
  %v3758 = vrot.slane %v3392, 3
  %v3759 = vrot.slane %v3396, 3
  %v3760 = vrot.slane %v3402, 3
  %v3761 = vrot.slane %v3406, 3
  %v3762 = vrot.slane %v3412, 3
  %v3763 = vrot.slane %v3416, 3
  %v3764 = vrot.slane %v3422, 3
  %v3765 = vrot.slane %v3426, 3
  %v3766 = vrot.slane %v3432, 3
  %v3767 = vrot.slane %v3436, 3
  %v3768 = vrot.slane %v3442, 3
  %v3769 = vrot.slane %v3446, 3
  %v3770 = vrot.slane %v3452, 3
  %v3771 = vrot.slane %v3456, 3
  %v3772 = vrot.slane %v3462, 3
  %v3773 = vrot.slane %v3466, 3
  %v3774 = vsel %vm2250, %v3772, %v3773
  %v3775 = vsel %vm2250, %v3771, %v3772
  %v3776 = vsel %vm2250, %v3770, %v3771
  %v3777 = vsel %vm2250, %v3769, %v3770
  %v3778 = vsel %vm2250, %v3768, %v3769
  %v3779 = vsel %vm2250, %v3767, %v3768
  %v3780 = vsel %vm2250, %v3766, %v3767
  %v3781 = vsel %vm2250, %v3765, %v3766
  %v3782 = vsel %vm2250, %v3764, %v3765
  %v3783 = vsel %vm2250, %v3763, %v3764
  %v3784 = vsel %vm2250, %v3762, %v3763
  %v3785 = vsel %vm2250, %v3761, %v3762
  %v3786 = vsel %vm2250, %v3760, %v3761
  %v3787 = vsel %vm2250, %v3759, %v3760
  %v3788 = vsel %vm2250, %v3758, %v3759
  %v3789 = vsel %vm2250, %v3773, %v3758
  %v3790 = vadd.f32 %v3742, %v3788
  %v3791 = vadd.f32 %v3743, %v3787
  %v3792 = vadd.f32 %v3744, %v3786
  %v3793 = vadd.f32 %v3745, %v3785
  %v3794 = vadd.f32 %v3746, %v3784
  %v3795 = vadd.f32 %v3747, %v3783
  %v3796 = vadd.f32 %v3748, %v3782
  %v3797 = vadd.f32 %v3749, %v3781
  %v3798 = vadd.f32 %v3750, %v3780
  %v3799 = vadd.f32 %v3751, %v3779
  %v3800 = vadd.f32 %v3752, %v3778
  %v3801 = vadd.f32 %v3753, %v3777
  %v3802 = vadd.f32 %v3754, %v3776
  %v3803 = vadd.f32 %v3755, %v3775
  %v3804 = vadd.f32 %v3756, %v3774
  %v3805 = vadd.f32 %v3757, %v3789
  %v3806 = vrot.slane %v3600, 4
  %v3807 = vrot.slane %v3603, 4
  %v3808 = vrot.slane %v3608, 4
  %v3809 = vrot.slane %v3611, 4
  %v3810 = vrot.slane %v3616, 4
  %v3811 = vrot.slane %v3619, 4
  %v3812 = vrot.slane %v3624, 4
  %v3813 = vrot.slane %v3627, 4
  %v3814 = vrot.slane %v3632, 4
  %v3815 = vrot.slane %v3635, 4
  %v3816 = vrot.slane %v3640, 4
  %v3817 = vrot.slane %v3643, 4
  %v3818 = vrot.slane %v3648, 4
  %v3819 = vrot.slane %v3651, 4
  %v3820 = vrot.slane %v3656, 4
  %v3821 = vrot.slane %v3659, 4
  %vm3822 = vcmp.lt.s32.totalorder %v55, 4
  %v3823 = vsel %vm3822, %v3820, %v3821
  %v3824 = vsel %vm3822, %v3819, %v3820
  %v3825 = vsel %vm3822, %v3818, %v3819
  %v3826 = vsel %vm3822, %v3817, %v3818
  %v3827 = vsel %vm3822, %v3816, %v3817
  %v3828 = vsel %vm3822, %v3815, %v3816
  %v3829 = vsel %vm3822, %v3814, %v3815
  %v3830 = vsel %vm3822, %v3813, %v3814
  %v3831 = vsel %vm3822, %v3812, %v3813
  %v3832 = vsel %vm3822, %v3811, %v3812
  %v3833 = vsel %vm3822, %v3810, %v3811
  %v3834 = vsel %vm3822, %v3809, %v3810
  %v3835 = vsel %vm3822, %v3808, %v3809
  %v3836 = vsel %vm3822, %v3807, %v3808
  %v3837 = vsel %vm3822, %v3806, %v3807
  %v3838 = vsel %vm3822, %v3821, %v3806
  %v3839 = vadd.f32 %v3790, %v3837
  %v3840 = vadd.f32 %v3791, %v3836
  %v3841 = vadd.f32 %v3792, %v3835
  %v3842 = vadd.f32 %v3793, %v3834
  %v3843 = vadd.f32 %v3794, %v3833
  %v3844 = vadd.f32 %v3795, %v3832
  %v3845 = vadd.f32 %v3796, %v3831
  %v3846 = vadd.f32 %v3797, %v3830
  %v3847 = vadd.f32 %v3798, %v3829
  %v3848 = vadd.f32 %v3799, %v3828
  %v3849 = vadd.f32 %v3800, %v3827
  %v3850 = vadd.f32 %v3801, %v3826
  %v3851 = vadd.f32 %v3802, %v3825
  %v3852 = vadd.f32 %v3803, %v3824
  %v3853 = vadd.f32 %v3804, %v3823
  %v3854 = vadd.f32 %v3805, %v3838
  %v3855 = vld [vmem:[%s2 + $0x2] sm:$0x1]
  %v3856 = vlaneseq
  %v3857 = vshrl.u32 %v3856, 7
  %v3858 = vsub.s32 0, %v3857
  %v3859 = vrot.slane %v3855, %v3858
  %v3860 = vadd.f32 %v3839, %v3859
  %v3861 = vadd.f32 %v3840, %v3859
  %v3862 = vadd.f32 %v3841, %v3859
  %v3863 = vadd.f32 %v3842, %v3859
  %v3864 = vadd.f32 %v3843, %v3859
  %v3865 = vadd.f32 %v3844, %v3859
  %v3866 = vadd.f32 %v3845, %v3859
  %v3867 = vadd.f32 %v3846, %v3859
  %v3868 = vadd.f32 %v3847, %v3859
  %v3869 = vadd.f32 %v3848, %v3859
  %v3870 = vadd.f32 %v3849, %v3859
  %v3871 = vadd.f32 %v3850, %v3859
  %v3872 = vadd.f32 %v3851, %v3859
  %v3873 = vadd.f32 %v3852, %v3859
  %v3874 = vadd.f32 %v3853, %v3859
  %v3875 = vadd.f32 %v3854, %v3859
  %v3876 = vmax.f32 %v3860, 0.0
  %v3877 = vmax.f32 %v3861, 0.0
  %v3878 = vmax.f32 %v3862, 0.0
  %v3879 = vmax.f32 %v3863, 0.0
  %v3880 = vmax.f32 %v3864, 0.0
  %v3881 = vmax.f32 %v3865, 0.0
  %v3882 = vmax.f32 %v3866, 0.0
  %v3883 = vmax.f32 %v3867, 0.0
  %v3884 = vmax.f32 %v3868, 0.0
  %v3885 = vmax.f32 %v3869, 0.0
  %v3886 = vmax.f32 %v3870, 0.0
  %v3887 = vmax.f32 %v3871, 0.0
  %v3888 = vmax.f32 %v3872, 0.0
  %v3889 = vmax.f32 %v3873, 0.0
  %v3890 = vmax.f32 %v3874, 0.0
  %v3891 = vmax.f32 %v3875, 0.0
  %vm3892 = vcmp.lt.s32.totalorder %v55, 12
  %vm3893 = vcmp.lt.s32.totalorder %v56, 12
  %v3894 = vsel %vm3892, 1, 0
  %v3895 = vsel %vm3893, 1, 0
  %vm3896 = vcmp.eq.s32.totalorder %v3894, 1
  %vm3897 = vcmp.eq.s32.totalorder %v3895, 1
  %v3898 = vsel %vm3896, %v3876, 0.0
  %v3899 = vsel %vm3897, %v3877, 0.0
  %v3900 = vsel %vm3896, %v3878, 0.0
  %v3901 = vsel %vm3897, %v3879, 0.0
  %v3902 = vsel %vm3896, %v3880, 0.0
  %v3903 = vsel %vm3897, %v3881, 0.0
  %v3904 = vsel %vm3896, %v3882, 0.0
  %v3905 = vsel %vm3897, %v3883, 0.0
  %v3906 = vsel %vm3896, %v3884, 0.0
  %v3907 = vsel %vm3897, %v3885, 0.0
  %v3908 = vsel %vm3896, %v3886, 0.0
  %v3909 = vsel %vm3897, %v3887, 0.0
  %v3910 = vsel %vm3896, %v3888, 0.0
  %v3911 = vsel %vm3897, %v3889, 0.0
  %v3912 = vsel %vm3896, %v3890, 0.0
  %v3913 = vsel %vm3897, %v3891, 0.0
  %v3914 = vmax.f32 %v3898, %v3899
  %v3915 = vrot.slane %v3914, 4
  %v3916 = vmax.f32 %v3914, %v3915
  %v3917 = vrot.slane %v3916, 2
  %v3918 = vmax.f32 %v3916, %v3917
  %v3919 = vrot.slane %v3918, 1
  %v3920 = vmax.f32 %v3918, %v3919
  %v3921 = vmax.f32 %v3900, %v3901
  %v3922 = vrot.slane %v3921, 4
  %v3923 = vmax.f32 %v3921, %v3922
  %v3924 = vrot.slane %v3923, 2
  %v3925 = vmax.f32 %v3923, %v3924
  %v3926 = vrot.slane %v3925, 1
  %v3927 = vmax.f32 %v3925, %v3926
  %v3928 = vmax.f32 %v3902, %v3903
  %v3929 = vrot.slane %v3928, 4
  %v3930 = vmax.f32 %v3928, %v3929
  %v3931 = vrot.slane %v3930, 2
  %v3932 = vmax.f32 %v3930, %v3931
  %v3933 = vrot.slane %v3932, 1
  %v3934 = vmax.f32 %v3932, %v3933
  %v3935 = vmax.f32 %v3904, %v3905
  %v3936 = vrot.slane %v3935, 4
  %v3937 = vmax.f32 %v3935, %v3936
  %v3938 = vrot.slane %v3937, 2
  %v3939 = vmax.f32 %v3937, %v3938
  %v3940 = vrot.slane %v3939, 1
  %v3941 = vmax.f32 %v3939, %v3940
  %v3942 = vmax.f32 %v3906, %v3907
  %v3943 = vrot.slane %v3942, 4
  %v3944 = vmax.f32 %v3942, %v3943
  %v3945 = vrot.slane %v3944, 2
  %v3946 = vmax.f32 %v3944, %v3945
  %v3947 = vrot.slane %v3946, 1
  %v3948 = vmax.f32 %v3946, %v3947
  %v3949 = vmax.f32 %v3908, %v3909
  %v3950 = vrot.slane %v3949, 4
  %v3951 = vmax.f32 %v3949, %v3950
  %v3952 = vrot.slane %v3951, 2
  %v3953 = vmax.f32 %v3951, %v3952
  %v3954 = vrot.slane %v3953, 1
  %v3955 = vmax.f32 %v3953, %v3954
  %v3956 = vmax.f32 %v3910, %v3911
  %v3957 = vrot.slane %v3956, 4
  %v3958 = vmax.f32 %v3956, %v3957
  %v3959 = vrot.slane %v3958, 2
  %v3960 = vmax.f32 %v3958, %v3959
  %v3961 = vrot.slane %v3960, 1
  %v3962 = vmax.f32 %v3960, %v3961
  %v3963 = vmax.f32 %v3912, %v3913
  %v3964 = vrot.slane %v3963, 4
  %v3965 = vmax.f32 %v3963, %v3964
  %v3966 = vrot.slane %v3965, 2
  %v3967 = vmax.f32 %v3965, %v3966
  %v3968 = vrot.slane %v3967, 1
  %v3969 = vmax.f32 %v3967, %v3968
  %vm3978 = vcmask 1041409
  %v3979 = vsel %vm3978, %v1179, %v1172
  %vm3980 = vcmask 1042434
  %v3981 = vsel %vm3980, %v1186, %v3979
  %vm3982 = vcmask 1043459
  %v3983 = vsel %vm3982, %v1193, %v3981
  %vm3984 = vcmask 1044484
  %v3985 = vsel %vm3984, %v1200, %v3983
  %vm3986 = vcmask 1045509
  %v3987 = vsel %vm3986, %v1207, %v3985
  %vm3988 = vcmask 1046534
  %v3989 = vsel %vm3988, %v1214, %v3987
  %vm3990 = vcmask 1047559
  %v3991 = vsel %vm3990, %v1221, %v3989
  %v4001 = vsel %vm3978, %v2355, %v2348
  %v4002 = vsel %vm3980, %v2362, %v4001
  %v4003 = vsel %vm3982, %v2369, %v4002
  %v4004 = vsel %vm3984, %v2376, %v4003
  %v4005 = vsel %vm3986, %v2383, %v4004
  %v4006 = vsel %vm3988, %v2390, %v4005
  %v4007 = vsel %vm3990, %v2397, %v4006
  %v4017 = vsel %vm3978, %v3927, %v3920
  %v4018 = vsel %vm3980, %v3934, %v4017
  %v4019 = vsel %vm3982, %v3941, %v4018
  %v4020 = vsel %vm3984, %v3948, %v4019
  %v4021 = vsel %vm3986, %v3955, %v4020
  %v4022 = vsel %vm3988, %v3962, %v4021
  %v4023 = vsel %vm3990, %v3969, %v4022
  %v4025 = vld [vmem:[%s3] sm:$0x7]
  %v4027 = vlaneseq
  %v4028 = vshrl.u32 %v4027, 7
  %v4029 = vsub.s32 0, %v4028
  %v4030 = vrot.slane %v4025, %v4029
  %v4031 = vlaneseq
  %v4032 = vshrl.u32 %v4031, 7
  %v4033 = vsub.s32 1, %v4032
  %v4034 = vrot.slane %v4025, %v4033
  %v4035 = vlaneseq
  %v4036 = vshrl.u32 %v4035, 7
  %v4037 = vsub.s32 2, %v4036
  %v4038 = vrot.slane %v4025, %v4037
  %v4042 = vmul.f32 %v3991, %v4030
  %v4043 = vmul.f32 %v4007, %v4034
  %v4044 = vmul.f32 %v4023, %v4038
  %v4045 = vadd.f32 %v4042, %v4043
  %v4046 = vadd.f32 %v4045, %v4044
  %4047 = vadd.xlane.f32.xlu0 %v4046
  %v4048 = vpop.xlane.xlu0 %4047
  %v4049 = vmul.f32 %v4048, 0.5
  %s4050 = sld [smem:[#allocation2]]
  %v4051 = vstv %s4050
  %v4052 = vadd.f32 %v4049, %v4051
  %4053 = vst [vmem:[%s5] sm:$0xff] %v4052
  // Predicated region
  $region22: #{cnn_forward.1} parent=0 // pred_check
    _
  $region23: #{cnn_forward.1} parent=0 // pred_check_branch
    %4055 = sbr.rel (0) target = $region25
  $region24: #{cnn_forward.1} parent=0 // pred_region
    _
  $region25: #{cnn_forward.1} parent=0 // pred_fallthru
    _
  // Predicated region
  $region26: #{cnn_forward.1} parent=0 // pred_check
    _
  $region27: #{cnn_forward.1} parent=0 // pred_check_branch
    %4057 = sbr.rel (0) target = $region29
  $region28: #{cnn_forward.1} parent=0 // pred_region
    _
  $region29: #{cnn_forward.1} parent=0 // pred_fallthru
    _

</llo_original>
